<compile_context>
chip_gen: v6e
topology: v6e:2x2x1
jax: 0.10.0
libtpu: 0.0.40
codegen_flags: <defaults>
</compile_context>

<pallas_src>
import functools

import jax
import jax.numpy as jnp
from jax.experimental import pallas as pl
from jax.experimental.pallas import tpu as pltpu

# Geometry (specialised to 28x28 Digit_Recognizer/MNIST inputs):
#   conv1: 1 ->16, k=3, s=2, p=1 : 28x28 -> 14x14
#   conv2: 16->32, k=3, s=2, p=1 : 14x14 -> 7x7
#   conv3: 32->64, k=7, s=1, p=0 : 7x7   -> 1x1  (== dense layer over the map)
H_IN = 28
H1 = 14                  # conv1 output spatial
H2 = 7                   # conv2 output spatial
C1, C2, C3 = 16, 32, 64
NTAP = 9                 # 3x3 taps
NQ = 4                   # (row-parity, col-parity) quadrants
K1 = NQ * NTAP           # 36  : conv1 patch lanes (all 4 quadrants packed)
K2 = NTAP * C1           # 144 : conv2 contraction size
K3 = H2 * H2 * C2        # 1568: conv3 contraction size


# ---------------------------------------------------------------------------
# Fused kernel: one grid step == B samples, everything stays in VMEM
# ---------------------------------------------------------------------------
def _encoder_kernel(p1_ref, w1_ref, b1_ref, w2_ref, b2_ref, w3_ref, b3_ref,
                    out_ref, a1_ref, p2_ref, a2_ref, a2w_ref):
    """Shapes (B = out_ref.shape[0], rows = 49*B):
       p1_ref : (rows, 36)   conv1 patches; row = (ri', ci', b), lane = (q, tap)
       w1_ref : (36, 64)     block-diagonal conv1 weight (one 9x16 block per q)
       w2_ref : (144, 32)    conv2 weight, row = (ki*3+kj)*16 + cin
       w3_ref : (1568, 64)   conv3 weight, row = (kh*7+kw)*32 + cin
       b*_ref : (1, C)       biases (b1 tiled over the 4 quadrants)
       out_ref: (B, 64)
       scratch:
         a1_ref : (rows, 64)   conv1 act.; lane group q*16.. holds quadrant q
         p2_ref : (rows, 144)  conv2 im2col, row = (oh2, ow2, b)
         a2_ref : (rows, 32)   conv2 act., row = (oh2, ow2, b)
         a2w_ref: (B, 1568)    conv2 act. flattened per sample (oh2, ow2, c)
    """
    B = out_ref.shape[0]
    rows = H2 * H2 * B

    # ---- conv1 (+ReLU): one block-diagonal matmul over the 4 parity quadrants
    a1_ref[...] = jnp.maximum(
        jnp.dot(p1_ref[...], w1_ref[...], preferred_element_type=jnp.float32)
        + b1_ref[...], 0.0)

    # ---- conv2 im2col: 9 contiguous slab copies + small zero-border fixups --
    zq = jnp.zeros((H2 * B, C1), jnp.float32)   # one whole oh2-block of zeros
    zr = jnp.zeros((B, C1), jnp.float32)        # one (oh2, ow2=0) row-block

    for ki in range(3):
        for kj in range(3):
            f = ki * 3 + kj                      # tap index
            q = (ki % 2) * 2 + (kj % 2)          # source quadrant (rp, cp)
            dr = (ki // 2) - (1 - ki % 2)        # row shift: -1 or 0
            dc = (kj // 2) - (1 - kj % 2)        # col shift: -1 or 0
            fc0 = f * C1
            qc0 = q * C1
            shift = (-dr * H2 - dc) * B          # dst_row = src_row + shift
            if shift == 0:
                p2_ref[:, fc0:fc0 + C1] = a1_ref[:, qc0:qc0 + C1]
            else:
                p2_ref[shift:rows, fc0:fc0 + C1] = \
                    a1_ref[0:rows - shift, qc0:qc0 + C1]
                if dr == -1:                     # oh2 == 0 rows read padding
                    p2_ref[0:H2 * B, fc0:fc0 + C1] = zq
                if dc == -1:                     # ow2 == 0 rows read padding
                    for oh2 in range(1 if dr == -1 else 0, H2):
                        r0 = oh2 * H2 * B
                        p2_ref[r0:r0 + B, fc0:fc0 + C1] = zr

    # ---- conv2 (+ReLU): single K=144 matmul --------------------------------
    a2_ref[...] = jnp.maximum(
        jnp.dot(p2_ref[...], w2_ref[...], preferred_element_type=jnp.float32)
        + b2_ref[...], 0.0)

    # ---- spatial-major -> per-sample flatten: 49 batched (B,32) copies ------
    for s in range(H2 * H2):
        a2w_ref[:, s * C2:(s + 1) * C2] = a2_ref[s * B:(s + 1) * B, :]

    # ---- conv3 (7x7 valid conv == dense): single (B,1568)@(1568,64) matmul --
    out_ref[...] = (jnp.dot(a2w_ref[...], w3_ref[...],
                            preferred_element_type=jnp.float32) + b3_ref[...])


# ---------------------------------------------------------------------------
# Wrapper-side glue
# ---------------------------------------------------------------------------
def _conv1_patches(x_nchw, block_b):
    """(N,1,28,28) -> (N/block_b * 49*block_b, 36) conv1 im2col patches.

    Rows are ordered (grid block, ri', ci', sample-within-block); lanes are
    (quadrant q = rp*2+cp, tap f = ki*3+kj).  Quadrant (rp, cp) holds the
    conv1 output at (oh, ow) = (2*ri' + 1-rp, 2*ci' + 1-cp).
    """
    n = x_nchw.shape[0]
    nb = n // block_b
    x0 = x_nchw[:, 0].astype(jnp.float32)                   # (N,28,28)
    xp = jnp.pad(x0, ((0, 0), (1, 1), (1, 1)))              # (N,30,30)
    taps = [xp[:, ki:ki + H_IN:2, kj:kj + H_IN:2]            # (N,14,14) each
            for ki in range(3) for kj in range(3)]
    p = jnp.stack(taps, axis=-1)                             # (N,14,14,9)
    # oh = 2*ri' + t_r with t_r = 1 - rp (likewise for columns)
    p = p.reshape(nb, block_b, H2, 2, H2, 2, NTAP)           # (nb,b,ri',tr,ci',tc,f)
    p = p[:, :, :, ::-1, :, ::-1, :]                         # t -> parity order
    p = jnp.transpose(p, (0, 2, 4, 1, 3, 5, 6))              # (nb,ri',ci',b,rp,cp,f)
    return p.reshape(nb * H2 * H2 * block_b, K1)             # (nb*49B, 36)


def prepare_params(params):
    """One-off (hoisted) conversion of PyTorch-layout weights to kernel layout."""
    w1m = jnp.transpose(params["w1"], (2, 3, 1, 0)).reshape(NTAP, C1)    # (9,16)
    w1q = jnp.kron(jnp.eye(NQ, dtype=jnp.float32), w1m)                  # (36,64)
    b1q = jnp.tile(params["b1"].reshape(1, C1), (1, NQ))                 # (1,64)
    w2m = jnp.transpose(params["w2"], (2, 3, 1, 0)).reshape(K2, C2)      # (144,32)
    w3m = jnp.transpose(params["w3"], (2, 3, 1, 0)).reshape(K3, C3)      # (1568,64)
    return {"w1q": w1q, "b1q": b1q,
            "w2m": w2m, "b2": params["b2"].reshape(1, C2),
            "w3m": w3m, "b3": params["b3"].reshape(1, C3)}


@functools.partial(jax.jit, static_argnames=("block_b",))
def encoder_forward(x_nchw, prep, block_b=32):
    """NCHW in, NCHW out — matches the PyTorch module for 28x28 inputs."""
    # TODO(synk): kernel is specialised to 28x28 inputs (Digit_Recognizer
    # geometry); other spatial sizes would make conv3 a real spatial conv.
    n, c, h, w = x_nchw.shape
    assert c == 1 and h == H_IN and w == H_IN, (c, h, w)
    assert block_b % 8 == 0, block_b                 # sublane-aligned batches

    nb = -(-n // block_b)
    n_pad = nb * block_b
    if n_pad != n:
        x_nchw = jnp.pad(x_nchw, ((0, n_pad - n), (0, 0), (0, 0), (0, 0)))

    p1 = _conv1_patches(x_nchw, block_b)             # (nb*49*B, 36)
    rows = H2 * H2 * block_b

    out = pl.pallas_call(
        _encoder_kernel,
        out_shape=jax.ShapeDtypeStruct((n_pad, C3), jnp.float32),
        grid=(nb,),
        in_specs=[
            pl.BlockSpec((rows, K1), lambda i: (i, 0)),        # patches
            pl.BlockSpec((K1, NQ * C1), lambda i: (0, 0)),     # w1 (block-diag)
            pl.BlockSpec((1, NQ * C1), lambda i: (0, 0)),      # b1 (tiled)
            pl.BlockSpec((K2, C2), lambda i: (0, 0)),          # w2
            pl.BlockSpec((1, C2), lambda i: (0, 0)),           # b2
            pl.BlockSpec((K3, C3), lambda i: (0, 0)),          # w3
            pl.BlockSpec((1, C3), lambda i: (0, 0)),           # b3
        ],
        out_specs=pl.BlockSpec((block_b, C3), lambda i: (i, 0)),
        scratch_shapes=[
            pltpu.VMEM((rows, NQ * C1), jnp.float32),          # a1
            pltpu.VMEM((rows, K2), jnp.float32),               # p2 (49B, 144)
            pltpu.VMEM((rows, C2), jnp.float32),               # a2
            pltpu.VMEM((block_b, K3), jnp.float32),            # a2 flat (B,1568)
        ],
        compiler_params=pltpu.CompilerParams(
            dimension_semantics=("parallel",),
            vmem_limit_bytes=32 * 1024 * 1024),
    )(p1, prep["w1q"], prep["b1q"], prep["w2m"], prep["b2"],
      prep["w3m"], prep["b3"])

    return out[:n].reshape(n, C3, 1, 1)              # (N, 64, 1, 1)


# ---------------------------------------------------------------------------
# Deterministic parameter init + pure-JAX reference (for correctness check)
# ---------------------------------------------------------------------------
def init_params(key):
    ks = jax.random.split(key, 6)

    def w(k, shape, fan_in):
        return jax.random.normal(k, shape, jnp.float32) * (1.0 / fan_in) ** 0.5

    return {
        "w1": w(ks[0], (16, 1, 3, 3), 1 * 9),
        "b1": jax.random.normal(ks[1], (16,), jnp.float32) * 0.01,
        "w2": w(ks[2], (32, 16, 3, 3), 16 * 9),
        "b2": jax.random.normal(ks[3], (32,), jnp.float32) * 0.01,
        "w3": w(ks[4], (64, 32, 7, 7), 32 * 49),
        "b3": jax.random.normal(ks[5], (64,), jnp.float32) * 0.01,
    }


def _ref_conv(x_nchw, w, b, stride, padding):
    out = jax.lax.conv_general_dilated(
        x_nchw, w, window_strides=(stride, stride),
        padding=((padding, padding), (padding, padding)),
        dimension_numbers=("NCHW", "OIHW", "NCHW"))
    return out + b[None, :, None, None]


def encoder_forward_ref(x, p):
    x = jax.nn.relu(_ref_conv(x, p["w1"], p["b1"], 2, 1))
    x = jax.nn.relu(_ref_conv(x, p["w2"], p["b2"], 2, 1))
    return _ref_conv(x, p["w3"], p["b3"], 1, 0)


if __name__ == "__main__":
    key = jax.random.PRNGKey(0)
    k_in, k_p = jax.random.split(key)
    # 28x28 input: 28 -> 14 -> 7 -> (7x7 valid conv) -> 1x1 spatial output.
    # 16 samples with 8 samples per grid step -> 2 parallel grid steps.
    x = jax.random.normal(k_in, (16, 1, 28, 28), jnp.float32)
    params = init_params(k_p)
    prep = prepare_params(params)

    out = jax.block_until_ready(encoder_forward(x, prep, block_b=8))
    assert out.shape == (16, 64, 1, 1), out.shape

    ref = jax.block_until_ready(encoder_forward_ref(x, params))
    assert jnp.allclose(out, ref, atol=1e-4, rtol=1e-4), \
        float(jnp.max(jnp.abs(out - ref)))

    print("KERNEL_OK")
</pallas_src>

<mosaic_0001>
module attributes {stable_mosaic.version = 11 : i64} {
  func.func @_encoder_kernel(%arg0: i32, %arg1: memref<392x36xf32, #tpu.memory_space<vmem>>, %arg2: memref<36x64xf32, #tpu.memory_space<vmem>>, %arg3: memref<1x64xf32, #tpu.memory_space<vmem>>, %arg4: memref<144x32xf32, #tpu.memory_space<vmem>>, %arg5: memref<1x32xf32, #tpu.memory_space<vmem>>, %arg6: memref<1568x64xf32, #tpu.memory_space<vmem>>, %arg7: memref<1x64xf32, #tpu.memory_space<vmem>>, %arg8: memref<8x64xf32, #tpu.memory_space<vmem>>, %arg9: memref<392x64xf32, #tpu.memory_space<vmem>>, %arg10: memref<392x144xf32, #tpu.memory_space<vmem>>, %arg11: memref<392x32xf32, #tpu.memory_space<vmem>>, %arg12: memref<8x1568xf32, #tpu.memory_space<vmem>>) attributes {dimension_semantics = [#tpu.dimension_semantics<parallel>], iteration_bounds = array<i64: 2>, scalar_prefetch = 0 : i64, scratch_operands = 4 : i64, tpu.core_type = #tpu.core_type<tc>, window_params = [{transform_indices = @transform_0, window_bounds = array<i64: 392, 36>}, {pipeline_mode = #tpu.pipeline_mode<synchronous>, transform_indices = @transform_1, window_bounds = array<i64: 36, 64>}, {pipeline_mode = #tpu.pipeline_mode<synchronous>, transform_indices = @transform_2, window_bounds = array<i64: 1, 64>}, {pipeline_mode = #tpu.pipeline_mode<synchronous>, transform_indices = @transform_3, window_bounds = array<i64: 144, 32>}, {pipeline_mode = #tpu.pipeline_mode<synchronous>, transform_indices = @transform_4, window_bounds = array<i64: 1, 32>}, {pipeline_mode = #tpu.pipeline_mode<synchronous>, transform_indices = @transform_5, window_bounds = array<i64: 1568, 64>}, {pipeline_mode = #tpu.pipeline_mode<synchronous>, transform_indices = @transform_6, window_bounds = array<i64: 1, 64>}, {transform_indices = @transform_7, window_bounds = array<i64: 8, 64>}]} {
    %c0 = arith.constant 0 : index
    %c0_0 = arith.constant 0 : index
    %0 = vector.load %arg1[%c0, %c0_0] : memref<392x36xf32, #tpu.memory_space<vmem>>, vector<392x36xf32>
    %c0_1 = arith.constant 0 : index
    %c0_2 = arith.constant 0 : index
    %1 = vector.load %arg2[%c0_1, %c0_2] : memref<36x64xf32, #tpu.memory_space<vmem>>, vector<36x64xf32>
    %cst = arith.constant dense<0.000000e+00> : vector<392x64xf32>
    %2 = tpu.matmul %0, %1, %cst {dimension_numbers = #tpu.dot_dimension_numbers<[1], [0], [0], [1], [0, 0, 1, 1], [], []>} : vector<392x36xf32>, vector<36x64xf32>, vector<392x64xf32> -> vector<392x64xf32>
    %c0_3 = arith.constant 0 : index
    %c0_4 = arith.constant 0 : index
    %3 = vector.load %arg3[%c0_3, %c0_4] : memref<1x64xf32, #tpu.memory_space<vmem>>, vector<1x64xf32>
    %4 = vector.broadcast %3 : vector<1x64xf32> to vector<392x64xf32>
    %5 = arith.addf %2, %4 : vector<392x64xf32>
    %cst_5 = arith.constant 0.000000e+00 : f32
    %6 = vector.broadcast %cst_5 : f32 to vector<392x64xf32>
    %7 = arith.maximumf %5, %6 : vector<392x64xf32>
    %c0_6 = arith.constant 0 : index
    %c0_7 = arith.constant 0 : index
    %8 = vector.load %arg9[%c0_6, %c0_7] : memref<392x64xf32, #tpu.memory_space<vmem>>, vector<392x64xf32>
    tpu.vector_store %arg9[%c0_6, %c0_7], %7 {strides = array<i32>} : memref<392x64xf32, #tpu.memory_space<vmem>>, vector<392x64xf32>,
    %cst_8 = arith.constant 0.000000e+00 : f32
    %9 = vector.broadcast %cst_8 : f32 to vector<56x16xf32>
    %cst_9 = arith.constant 0.000000e+00 : f32
    %10 = vector.broadcast %cst_9 : f32 to vector<8x16xf32>
    %c0_10 = arith.constant 0 : index
    %c0_11 = arith.constant 0 : index
    %11 = vector.load %arg9[%c0_10, %c0_11] : memref<392x64xf32, #tpu.memory_space<vmem>>, vector<328x16xf32>
    %c64 = arith.constant 64 : index
    %c0_12 = arith.constant 0 : index
    %12 = vector.load %arg10[%c64, %c0_12] : memref<392x144xf32, #tpu.memory_space<vmem>>, vector<328x16xf32>
    tpu.vector_store %arg10[%c64, %c0_12], %11 {strides = array<i32>} : memref<392x144xf32, #tpu.memory_space<vmem>>, vector<328x16xf32>,
    %c0_13 = arith.constant 0 : index
    %c0_14 = arith.constant 0 : index
    %13 = vector.load %arg10[%c0_13, %c0_14] : memref<392x144xf32, #tpu.memory_space<vmem>>, vector<56x16xf32>
    tpu.vector_store %arg10[%c0_13, %c0_14], %9 {strides = array<i32>} : memref<392x144xf32, #tpu.memory_space<vmem>>, vector<56x16xf32>,
    %c56 = arith.constant 56 : index
    %c0_15 = arith.constant 0 : index
    %14 = vector.load %arg10[%c56, %c0_15] : memref<392x144xf32, #tpu.memory_space<vmem>>, vector<8x16xf32>
    tpu.vector_store %arg10[%c56, %c0_15], %10 {strides = array<i32>} : memref<392x144xf32, #tpu.memory_space<vmem>>, vector<8x16xf32>,
    %c112 = arith.constant 112 : index
    %c0_16 = arith.constant 0 : index
    %15 = vector.load %arg10[%c112, %c0_16] : memref<392x144xf32, #tpu.memory_space<vmem>>, vector<8x16xf32>
    tpu.vector_store %arg10[%c112, %c0_16], %10 {strides = array<i32>} : memref<392x144xf32, #tpu.memory_space<vmem>>, vector<8x16xf32>,
    %c168 = arith.constant 168 : index
    %c0_17 = arith.constant 0 : index
    %16 = vector.load %arg10[%c168, %c0_17] : memref<392x144xf32, #tpu.memory_space<vmem>>, vector<8x16xf32>
    tpu.vector_store %arg10[%c168, %c0_17], %10 {strides = array<i32>} : memref<392x144xf32, #tpu.memory_space<vmem>>, vector<8x16xf32>,
    %c224 = arith.constant 224 : index
    %c0_18 = arith.constant 0 : index
    %17 = vector.load %arg10[%c224, %c0_18] : memref<392x144xf32, #tpu.memory_space<vmem>>, vector<8x16xf32>
    tpu.vector_store %arg10[%c224, %c0_18], %10 {strides = array<i32>} : memref<392x144xf32, #tpu.memory_space<vmem>>, vector<8x16xf32>,
    %c280 = arith.constant 280 : index
    %c0_19 = arith.constant 0 : index
    %18 = vector.load %arg10[%c280, %c0_19] : memref<392x144xf32, #tpu.memory_space<vmem>>, vector<8x16xf32>
    tpu.vector_store %arg10[%c280, %c0_19], %10 {strides = array<i32>} : memref<392x144xf32, #tpu.memory_space<vmem>>, vector<8x16xf32>,
    %c336 = arith.constant 336 : index
    %c0_20 = arith.constant 0 : index
    %19 = vector.load %arg10[%c336, %c0_20] : memref<392x144xf32, #tpu.memory_space<vmem>>, vector<8x16xf32>
    tpu.vector_store %arg10[%c336, %c0_20], %10 {strides = array<i32>} : memref<392x144xf32, #tpu.memory_space<vmem>>, vector<8x16xf32>,
    %c0_21 = arith.constant 0 : index
    %c16 = arith.constant 16 : index
    %20 = vector.load %arg9[%c0_21, %c16] : memref<392x64xf32, #tpu.memory_space<vmem>>, vector<336x16xf32>
    %c56_22 = arith.constant 56 : index
    %c16_23 = arith.constant 16 : index
    %21 = vector.load %arg10[%c56_22, %c16_23] : memref<392x144xf32, #tpu.memory_space<vmem>>, vector<336x16xf32>
    tpu.vector_store %arg10[%c56_22, %c16_23], %20 {strides = array<i32>} : memref<392x144xf32, #tpu.memory_space<vmem>>, vector<336x16xf32>,
    %c0_24 = arith.constant 0 : index
    %c16_25 = arith.constant 16 : index
    %22 = vector.load %arg10[%c0_24, %c16_25] : memref<392x144xf32, #tpu.memory_space<vmem>>, vector<56x16xf32>
    tpu.vector_store %arg10[%c0_24, %c16_25], %9 {strides = array<i32>} : memref<392x144xf32, #tpu.memory_space<vmem>>, vector<56x16xf32>,
    %c0_26 = arith.constant 0 : index
    %c0_27 = arith.constant 0 : index
    %23 = vector.load %arg9[%c0_26, %c0_27] : memref<392x64xf32, #tpu.memory_space<vmem>>, vector<336x16xf32>
    %c56_28 = arith.constant 56 : index
    %c32 = arith.constant 32 : index
    %24 = vector.load %arg10[%c56_28, %c32] : memref<392x144xf32, #tpu.memory_space<vmem>>, vector<336x16xf32>
    tpu.vector_store %arg10[%c56_28, %c32], %23 {strides = array<i32>} : memref<392x144xf32, #tpu.memory_space<vmem>>, vector<336x16xf32>,
    %c0_29 = arith.constant 0 : index
    %c32_30 = arith.constant 32 : index
    %25 = vector.load %arg10[%c0_29, %c32_30] : memref<392x144xf32, #tpu.memory_space<vmem>>, vector<56x16xf32>
    tpu.vector_store %arg10[%c0_29, %c32_30], %9 {strides = array<i32>} : memref<392x144xf32, #tpu.memory_space<vmem>>, vector<56x16xf32>,
    %c0_31 = arith.constant 0 : index
    %c32_32 = arith.constant 32 : index
    %26 = vector.load %arg9[%c0_31, %c32_32] : memref<392x64xf32, #tpu.memory_space<vmem>>, vector<384x16xf32>
    %c8 = arith.constant 8 : index
    %c48 = arith.constant 48 : index
    %27 = vector.load %arg10[%c8, %c48] : memref<392x144xf32, #tpu.memory_space<vmem>>, vector<384x16xf32>
    tpu.vector_store %arg10[%c8, %c48], %26 {strides = array<i32>} : memref<392x144xf32, #tpu.memory_space<vmem>>, vector<384x16xf32>,
    %c0_33 = arith.constant 0 : index
    %c48_34 = arith.constant 48 : index
    %28 = vector.load %arg10[%c0_33, %c48_34] : memref<392x144xf32, #tpu.memory_space<vmem>>, vector<8x16xf32>
    tpu.vector_store %arg10[%c0_33, %c48_34], %10 {strides = array<i32>} : memref<392x144xf32, #tpu.memory_space<vmem>>, vector<8x16xf32>,
    %c56_35 = arith.constant 56 : index
    %c48_36 = arith.constant 48 : index
    %29 = vector.load %arg10[%c56_35, %c48_36] : memref<392x144xf32, #tpu.memory_space<vmem>>, vector<8x16xf32>
    tpu.vector_store %arg10[%c56_35, %c48_36], %10 {strides = array<i32>} : memref<392x144xf32, #tpu.memory_space<vmem>>, vector<8x16xf32>,
    %c112_37 = arith.constant 112 : index
    %c48_38 = arith.constant 48 : index
    %30 = vector.load %arg10[%c112_37, %c48_38] : memref<392x144xf32, #tpu.memory_space<vmem>>, vector<8x16xf32>
    tpu.vector_store %arg10[%c112_37, %c48_38], %10 {strides = array<i32>} : memref<392x144xf32, #tpu.memory_space<vmem>>, vector<8x16xf32>,
    %c168_39 = arith.constant 168 : index
    %c48_40 = arith.constant 48 : index
    %31 = vector.load %arg10[%c168_39, %c48_40] : memref<392x144xf32, #tpu.memory_space<vmem>>, vector<8x16xf32>
    tpu.vector_store %arg10[%c168_39, %c48_40], %10 {strides = array<i32>} : memref<392x144xf32, #tpu.memory_space<vmem>>, vector<8x16xf32>,
    %c224_41 = arith.constant 224 : index
    %c48_42 = arith.constant 48 : index
    %32 = vector.load %arg10[%c224_41, %c48_42] : memref<392x144xf32, #tpu.memory_space<vmem>>, vector<8x16xf32>
    tpu.vector_store %arg10[%c224_41, %c48_42], %10 {strides = array<i32>} : memref<392x144xf32, #tpu.memory_space<vmem>>, vector<8x16xf32>,
    %c280_43 = arith.constant 280 : index
    %c48_44 = arith.constant 48 : index
    %33 = vector.load %arg10[%c280_43, %c48_44] : memref<392x144xf32, #tpu.memory_space<vmem>>, vector<8x16xf32>
    tpu.vector_store %arg10[%c280_43, %c48_44], %10 {strides = array<i32>} : memref<392x144xf32, #tpu.memory_space<vmem>>, vector<8x16xf32>,
    %c336_45 = arith.constant 336 : index
    %c48_46 = arith.constant 48 : index
    %34 = vector.load %arg10[%c336_45, %c48_46] : memref<392x144xf32, #tpu.memory_space<vmem>>, vector<8x16xf32>
    tpu.vector_store %arg10[%c336_45, %c48_46], %10 {strides = array<i32>} : memref<392x144xf32, #tpu.memory_space<vmem>>, vector<8x16xf32>,
    %c0_47 = arith.constant 0 : index
    %c48_48 = arith.constant 48 : index
    %35 = vector.load %arg9[%c0_47, %c48_48] : memref<392x64xf32, #tpu.memory_space<vmem>>, vector<392x16xf32>
    %c0_49 = arith.constant 0 : index
    %c64_50 = arith.constant 64 : index
    %36 = vector.load %arg10[%c0_49, %c64_50] : memref<392x144xf32, #tpu.memory_space<vmem>>, vector<392x16xf32>
    tpu.vector_store %arg10[%c0_49, %c64_50], %35 {strides = array<i32>} : memref<392x144xf32, #tpu.memory_space<vmem>>, vector<392x16xf32>,
    %c0_51 = arith.constant 0 : index
    %c32_52 = arith.constant 32 : index
    %37 = vector.load %arg9[%c0_51, %c32_52] : memref<392x64xf32, #tpu.memory_space<vmem>>, vector<392x16xf32>
    %c0_53 = arith.constant 0 : index
    %c80 = arith.constant 80 : index
    %38 = vector.load %arg10[%c0_53, %c80] : memref<392x144xf32, #tpu.memory_space<vmem>>, vector<392x16xf32>
    tpu.vector_store %arg10[%c0_53, %c80], %37 {strides = array<i32>} : memref<392x144xf32, #tpu.memory_space<vmem>>, vector<392x16xf32>,
    %c0_54 = arith.constant 0 : index
    %c0_55 = arith.constant 0 : index
    %39 = vector.load %arg9[%c0_54, %c0_55] : memref<392x64xf32, #tpu.memory_space<vmem>>, vector<384x16xf32>
    %c8_56 = arith.constant 8 : index
    %c96 = arith.constant 96 : index
    %40 = vector.load %arg10[%c8_56, %c96] : memref<392x144xf32, #tpu.memory_space<vmem>>, vector<384x16xf32>
    tpu.vector_store %arg10[%c8_56, %c96], %39 {strides = array<i32>} : memref<392x144xf32, #tpu.memory_space<vmem>>, vector<384x16xf32>,
    %c0_57 = arith.constant 0 : index
    %c96_58 = arith.constant 96 : index
    %41 = vector.load %arg10[%c0_57, %c96_58] : memref<392x144xf32, #tpu.memory_space<vmem>>, vector<8x16xf32>
    tpu.vector_store %arg10[%c0_57, %c96_58], %10 {strides = array<i32>} : memref<392x144xf32, #tpu.memory_space<vmem>>, vector<8x16xf32>,
    %c56_59 = arith.constant 56 : index
    %c96_60 = arith.constant 96 : index
    %42 = vector.load %arg10[%c56_59, %c96_60] : memref<392x144xf32, #tpu.memory_space<vmem>>, vector<8x16xf32>
    tpu.vector_store %arg10[%c56_59, %c96_60], %10 {strides = array<i32>} : memref<392x144xf32, #tpu.memory_space<vmem>>, vector<8x16xf32>,
    %c112_61 = arith.constant 112 : index
    %c96_62 = arith.constant 96 : index
    %43 = vector.load %arg10[%c112_61, %c96_62] : memref<392x144xf32, #tpu.memory_space<vmem>>, vector<8x16xf32>
    tpu.vector_store %arg10[%c112_61, %c96_62], %10 {strides = array<i32>} : memref<392x144xf32, #tpu.memory_space<vmem>>, vector<8x16xf32>,
    %c168_63 = arith.constant 168 : index
    %c96_64 = arith.constant 96 : index
    %44 = vector.load %arg10[%c168_63, %c96_64] : memref<392x144xf32, #tpu.memory_space<vmem>>, vector<8x16xf32>
    tpu.vector_store %arg10[%c168_63, %c96_64], %10 {strides = array<i32>} : memref<392x144xf32, #tpu.memory_space<vmem>>, vector<8x16xf32>,
    %c224_65 = arith.constant 224 : index
    %c96_66 = arith.constant 96 : index
    %45 = vector.load %arg10[%c224_65, %c96_66] : memref<392x144xf32, #tpu.memory_space<vmem>>, vector<8x16xf32>
    tpu.vector_store %arg10[%c224_65, %c96_66], %10 {strides = array<i32>} : memref<392x144xf32, #tpu.memory_space<vmem>>, vector<8x16xf32>,
    %c280_67 = arith.constant 280 : index
    %c96_68 = arith.constant 96 : index
    %46 = vector.load %arg10[%c280_67, %c96_68] : memref<392x144xf32, #tpu.memory_space<vmem>>, vector<8x16xf32>
    tpu.vector_store %arg10[%c280_67, %c96_68], %10 {strides = array<i32>} : memref<392x144xf32, #tpu.memory_space<vmem>>, vector<8x16xf32>,
    %c336_69 = arith.constant 336 : index
    %c96_70 = arith.constant 96 : index
    %47 = vector.load %arg10[%c336_69, %c96_70] : memref<392x144xf32, #tpu.memory_space<vmem>>, vector<8x16xf32>
    tpu.vector_store %arg10[%c336_69, %c96_70], %10 {strides = array<i32>} : memref<392x144xf32, #tpu.memory_space<vmem>>, vector<8x16xf32>,
    %c0_71 = arith.constant 0 : index
    %c16_72 = arith.constant 16 : index
    %48 = vector.load %arg9[%c0_71, %c16_72] : memref<392x64xf32, #tpu.memory_space<vmem>>, vector<392x16xf32>
    %c0_73 = arith.constant 0 : index
    %c112_74 = arith.constant 112 : index
    %49 = vector.load %arg10[%c0_73, %c112_74] : memref<392x144xf32, #tpu.memory_space<vmem>>, vector<392x16xf32>
    tpu.vector_store %arg10[%c0_73, %c112_74], %48 {strides = array<i32>} : memref<392x144xf32, #tpu.memory_space<vmem>>, vector<392x16xf32>,
    %c0_75 = arith.constant 0 : index
    %c0_76 = arith.constant 0 : index
    %50 = vector.load %arg9[%c0_75, %c0_76] : memref<392x64xf32, #tpu.memory_space<vmem>>, vector<392x16xf32>
    %c0_77 = arith.constant 0 : index
    %c128 = arith.constant 128 : index
    %51 = vector.load %arg10[%c0_77, %c128] : memref<392x144xf32, #tpu.memory_space<vmem>>, vector<392x16xf32>
    tpu.vector_store %arg10[%c0_77, %c128], %50 {strides = array<i32>} : memref<392x144xf32, #tpu.memory_space<vmem>>, vector<392x16xf32>,
    %c0_78 = arith.constant 0 : index
    %c0_79 = arith.constant 0 : index
    %52 = vector.load %arg10[%c0_78, %c0_79] : memref<392x144xf32, #tpu.memory_space<vmem>>, vector<392x144xf32>
    %c0_80 = arith.constant 0 : index
    %c0_81 = arith.constant 0 : index
    %53 = vector.load %arg4[%c0_80, %c0_81] : memref<144x32xf32, #tpu.memory_space<vmem>>, vector<144x32xf32>
    %cst_82 = arith.constant dense<0.000000e+00> : vector<392x32xf32>
    %54 = tpu.matmul %52, %53, %cst_82 {dimension_numbers = #tpu.dot_dimension_numbers<[1], [0], [0], [1], [0, 0, 1, 1], [], []>} : vector<392x144xf32>, vector<144x32xf32>, vector<392x32xf32> -> vector<392x32xf32>
    %c0_83 = arith.constant 0 : index
    %c0_84 = arith.constant 0 : index
    %55 = vector.load %arg5[%c0_83, %c0_84] : memref<1x32xf32, #tpu.memory_space<vmem>>, vector<1x32xf32>
    %56 = vector.broadcast %55 : vector<1x32xf32> to vector<392x32xf32>
    %57 = arith.addf %54, %56 : vector<392x32xf32>
    %cst_85 = arith.constant 0.000000e+00 : f32
    %58 = vector.broadcast %cst_85 : f32 to vector<392x32xf32>
    %59 = arith.maximumf %57, %58 : vector<392x32xf32>
    %c0_86 = arith.constant 0 : index
    %c0_87 = arith.constant 0 : index
    %60 = vector.load %arg11[%c0_86, %c0_87] : memref<392x32xf32, #tpu.memory_space<vmem>>, vector<392x32xf32>
    tpu.vector_store %arg11[%c0_86, %c0_87], %59 {strides = array<i32>} : memref<392x32xf32, #tpu.memory_space<vmem>>, vector<392x32xf32>,
    %c0_88 = arith.constant 0 : index
    %c0_89 = arith.constant 0 : index
    %61 = vector.load %arg11[%c0_88, %c0_89] : memref<392x32xf32, #tpu.memory_space<vmem>>, vector<8x32xf32>
    %c0_90 = arith.constant 0 : index
    %c0_91 = arith.constant 0 : index
    %62 = vector.load %arg12[%c0_90, %c0_91] : memref<8x1568xf32, #tpu.memory_space<vmem>>, vector<8x32xf32>
    tpu.vector_store %arg12[%c0_90, %c0_91], %61 {strides = array<i32>} : memref<8x1568xf32, #tpu.memory_space<vmem>>, vector<8x32xf32>,
    %c8_92 = arith.constant 8 : index
    %c0_93 = arith.constant 0 : index
    %63 = vector.load %arg11[%c8_92, %c0_93] : memref<392x32xf32, #tpu.memory_space<vmem>>, vector<8x32xf32>
    %c0_94 = arith.constant 0 : index
    %c32_95 = arith.constant 32 : index
    %64 = vector.load %arg12[%c0_94, %c32_95] : memref<8x1568xf32, #tpu.memory_space<vmem>>, vector<8x32xf32>
    tpu.vector_store %arg12[%c0_94, %c32_95], %63 {strides = array<i32>} : memref<8x1568xf32, #tpu.memory_space<vmem>>, vector<8x32xf32>,
    %c16_96 = arith.constant 16 : index
    %c0_97 = arith.constant 0 : index
    %65 = vector.load %arg11[%c16_96, %c0_97] : memref<392x32xf32, #tpu.memory_space<vmem>>, vector<8x32xf32>
    %c0_98 = arith.constant 0 : index
    %c64_99 = arith.constant 64 : index
    %66 = vector.load %arg12[%c0_98, %c64_99] : memref<8x1568xf32, #tpu.memory_space<vmem>>, vector<8x32xf32>
    tpu.vector_store %arg12[%c0_98, %c64_99], %65 {strides = array<i32>} : memref<8x1568xf32, #tpu.memory_space<vmem>>, vector<8x32xf32>,
    %c24 = arith.constant 24 : index
    %c0_100 = arith.constant 0 : index
    %67 = vector.load %arg11[%c24, %c0_100] : memref<392x32xf32, #tpu.memory_space<vmem>>, vector<8x32xf32>
    %c0_101 = arith.constant 0 : index
    %c96_102 = arith.constant 96 : index
    %68 = vector.load %arg12[%c0_101, %c96_102] : memref<8x1568xf32, #tpu.memory_space<vmem>>, vector<8x32xf32>
    tpu.vector_store %arg12[%c0_101, %c96_102], %67 {strides = array<i32>} : memref<8x1568xf32, #tpu.memory_space<vmem>>, vector<8x32xf32>,
    %c32_103 = arith.constant 32 : index
    %c0_104 = arith.constant 0 : index
    %69 = vector.load %arg11[%c32_103, %c0_104] : memref<392x32xf32, #tpu.memory_space<vmem>>, vector<8x32xf32>
    %c0_105 = arith.constant 0 : index
    %c128_106 = arith.constant 128 : index
    %70 = vector.load %arg12[%c0_105, %c128_106] : memref<8x1568xf32, #tpu.memory_space<vmem>>, vector<8x32xf32>
    tpu.vector_store %arg12[%c0_105, %c128_106], %69 {strides = array<i32>} : memref<8x1568xf32, #tpu.memory_space<vmem>>, vector<8x32xf32>,
    %c40 = arith.constant 40 : index
    %c0_107 = arith.constant 0 : index
    %71 = vector.load %arg11[%c40, %c0_107] : memref<392x32xf32, #tpu.memory_space<vmem>>, vector<8x32xf32>
    %c0_108 = arith.constant 0 : index
    %c160 = arith.constant 160 : index
    %72 = vector.load %arg12[%c0_108, %c160] : memref<8x1568xf32, #tpu.memory_space<vmem>>, vector<8x32xf32>
    tpu.vector_store %arg12[%c0_108, %c160], %71 {strides = array<i32>} : memref<8x1568xf32, #tpu.memory_space<vmem>>, vector<8x32xf32>,
    %c48_109 = arith.constant 48 : index
    %c0_110 = arith.constant 0 : index
    %73 = vector.load %arg11[%c48_109, %c0_110] : memref<392x32xf32, #tpu.memory_space<vmem>>, vector<8x32xf32>
    %c0_111 = arith.constant 0 : index
    %c192 = arith.constant 192 : index
    %74 = vector.load %arg12[%c0_111, %c192] : memref<8x1568xf32, #tpu.memory_space<vmem>>, vector<8x32xf32>
    tpu.vector_store %arg12[%c0_111, %c192], %73 {strides = array<i32>} : memref<8x1568xf32, #tpu.memory_space<vmem>>, vector<8x32xf32>,
    %c56_112 = arith.constant 56 : index
    %c0_113 = arith.constant 0 : index
    %75 = vector.load %arg11[%c56_112, %c0_113] : memref<392x32xf32, #tpu.memory_space<vmem>>, vector<8x32xf32>
    %c0_114 = arith.constant 0 : index
    %c224_115 = arith.constant 224 : index
    %76 = vector.load %arg12[%c0_114, %c224_115] : memref<8x1568xf32, #tpu.memory_space<vmem>>, vector<8x32xf32>
    tpu.vector_store %arg12[%c0_114, %c224_115], %75 {strides = array<i32>} : memref<8x1568xf32, #tpu.memory_space<vmem>>, vector<8x32xf32>,
    %c64_116 = arith.constant 64 : index
    %c0_117 = arith.constant 0 : index
    %77 = vector.load %arg11[%c64_116, %c0_117] : memref<392x32xf32, #tpu.memory_space<vmem>>, vector<8x32xf32>
    %c0_118 = arith.constant 0 : index
    %c256 = arith.constant 256 : index
    %78 = vector.load %arg12[%c0_118, %c256] : memref<8x1568xf32, #tpu.memory_space<vmem>>, vector<8x32xf32>
    tpu.vector_store %arg12[%c0_118, %c256], %77 {strides = array<i32>} : memref<8x1568xf32, #tpu.memory_space<vmem>>, vector<8x32xf32>,
    %c72 = arith.constant 72 : index
    %c0_119 = arith.constant 0 : index
    %79 = vector.load %arg11[%c72, %c0_119] : memref<392x32xf32, #tpu.memory_space<vmem>>, vector<8x32xf32>
    %c0_120 = arith.constant 0 : index
    %c288 = arith.constant 288 : index
    %80 = vector.load %arg12[%c0_120, %c288] : memref<8x1568xf32, #tpu.memory_space<vmem>>, vector<8x32xf32>
    tpu.vector_store %arg12[%c0_120, %c288], %79 {strides = array<i32>} : memref<8x1568xf32, #tpu.memory_space<vmem>>, vector<8x32xf32>,
    %c80_121 = arith.constant 80 : index
    %c0_122 = arith.constant 0 : index
    %81 = vector.load %arg11[%c80_121, %c0_122] : memref<392x32xf32, #tpu.memory_space<vmem>>, vector<8x32xf32>
    %c0_123 = arith.constant 0 : index
    %c320 = arith.constant 320 : index
    %82 = vector.load %arg12[%c0_123, %c320] : memref<8x1568xf32, #tpu.memory_space<vmem>>, vector<8x32xf32>
    tpu.vector_store %arg12[%c0_123, %c320], %81 {strides = array<i32>} : memref<8x1568xf32, #tpu.memory_space<vmem>>, vector<8x32xf32>,
    %c88 = arith.constant 88 : index
    %c0_124 = arith.constant 0 : index
    %83 = vector.load %arg11[%c88, %c0_124] : memref<392x32xf32, #tpu.memory_space<vmem>>, vector<8x32xf32>
    %c0_125 = arith.constant 0 : index
    %c352 = arith.constant 352 : index
    %84 = vector.load %arg12[%c0_125, %c352] : memref<8x1568xf32, #tpu.memory_space<vmem>>, vector<8x32xf32>
    tpu.vector_store %arg12[%c0_125, %c352], %83 {strides = array<i32>} : memref<8x1568xf32, #tpu.memory_space<vmem>>, vector<8x32xf32>,
    %c96_126 = arith.constant 96 : index
    %c0_127 = arith.constant 0 : index
    %85 = vector.load %arg11[%c96_126, %c0_127] : memref<392x32xf32, #tpu.memory_space<vmem>>, vector<8x32xf32>
    %c0_128 = arith.constant 0 : index
    %c384 = arith.constant 384 : index
    %86 = vector.load %arg12[%c0_128, %c384] : memref<8x1568xf32, #tpu.memory_space<vmem>>, vector<8x32xf32>
    tpu.vector_store %arg12[%c0_128, %c384], %85 {strides = array<i32>} : memref<8x1568xf32, #tpu.memory_space<vmem>>, vector<8x32xf32>,
    %c104 = arith.constant 104 : index
    %c0_129 = arith.constant 0 : index
    %87 = vector.load %arg11[%c104, %c0_129] : memref<392x32xf32, #tpu.memory_space<vmem>>, vector<8x32xf32>
    %c0_130 = arith.constant 0 : index
    %c416 = arith.constant 416 : index
    %88 = vector.load %arg12[%c0_130, %c416] : memref<8x1568xf32, #tpu.memory_space<vmem>>, vector<8x32xf32>
    tpu.vector_store %arg12[%c0_130, %c416], %87 {strides = array<i32>} : memref<8x1568xf32, #tpu.memory_space<vmem>>, vector<8x32xf32>,
    %c112_131 = arith.constant 112 : index
    %c0_132 = arith.constant 0 : index
    %89 = vector.load %arg11[%c112_131, %c0_132] : memref<392x32xf32, #tpu.memory_space<vmem>>, vector<8x32xf32>
    %c0_133 = arith.constant 0 : index
    %c448 = arith.constant 448 : index
    %90 = vector.load %arg12[%c0_133, %c448] : memref<8x1568xf32, #tpu.memory_space<vmem>>, vector<8x32xf32>
    tpu.vector_store %arg12[%c0_133, %c448], %89 {strides = array<i32>} : memref<8x1568xf32, #tpu.memory_space<vmem>>, vector<8x32xf32>,
    %c120 = arith.constant 120 : index
    %c0_134 = arith.constant 0 : index
    %91 = vector.load %arg11[%c120, %c0_134] : memref<392x32xf32, #tpu.memory_space<vmem>>, vector<8x32xf32>
    %c0_135 = arith.constant 0 : index
    %c480 = arith.constant 480 : index
    %92 = vector.load %arg12[%c0_135, %c480] : memref<8x1568xf32, #tpu.memory_space<vmem>>, vector<8x32xf32>
    tpu.vector_store %arg12[%c0_135, %c480], %91 {strides = array<i32>} : memref<8x1568xf32, #tpu.memory_space<vmem>>, vector<8x32xf32>,
    %c128_136 = arith.constant 128 : index
    %c0_137 = arith.constant 0 : index
    %93 = vector.load %arg11[%c128_136, %c0_137] : memref<392x32xf32, #tpu.memory_space<vmem>>, vector<8x32xf32>
    %c0_138 = arith.constant 0 : index
    %c512 = arith.constant 512 : index
    %94 = vector.load %arg12[%c0_138, %c512] : memref<8x1568xf32, #tpu.memory_space<vmem>>, vector<8x32xf32>
    tpu.vector_store %arg12[%c0_138, %c512], %93 {strides = array<i32>} : memref<8x1568xf32, #tpu.memory_space<vmem>>, vector<8x32xf32>,
    %c136 = arith.constant 136 : index
    %c0_139 = arith.constant 0 : index
    %95 = vector.load %arg11[%c136, %c0_139] : memref<392x32xf32, #tpu.memory_space<vmem>>, vector<8x32xf32>
    %c0_140 = arith.constant 0 : index
    %c544 = arith.constant 544 : index
    %96 = vector.load %arg12[%c0_140, %c544] : memref<8x1568xf32, #tpu.memory_space<vmem>>, vector<8x32xf32>
    tpu.vector_store %arg12[%c0_140, %c544], %95 {strides = array<i32>} : memref<8x1568xf32, #tpu.memory_space<vmem>>, vector<8x32xf32>,
    %c144 = arith.constant 144 : index
    %c0_141 = arith.constant 0 : index
    %97 = vector.load %arg11[%c144, %c0_141] : memref<392x32xf32, #tpu.memory_space<vmem>>, vector<8x32xf32>
    %c0_142 = arith.constant 0 : index
    %c576 = arith.constant 576 : index
    %98 = vector.load %arg12[%c0_142, %c576] : memref<8x1568xf32, #tpu.memory_space<vmem>>, vector<8x32xf32>
    tpu.vector_store %arg12[%c0_142, %c576], %97 {strides = array<i32>} : memref<8x1568xf32, #tpu.memory_space<vmem>>, vector<8x32xf32>,
    %c152 = arith.constant 152 : index
    %c0_143 = arith.constant 0 : index
    %99 = vector.load %arg11[%c152, %c0_143] : memref<392x32xf32, #tpu.memory_space<vmem>>, vector<8x32xf32>
    %c0_144 = arith.constant 0 : index
    %c608 = arith.constant 608 : index
    %100 = vector.load %arg12[%c0_144, %c608] : memref<8x1568xf32, #tpu.memory_space<vmem>>, vector<8x32xf32>
    tpu.vector_store %arg12[%c0_144, %c608], %99 {strides = array<i32>} : memref<8x1568xf32, #tpu.memory_space<vmem>>, vector<8x32xf32>,
    %c160_145 = arith.constant 160 : index
    %c0_146 = arith.constant 0 : index
    %101 = vector.load %arg11[%c160_145, %c0_146] : memref<392x32xf32, #tpu.memory_space<vmem>>, vector<8x32xf32>
    %c0_147 = arith.constant 0 : index
    %c640 = arith.constant 640 : index
    %102 = vector.load %arg12[%c0_147, %c640] : memref<8x1568xf32, #tpu.memory_space<vmem>>, vector<8x32xf32>
    tpu.vector_store %arg12[%c0_147, %c640], %101 {strides = array<i32>} : memref<8x1568xf32, #tpu.memory_space<vmem>>, vector<8x32xf32>,
    %c168_148 = arith.constant 168 : index
    %c0_149 = arith.constant 0 : index
    %103 = vector.load %arg11[%c168_148, %c0_149] : memref<392x32xf32, #tpu.memory_space<vmem>>, vector<8x32xf32>
    %c0_150 = arith.constant 0 : index
    %c672 = arith.constant 672 : index
    %104 = vector.load %arg12[%c0_150, %c672] : memref<8x1568xf32, #tpu.memory_space<vmem>>, vector<8x32xf32>
    tpu.vector_store %arg12[%c0_150, %c672], %103 {strides = array<i32>} : memref<8x1568xf32, #tpu.memory_space<vmem>>, vector<8x32xf32>,
    %c176 = arith.constant 176 : index
    %c0_151 = arith.constant 0 : index
    %105 = vector.load %arg11[%c176, %c0_151] : memref<392x32xf32, #tpu.memory_space<vmem>>, vector<8x32xf32>
    %c0_152 = arith.constant 0 : index
    %c704 = arith.constant 704 : index
    %106 = vector.load %arg12[%c0_152, %c704] : memref<8x1568xf32, #tpu.memory_space<vmem>>, vector<8x32xf32>
    tpu.vector_store %arg12[%c0_152, %c704], %105 {strides = array<i32>} : memref<8x1568xf32, #tpu.memory_space<vmem>>, vector<8x32xf32>,
    %c184 = arith.constant 184 : index
    %c0_153 = arith.constant 0 : index
    %107 = vector.load %arg11[%c184, %c0_153] : memref<392x32xf32, #tpu.memory_space<vmem>>, vector<8x32xf32>
    %c0_154 = arith.constant 0 : index
    %c736 = arith.constant 736 : index
    %108 = vector.load %arg12[%c0_154, %c736] : memref<8x1568xf32, #tpu.memory_space<vmem>>, vector<8x32xf32>
    tpu.vector_store %arg12[%c0_154, %c736], %107 {strides = array<i32>} : memref<8x1568xf32, #tpu.memory_space<vmem>>, vector<8x32xf32>,
    %c192_155 = arith.constant 192 : index
    %c0_156 = arith.constant 0 : index
    %109 = vector.load %arg11[%c192_155, %c0_156] : memref<392x32xf32, #tpu.memory_space<vmem>>, vector<8x32xf32>
    %c0_157 = arith.constant 0 : index
    %c768 = arith.constant 768 : index
    %110 = vector.load %arg12[%c0_157, %c768] : memref<8x1568xf32, #tpu.memory_space<vmem>>, vector<8x32xf32>
    tpu.vector_store %arg12[%c0_157, %c768], %109 {strides = array<i32>} : memref<8x1568xf32, #tpu.memory_space<vmem>>, vector<8x32xf32>,
    %c200 = arith.constant 200 : index
    %c0_158 = arith.constant 0 : index
    %111 = vector.load %arg11[%c200, %c0_158] : memref<392x32xf32, #tpu.memory_space<vmem>>, vector<8x32xf32>
    %c0_159 = arith.constant 0 : index
    %c800 = arith.constant 800 : index
    %112 = vector.load %arg12[%c0_159, %c800] : memref<8x1568xf32, #tpu.memory_space<vmem>>, vector<8x32xf32>
    tpu.vector_store %arg12[%c0_159, %c800], %111 {strides = array<i32>} : memref<8x1568xf32, #tpu.memory_space<vmem>>, vector<8x32xf32>,
    %c208 = arith.constant 208 : index
    %c0_160 = arith.constant 0 : index
    %113 = vector.load %arg11[%c208, %c0_160] : memref<392x32xf32, #tpu.memory_space<vmem>>, vector<8x32xf32>
    %c0_161 = arith.constant 0 : index
    %c832 = arith.constant 832 : index
    %114 = vector.load %arg12[%c0_161, %c832] : memref<8x1568xf32, #tpu.memory_space<vmem>>, vector<8x32xf32>
    tpu.vector_store %arg12[%c0_161, %c832], %113 {strides = array<i32>} : memref<8x1568xf32, #tpu.memory_space<vmem>>, vector<8x32xf32>,
    %c216 = arith.constant 216 : index
    %c0_162 = arith.constant 0 : index
    %115 = vector.load %arg11[%c216, %c0_162] : memref<392x32xf32, #tpu.memory_space<vmem>>, vector<8x32xf32>
    %c0_163 = arith.constant 0 : index
    %c864 = arith.constant 864 : index
    %116 = vector.load %arg12[%c0_163, %c864] : memref<8x1568xf32, #tpu.memory_space<vmem>>, vector<8x32xf32>
    tpu.vector_store %arg12[%c0_163, %c864], %115 {strides = array<i32>} : memref<8x1568xf32, #tpu.memory_space<vmem>>, vector<8x32xf32>,
    %c224_164 = arith.constant 224 : index
    %c0_165 = arith.constant 0 : index
    %117 = vector.load %arg11[%c224_164, %c0_165] : memref<392x32xf32, #tpu.memory_space<vmem>>, vector<8x32xf32>
    %c0_166 = arith.constant 0 : index
    %c896 = arith.constant 896 : index
    %118 = vector.load %arg12[%c0_166, %c896] : memref<8x1568xf32, #tpu.memory_space<vmem>>, vector<8x32xf32>
    tpu.vector_store %arg12[%c0_166, %c896], %117 {strides = array<i32>} : memref<8x1568xf32, #tpu.memory_space<vmem>>, vector<8x32xf32>,
    %c232 = arith.constant 232 : index
    %c0_167 = arith.constant 0 : index
    %119 = vector.load %arg11[%c232, %c0_167] : memref<392x32xf32, #tpu.memory_space<vmem>>, vector<8x32xf32>
    %c0_168 = arith.constant 0 : index
    %c928 = arith.constant 928 : index
    %120 = vector.load %arg12[%c0_168, %c928] : memref<8x1568xf32, #tpu.memory_space<vmem>>, vector<8x32xf32>
    tpu.vector_store %arg12[%c0_168, %c928], %119 {strides = array<i32>} : memref<8x1568xf32, #tpu.memory_space<vmem>>, vector<8x32xf32>,
    %c240 = arith.constant 240 : index
    %c0_169 = arith.constant 0 : index
    %121 = vector.load %arg11[%c240, %c0_169] : memref<392x32xf32, #tpu.memory_space<vmem>>, vector<8x32xf32>
    %c0_170 = arith.constant 0 : index
    %c960 = arith.constant 960 : index
    %122 = vector.load %arg12[%c0_170, %c960] : memref<8x1568xf32, #tpu.memory_space<vmem>>, vector<8x32xf32>
    tpu.vector_store %arg12[%c0_170, %c960], %121 {strides = array<i32>} : memref<8x1568xf32, #tpu.memory_space<vmem>>, vector<8x32xf32>,
    %c248 = arith.constant 248 : index
    %c0_171 = arith.constant 0 : index
    %123 = vector.load %arg11[%c248, %c0_171] : memref<392x32xf32, #tpu.memory_space<vmem>>, vector<8x32xf32>
    %c0_172 = arith.constant 0 : index
    %c992 = arith.constant 992 : index
    %124 = vector.load %arg12[%c0_172, %c992] : memref<8x1568xf32, #tpu.memory_space<vmem>>, vector<8x32xf32>
    tpu.vector_store %arg12[%c0_172, %c992], %123 {strides = array<i32>} : memref<8x1568xf32, #tpu.memory_space<vmem>>, vector<8x32xf32>,
    %c256_173 = arith.constant 256 : index
    %c0_174 = arith.constant 0 : index
    %125 = vector.load %arg11[%c256_173, %c0_174] : memref<392x32xf32, #tpu.memory_space<vmem>>, vector<8x32xf32>
    %c0_175 = arith.constant 0 : index
    %c1024 = arith.constant 1024 : index
    %126 = vector.load %arg12[%c0_175, %c1024] : memref<8x1568xf32, #tpu.memory_space<vmem>>, vector<8x32xf32>
    tpu.vector_store %arg12[%c0_175, %c1024], %125 {strides = array<i32>} : memref<8x1568xf32, #tpu.memory_space<vmem>>, vector<8x32xf32>,
    %c264 = arith.constant 264 : index
    %c0_176 = arith.constant 0 : index
    %127 = vector.load %arg11[%c264, %c0_176] : memref<392x32xf32, #tpu.memory_space<vmem>>, vector<8x32xf32>
    %c0_177 = arith.constant 0 : index
    %c1056 = arith.constant 1056 : index
    %128 = vector.load %arg12[%c0_177, %c1056] : memref<8x1568xf32, #tpu.memory_space<vmem>>, vector<8x32xf32>
    tpu.vector_store %arg12[%c0_177, %c1056], %127 {strides = array<i32>} : memref<8x1568xf32, #tpu.memory_space<vmem>>, vector<8x32xf32>,
    %c272 = arith.constant 272 : index
    %c0_178 = arith.constant 0 : index
    %129 = vector.load %arg11[%c272, %c0_178] : memref<392x32xf32, #tpu.memory_space<vmem>>, vector<8x32xf32>
    %c0_179 = arith.constant 0 : index
    %c1088 = arith.constant 1088 : index
    %130 = vector.load %arg12[%c0_179, %c1088] : memref<8x1568xf32, #tpu.memory_space<vmem>>, vector<8x32xf32>
    tpu.vector_store %arg12[%c0_179, %c1088], %129 {strides = array<i32>} : memref<8x1568xf32, #tpu.memory_space<vmem>>, vector<8x32xf32>,
    %c280_180 = arith.constant 280 : index
    %c0_181 = arith.constant 0 : index
    %131 = vector.load %arg11[%c280_180, %c0_181] : memref<392x32xf32, #tpu.memory_space<vmem>>, vector<8x32xf32>
    %c0_182 = arith.constant 0 : index
    %c1120 = arith.constant 1120 : index
    %132 = vector.load %arg12[%c0_182, %c1120] : memref<8x1568xf32, #tpu.memory_space<vmem>>, vector<8x32xf32>
    tpu.vector_store %arg12[%c0_182, %c1120], %131 {strides = array<i32>} : memref<8x1568xf32, #tpu.memory_space<vmem>>, vector<8x32xf32>,
    %c288_183 = arith.constant 288 : index
    %c0_184 = arith.constant 0 : index
    %133 = vector.load %arg11[%c288_183, %c0_184] : memref<392x32xf32, #tpu.memory_space<vmem>>, vector<8x32xf32>
    %c0_185 = arith.constant 0 : index
    %c1152 = arith.constant 1152 : index
    %134 = vector.load %arg12[%c0_185, %c1152] : memref<8x1568xf32, #tpu.memory_space<vmem>>, vector<8x32xf32>
    tpu.vector_store %arg12[%c0_185, %c1152], %133 {strides = array<i32>} : memref<8x1568xf32, #tpu.memory_space<vmem>>, vector<8x32xf32>,
    %c296 = arith.constant 296 : index
    %c0_186 = arith.constant 0 : index
    %135 = vector.load %arg11[%c296, %c0_186] : memref<392x32xf32, #tpu.memory_space<vmem>>, vector<8x32xf32>
    %c0_187 = arith.constant 0 : index
    %c1184 = arith.constant 1184 : index
    %136 = vector.load %arg12[%c0_187, %c1184] : memref<8x1568xf32, #tpu.memory_space<vmem>>, vector<8x32xf32>
    tpu.vector_store %arg12[%c0_187, %c1184], %135 {strides = array<i32>} : memref<8x1568xf32, #tpu.memory_space<vmem>>, vector<8x32xf32>,
    %c304 = arith.constant 304 : index
    %c0_188 = arith.constant 0 : index
    %137 = vector.load %arg11[%c304, %c0_188] : memref<392x32xf32, #tpu.memory_space<vmem>>, vector<8x32xf32>
    %c0_189 = arith.constant 0 : index
    %c1216 = arith.constant 1216 : index
    %138 = vector.load %arg12[%c0_189, %c1216] : memref<8x1568xf32, #tpu.memory_space<vmem>>, vector<8x32xf32>
    tpu.vector_store %arg12[%c0_189, %c1216], %137 {strides = array<i32>} : memref<8x1568xf32, #tpu.memory_space<vmem>>, vector<8x32xf32>,
    %c312 = arith.constant 312 : index
    %c0_190 = arith.constant 0 : index
    %139 = vector.load %arg11[%c312, %c0_190] : memref<392x32xf32, #tpu.memory_space<vmem>>, vector<8x32xf32>
    %c0_191 = arith.constant 0 : index
    %c1248 = arith.constant 1248 : index
    %140 = vector.load %arg12[%c0_191, %c1248] : memref<8x1568xf32, #tpu.memory_space<vmem>>, vector<8x32xf32>
    tpu.vector_store %arg12[%c0_191, %c1248], %139 {strides = array<i32>} : memref<8x1568xf32, #tpu.memory_space<vmem>>, vector<8x32xf32>,
    %c320_192 = arith.constant 320 : index
    %c0_193 = arith.constant 0 : index
    %141 = vector.load %arg11[%c320_192, %c0_193] : memref<392x32xf32, #tpu.memory_space<vmem>>, vector<8x32xf32>
    %c0_194 = arith.constant 0 : index
    %c1280 = arith.constant 1280 : index
    %142 = vector.load %arg12[%c0_194, %c1280] : memref<8x1568xf32, #tpu.memory_space<vmem>>, vector<8x32xf32>
    tpu.vector_store %arg12[%c0_194, %c1280], %141 {strides = array<i32>} : memref<8x1568xf32, #tpu.memory_space<vmem>>, vector<8x32xf32>,
    %c328 = arith.constant 328 : index
    %c0_195 = arith.constant 0 : index
    %143 = vector.load %arg11[%c328, %c0_195] : memref<392x32xf32, #tpu.memory_space<vmem>>, vector<8x32xf32>
    %c0_196 = arith.constant 0 : index
    %c1312 = arith.constant 1312 : index
    %144 = vector.load %arg12[%c0_196, %c1312] : memref<8x1568xf32, #tpu.memory_space<vmem>>, vector<8x32xf32>
    tpu.vector_store %arg12[%c0_196, %c1312], %143 {strides = array<i32>} : memref<8x1568xf32, #tpu.memory_space<vmem>>, vector<8x32xf32>,
    %c336_197 = arith.constant 336 : index
    %c0_198 = arith.constant 0 : index
    %145 = vector.load %arg11[%c336_197, %c0_198] : memref<392x32xf32, #tpu.memory_space<vmem>>, vector<8x32xf32>
    %c0_199 = arith.constant 0 : index
    %c1344 = arith.constant 1344 : index
    %146 = vector.load %arg12[%c0_199, %c1344] : memref<8x1568xf32, #tpu.memory_space<vmem>>, vector<8x32xf32>
    tpu.vector_store %arg12[%c0_199, %c1344], %145 {strides = array<i32>} : memref<8x1568xf32, #tpu.memory_space<vmem>>, vector<8x32xf32>,
    %c344 = arith.constant 344 : index
    %c0_200 = arith.constant 0 : index
    %147 = vector.load %arg11[%c344, %c0_200] : memref<392x32xf32, #tpu.memory_space<vmem>>, vector<8x32xf32>
    %c0_201 = arith.constant 0 : index
    %c1376 = arith.constant 1376 : index
    %148 = vector.load %arg12[%c0_201, %c1376] : memref<8x1568xf32, #tpu.memory_space<vmem>>, vector<8x32xf32>
    tpu.vector_store %arg12[%c0_201, %c1376], %147 {strides = array<i32>} : memref<8x1568xf32, #tpu.memory_space<vmem>>, vector<8x32xf32>,
    %c352_202 = arith.constant 352 : index
    %c0_203 = arith.constant 0 : index
    %149 = vector.load %arg11[%c352_202, %c0_203] : memref<392x32xf32, #tpu.memory_space<vmem>>, vector<8x32xf32>
    %c0_204 = arith.constant 0 : index
    %c1408 = arith.constant 1408 : index
    %150 = vector.load %arg12[%c0_204, %c1408] : memref<8x1568xf32, #tpu.memory_space<vmem>>, vector<8x32xf32>
    tpu.vector_store %arg12[%c0_204, %c1408], %149 {strides = array<i32>} : memref<8x1568xf32, #tpu.memory_space<vmem>>, vector<8x32xf32>,
    %c360 = arith.constant 360 : index
    %c0_205 = arith.constant 0 : index
    %151 = vector.load %arg11[%c360, %c0_205] : memref<392x32xf32, #tpu.memory_space<vmem>>, vector<8x32xf32>
    %c0_206 = arith.constant 0 : index
    %c1440 = arith.constant 1440 : index
    %152 = vector.load %arg12[%c0_206, %c1440] : memref<8x1568xf32, #tpu.memory_space<vmem>>, vector<8x32xf32>
    tpu.vector_store %arg12[%c0_206, %c1440], %151 {strides = array<i32>} : memref<8x1568xf32, #tpu.memory_space<vmem>>, vector<8x32xf32>,
    %c368 = arith.constant 368 : index
    %c0_207 = arith.constant 0 : index
    %153 = vector.load %arg11[%c368, %c0_207] : memref<392x32xf32, #tpu.memory_space<vmem>>, vector<8x32xf32>
    %c0_208 = arith.constant 0 : index
    %c1472 = arith.constant 1472 : index
    %154 = vector.load %arg12[%c0_208, %c1472] : memref<8x1568xf32, #tpu.memory_space<vmem>>, vector<8x32xf32>
    tpu.vector_store %arg12[%c0_208, %c1472], %153 {strides = array<i32>} : memref<8x1568xf32, #tpu.memory_space<vmem>>, vector<8x32xf32>,
    %c376 = arith.constant 376 : index
    %c0_209 = arith.constant 0 : index
    %155 = vector.load %arg11[%c376, %c0_209] : memref<392x32xf32, #tpu.memory_space<vmem>>, vector<8x32xf32>
    %c0_210 = arith.constant 0 : index
    %c1504 = arith.constant 1504 : index
    %156 = vector.load %arg12[%c0_210, %c1504] : memref<8x1568xf32, #tpu.memory_space<vmem>>, vector<8x32xf32>
    tpu.vector_store %arg12[%c0_210, %c1504], %155 {strides = array<i32>} : memref<8x1568xf32, #tpu.memory_space<vmem>>, vector<8x32xf32>,
    %c384_211 = arith.constant 384 : index
    %c0_212 = arith.constant 0 : index
    %157 = vector.load %arg11[%c384_211, %c0_212] : memref<392x32xf32, #tpu.memory_space<vmem>>, vector<8x32xf32>
    %c0_213 = arith.constant 0 : index
    %c1536 = arith.constant 1536 : index
    %158 = vector.load %arg12[%c0_213, %c1536] : memref<8x1568xf32, #tpu.memory_space<vmem>>, vector<8x32xf32>
    tpu.vector_store %arg12[%c0_213, %c1536], %157 {strides = array<i32>} : memref<8x1568xf32, #tpu.memory_space<vmem>>, vector<8x32xf32>,
    %c0_214 = arith.constant 0 : index
    %c0_215 = arith.constant 0 : index
    %159 = vector.load %arg12[%c0_214, %c0_215] : memref<8x1568xf32, #tpu.memory_space<vmem>>, vector<8x1568xf32>
    %c0_216 = arith.constant 0 : index
    %c0_217 = arith.constant 0 : index
    %160 = vector.load %arg6[%c0_216, %c0_217] : memref<1568x64xf32, #tpu.memory_space<vmem>>, vector<1568x64xf32>
    %cst_218 = arith.constant dense<0.000000e+00> : vector<8x64xf32>
    %161 = tpu.matmul %159, %160, %cst_218 {dimension_numbers = #tpu.dot_dimension_numbers<[1], [0], [0], [1], [0, 0, 1, 1], [], []>} : vector<8x1568xf32>, vector<1568x64xf32>, vector<8x64xf32> -> vector<8x64xf32>
    %c0_219 = arith.constant 0 : index
    %c0_220 = arith.constant 0 : index
    %162 = vector.load %arg7[%c0_219, %c0_220] : memref<1x64xf32, #tpu.memory_space<vmem>>, vector<1x64xf32>
    %163 = vector.broadcast %162 : vector<1x64xf32> to vector<8x64xf32>
    %164 = arith.addf %161, %163 : vector<8x64xf32>
    %c0_221 = arith.constant 0 : index
    %c0_222 = arith.constant 0 : index
    %165 = vector.load %arg8[%c0_221, %c0_222] : memref<8x64xf32, #tpu.memory_space<vmem>>, vector<8x64xf32>
    tpu.vector_store %arg8[%c0_221, %c0_222], %164 {strides = array<i32>} : memref<8x64xf32, #tpu.memory_space<vmem>>, vector<8x64xf32>,
    return
  }
  func.func @transform_0(%arg0: i32) -> (i32, i32) {
    %c0_i32 = arith.constant 0 : i32
    %c0_i32_0 = arith.constant 0 : i32
    return %arg0, %c0_i32 : i32, i32
  }
  func.func @transform_1(%arg0: i32) -> (i32, i32) {
    %c0_i32 = arith.constant 0 : i32
    %c0_i32_0 = arith.constant 0 : i32
    %c0_i32_1 = arith.constant 0 : i32
    return %c0_i32, %c0_i32_0 : i32, i32
  }
  func.func @transform_2(%arg0: i32) -> (i32, i32) {
    %c0_i32 = arith.constant 0 : i32
    %c0_i32_0 = arith.constant 0 : i32
    %c0_i32_1 = arith.constant 0 : i32
    return %c0_i32, %c0_i32_0 : i32, i32
  }
  func.func @transform_3(%arg0: i32) -> (i32, i32) {
    %c0_i32 = arith.constant 0 : i32
    %c0_i32_0 = arith.constant 0 : i32
    %c0_i32_1 = arith.constant 0 : i32
    return %c0_i32, %c0_i32_0 : i32, i32
  }
  func.func @transform_4(%arg0: i32) -> (i32, i32) {
    %c0_i32 = arith.constant 0 : i32
    %c0_i32_0 = arith.constant 0 : i32
    %c0_i32_1 = arith.constant 0 : i32
    return %c0_i32, %c0_i32_0 : i32, i32
  }
  func.func @transform_5(%arg0: i32) -> (i32, i32) {
    %c0_i32 = arith.constant 0 : i32
    %c0_i32_0 = arith.constant 0 : i32
    %c0_i32_1 = arith.constant 0 : i32
    return %c0_i32, %c0_i32_0 : i32, i32
  }
  func.func @transform_6(%arg0: i32) -> (i32, i32) {
    %c0_i32 = arith.constant 0 : i32
    %c0_i32_0 = arith.constant 0 : i32
    %c0_i32_1 = arith.constant 0 : i32
    return %c0_i32, %c0_i32_0 : i32, i32
  }
  func.func @transform_7(%arg0: i32) -> (i32, i32) {
    %c0_i32 = arith.constant 0 : i32
    %c0_i32_0 = arith.constant 0 : i32
    return %arg0, %c0_i32 : i32, i32
  }
}

</mosaic_0001>

<llo_original>
// kernel: encoder_forward.1
$region0: #{encoder_forward.1}
  #allocation0 [shape = 'u32[]', space=smem, size = 0x4, offset = 0x4, fixed_abs, tag = 'smem constant byte address 0x4 - core index']
  #allocation1 [shape = 'u32[144,128]{1,0:T(1,128)}', space=vmem, size = 0x12000, scoped, tag = 'internal scratch']
  #allocation2 [shape = 'f32[392,64]{1,0:T(8,128)}', space=vmem, size = 0x31000, scoped, tag = 'scratch operand']
  #allocation3 [shape = 'f32[392,144]{1,0:T(8,128)}', space=vmem, size = 0x62000, scoped, tag = 'scratch operand']
  #allocation4 [shape = 'f32[392,32]{1,0:T(8,128)}', space=vmem, size = 0x31000, scoped, tag = 'scratch operand']
  #allocation5 [shape = 'f32[8,1568]{1,0:T(8,128)}', space=vmem, size = 0xd000, scoped, tag = 'scratch operand']
  %s0 = inlined_call_operand.vmem [shape: f32[784,36], index: 0, kind: input, shape index: {}]
  %s1 = inlined_call_operand.vmem [shape: f32[36,64], index: 1, kind: input, shape index: {}]
  %s2 = inlined_call_operand.vmem [shape: f32[1,64], index: 2, kind: input, shape index: {}]
  %s3 = inlined_call_operand.vmem [shape: f32[144,32], index: 3, kind: input, shape index: {}]
  %s4 = inlined_call_operand.vmem [shape: f32[1,32], index: 4, kind: input, shape index: {}]
  %s5 = inlined_call_operand.vmem [shape: f32[1568,64], index: 5, kind: input, shape index: {}]
  %s6 = inlined_call_operand.vmem [shape: f32[1,64], index: 6, kind: input, shape index: {}]
  %s7 = inlined_call_operand.hbm [shape: f32[16,64], index: 7, kind: output, shape index: {}]
  %s8 = sld [smem:[#allocation0]]
  $region61: #{encoder_forward.1} parent=0
    _
  %s10 = ssub.s32 1, %s8
  %s11 = scalar_select 0, %s10, %s8
  $region1: #{encoder_forward.1} parent=0
    #allocation6 [shape = 'u8[8192]{0}', space=vmem, size = 0x2000, scoped, tag = 'output window, operand 0']
    #allocation7 [shape = 's32[2]{0}', space=sflag, size = 0x8, scoped, tag = 'scoped memory for encoder_forward.1']
    %12 = vsyncpa [#allocation7], 0
    %s13 = scalar_lea.sflag [#allocation7], 1
    %14 = vsyncpa %s13, 0
    loop: start=0, step=1, limit=4
    $region2: #{encoder_forward.1} parent=1 // loop_pre_header
      _
    $region3: #{encoder_forward.1} parent=1 // loop_header
      %s16 = sphi 0, %s20
      %p17 = scmp.ge.s32.totalorder %s16, 4
      %s26 = sphi 0, %s28
      %s29 = sphi 0, %s26
      %s30 = sphi 0, %s29
      %s46 = sphi 0, %s30
      %s50 = sphi 0, %s50
      %s52 = sphi 0, %s50
      %s53 = sphi 0, %s52
      %s67 = sphi 0, %s53
      %s71 = sphi 0, %s71
      %s73 = sphi 0, %s71
      %s74 = sphi 0, %s73
      %s88 = sphi 0, %s74
      %s92 = sphi 0, %s92
      %s94 = sphi 0, %s92
      %s95 = sphi 0, %s94
      %s109 = sphi 0, %s95
      %s113 = sphi 0, %s113
      %s115 = sphi 0, %s113
      %s116 = sphi 0, %s115
      %s130 = sphi 0, %s116
      %s134 = sphi 0, %s134
      %s136 = sphi 0, %s134
      %s137 = sphi 0, %s136
      %s151 = sphi 0, %s137
      %s155 = sphi 0, %s155
      %s157 = sphi 0, %s155
      %s158 = sphi 0, %s157
      %s172 = sphi 0, %s158
      %s178 = sphi 0, %s180
      %s181 = sphi 0, %s178
      %s182 = sphi 0, %s181
      %s198 = sphi 0, %s182
    $region4: #{encoder_forward.1} parent=1 // loop_header_branch
      %19 = sbr.rel (%p17) target = $region8
    $region5: #{encoder_forward.1} parent=1 // loop_body
      %s21 = ssub.s32 %s16, 1
      %s22 = ssub.s32 %s16, 2
      %s23 = sadd.s32 %s16, 1
      %s24 = ssub.s32 %s16, %s23
      %p25 = scmp.eq.s32.totalorder %s24, 0
      %s27 = sadd.s32 %s26, 1
      %s28 = scalar_select %p25, %s26, %s27
      %p31 = pneg %p25
      %p32 = scmp.eq.s32.totalorder %s16, 1
      %p33 = por %p31, %p32
      %p34 = scmp.ne.s32.totalorder %s26, %s29
      %p35 = scmp.eq.s32.totalorder %s16, 0
      %p36 = por %p34, %p35
      %p37 = scmp.ne.s32.totalorder %s26, %s29
      %p38 = scmp.eq.s32.totalorder %s21, 1
      %p39 = por %p37, %p38
      %p40 = scmp.ne.s32.totalorder %s29, %s30
      %p41 = scmp.eq.s32.totalorder %s21, 0
      %p42 = por %p40, %p41
      %p43 = scmp.ne.s32.totalorder %s29, %s30
      %p44 = scmp.eq.s32.totalorder %s22, 1
      %p45 = por %p43, %p44
      %p47 = scmp.ne.s32.totalorder %s30, %s46
      %p48 = scmp.eq.s32.totalorder %s22, 0
      %p49 = por %p47, %p48
      %s51 = sadd.s32 %s50, 1
      %p54 = scmp.eq.s32.totalorder %s16, 1
      %p55 = scmp.ne.s32.totalorder %s50, %s52
      %p56 = scmp.eq.s32.totalorder %s16, 0
      %p57 = por %p55, %p56
      %p58 = scmp.ne.s32.totalorder %s50, %s52
      %p59 = scmp.eq.s32.totalorder %s21, 1
      %p60 = por %p58, %p59
      %p61 = scmp.ne.s32.totalorder %s52, %s53
      %p62 = scmp.eq.s32.totalorder %s21, 0
      %p63 = por %p61, %p62
      %p64 = scmp.ne.s32.totalorder %s52, %s53
      %p65 = scmp.eq.s32.totalorder %s22, 1
      %p66 = por %p64, %p65
      %p68 = scmp.ne.s32.totalorder %s53, %s67
      %p69 = scmp.eq.s32.totalorder %s22, 0
      %p70 = por %p68, %p69
      %s72 = sadd.s32 %s71, 1
      %p75 = scmp.eq.s32.totalorder %s16, 1
      %p76 = scmp.ne.s32.totalorder %s71, %s73
      %p77 = scmp.eq.s32.totalorder %s16, 0
      %p78 = por %p76, %p77
      %p79 = scmp.ne.s32.totalorder %s71, %s73
      %p80 = scmp.eq.s32.totalorder %s21, 1
      %p81 = por %p79, %p80
      %p82 = scmp.ne.s32.totalorder %s73, %s74
      %p83 = scmp.eq.s32.totalorder %s21, 0
      %p84 = por %p82, %p83
      %p85 = scmp.ne.s32.totalorder %s73, %s74
      %p86 = scmp.eq.s32.totalorder %s22, 1
      %p87 = por %p85, %p86
      %p89 = scmp.ne.s32.totalorder %s74, %s88
      %p90 = scmp.eq.s32.totalorder %s22, 0
      %p91 = por %p89, %p90
      %s93 = sadd.s32 %s92, 1
      %p96 = scmp.eq.s32.totalorder %s16, 1
      %p97 = scmp.ne.s32.totalorder %s92, %s94
      %p98 = scmp.eq.s32.totalorder %s16, 0
      %p99 = por %p97, %p98
      %p100 = scmp.ne.s32.totalorder %s92, %s94
      %p101 = scmp.eq.s32.totalorder %s21, 1
      %p102 = por %p100, %p101
      %p103 = scmp.ne.s32.totalorder %s94, %s95
      %p104 = scmp.eq.s32.totalorder %s21, 0
      %p105 = por %p103, %p104
      %p106 = scmp.ne.s32.totalorder %s94, %s95
      %p107 = scmp.eq.s32.totalorder %s22, 1
      %p108 = por %p106, %p107
      %p110 = scmp.ne.s32.totalorder %s95, %s109
      %p111 = scmp.eq.s32.totalorder %s22, 0
      %p112 = por %p110, %p111
      %s114 = sadd.s32 %s113, 1
      %p117 = scmp.eq.s32.totalorder %s16, 1
      %p118 = scmp.ne.s32.totalorder %s113, %s115
      %p119 = scmp.eq.s32.totalorder %s16, 0
      %p120 = por %p118, %p119
      %p121 = scmp.ne.s32.totalorder %s113, %s115
      %p122 = scmp.eq.s32.totalorder %s21, 1
      %p123 = por %p121, %p122
      %p124 = scmp.ne.s32.totalorder %s115, %s116
      %p125 = scmp.eq.s32.totalorder %s21, 0
      %p126 = por %p124, %p125
      %p127 = scmp.ne.s32.totalorder %s115, %s116
      %p128 = scmp.eq.s32.totalorder %s22, 1
      %p129 = por %p127, %p128
      %p131 = scmp.ne.s32.totalorder %s116, %s130
      %p132 = scmp.eq.s32.totalorder %s22, 0
      %p133 = por %p131, %p132
      %s135 = sadd.s32 %s134, 1
      %p138 = scmp.eq.s32.totalorder %s16, 1
      %p139 = scmp.ne.s32.totalorder %s134, %s136
      %p140 = scmp.eq.s32.totalorder %s16, 0
      %p141 = por %p139, %p140
      %p142 = scmp.ne.s32.totalorder %s134, %s136
      %p143 = scmp.eq.s32.totalorder %s21, 1
      %p144 = por %p142, %p143
      %p145 = scmp.ne.s32.totalorder %s136, %s137
      %p146 = scmp.eq.s32.totalorder %s21, 0
      %p147 = por %p145, %p146
      %p148 = scmp.ne.s32.totalorder %s136, %s137
      %p149 = scmp.eq.s32.totalorder %s22, 1
      %p150 = por %p148, %p149
      %p152 = scmp.ne.s32.totalorder %s137, %s151
      %p153 = scmp.eq.s32.totalorder %s22, 0
      %p154 = por %p152, %p153
      %s156 = sadd.s32 %s155, 1
      %p159 = scmp.eq.s32.totalorder %s16, 1
      %p160 = scmp.ne.s32.totalorder %s155, %s157
      %p161 = scmp.eq.s32.totalorder %s16, 0
      %p162 = por %p160, %p161
      %p163 = scmp.ne.s32.totalorder %s155, %s157
      %p164 = scmp.eq.s32.totalorder %s21, 1
      %p165 = por %p163, %p164
      %p166 = scmp.ne.s32.totalorder %s157, %s158
      %p167 = scmp.eq.s32.totalorder %s21, 0
      %p168 = por %p166, %p167
      %p169 = scmp.ne.s32.totalorder %s157, %s158
      %p170 = scmp.eq.s32.totalorder %s22, 1
      %p171 = por %p169, %p170
      %p173 = scmp.ne.s32.totalorder %s158, %s172
      %p174 = scmp.eq.s32.totalorder %s22, 0
      %p175 = por %p173, %p174
      %s176 = ssub.s32 %s16, %s23
      %p177 = scmp.eq.s32.totalorder %s176, 0
      %s179 = sadd.s32 %s178, 1
      %s180 = scalar_select %p177, %s178, %s179
      %p183 = pneg %p177
      %p184 = scmp.eq.s32.totalorder %s16, 1
      %p185 = por %p183, %p184
      %p186 = scmp.ne.s32.totalorder %s178, %s181
      %p187 = scmp.eq.s32.totalorder %s16, 0
      %p188 = por %p186, %p187
      %p189 = scmp.ne.s32.totalorder %s178, %s181
      %p190 = scmp.eq.s32.totalorder %s21, 1
      %p191 = por %p189, %p190
      %p192 = scmp.ne.s32.totalorder %s181, %s182
      %p193 = scmp.eq.s32.totalorder %s21, 0
      %p194 = por %p192, %p193
      %p195 = scmp.ne.s32.totalorder %s181, %s182
      %p196 = scmp.eq.s32.totalorder %s22, 1
      %p197 = por %p195, %p196
      %p199 = scmp.ne.s32.totalorder %s182, %s198
      %p200 = scmp.eq.s32.totalorder %s22, 0
      %p201 = por %p199, %p200
      %p202 = scmp.le.s32.totalorder 1, %s16
      %p203 = scmp.lt.s32.totalorder %s16, 3
      %p204 = pnand %p202, %p203
      %p205 = pneg %p204
      // Predicated region
      $region9: #{encoder_forward.1} parent=5 // pred_check
        _
      $region10: #{encoder_forward.1} parent=5 // pred_check_branch
        %207 = sbr.rel (%p204) target = $region12
      $region11: #{encoder_forward.1} parent=5 // pred_region
        %s208 = ssub.s32 %s16, 1
        // Predicated region
        $region13: #{encoder_forward.1} parent=11 // pred_check
          %p209 = pneg %p63
        $region14: #{encoder_forward.1} parent=11 // pred_check_branch
          %211 = sbr.rel (%p209) target = $region16
        $region15: #{encoder_forward.1} parent=11 // pred_region
          _
        $region16: #{encoder_forward.1} parent=11 // pred_fallthru
          _
        // Predicated region
        $region17: #{encoder_forward.1} parent=11 // pred_check
          %p212 = pneg %p84
        $region18: #{encoder_forward.1} parent=11 // pred_check_branch
          %214 = sbr.rel (%p212) target = $region20
        $region19: #{encoder_forward.1} parent=11 // pred_region
          _
        $region20: #{encoder_forward.1} parent=11 // pred_fallthru
          _
        // Predicated region
        $region21: #{encoder_forward.1} parent=11 // pred_check
          %p215 = pneg %p105
        $region22: #{encoder_forward.1} parent=11 // pred_check_branch
          %217 = sbr.rel (%p215) target = $region24
        $region23: #{encoder_forward.1} parent=11 // pred_region
          _
        $region24: #{encoder_forward.1} parent=11 // pred_fallthru
          _
        // Predicated region
        $region25: #{encoder_forward.1} parent=11 // pred_check
          %p218 = pneg %p126
        $region26: #{encoder_forward.1} parent=11 // pred_check_branch
          %220 = sbr.rel (%p218) target = $region28
        $region27: #{encoder_forward.1} parent=11 // pred_region
          _
        $region28: #{encoder_forward.1} parent=11 // pred_fallthru
          _
        // Predicated region
        $region29: #{encoder_forward.1} parent=11 // pred_check
          %p221 = pneg %p147
        $region30: #{encoder_forward.1} parent=11 // pred_check_branch
          %223 = sbr.rel (%p221) target = $region32
        $region31: #{encoder_forward.1} parent=11 // pred_region
          _
        $region32: #{encoder_forward.1} parent=11 // pred_fallthru
          _
        // Predicated region
        $region33: #{encoder_forward.1} parent=11 // pred_check
          %p224 = pneg %p168
        $region34: #{encoder_forward.1} parent=11 // pred_check_branch
          %226 = sbr.rel (%p224) target = $region36
        $region35: #{encoder_forward.1} parent=11 // pred_region
          _
        $region36: #{encoder_forward.1} parent=11 // pred_fallthru
          _
      $region12: #{encoder_forward.1} parent=5 // pred_fallthru
        _
      %p227 = scmp.lt.s32.totalorder %s16, 2
      // Predicated region
      $region37: #{encoder_forward.1} parent=5 // pred_check
        %p228 = pneg %p227
      $region38: #{encoder_forward.1} parent=5 // pred_check_branch
        %230 = sbr.rel (%p228) target = $region40
      $region39: #{encoder_forward.1} parent=5 // pred_region
        // Predicated region
        $region41: #{encoder_forward.1} parent=39 // pred_check
          %p231 = pneg %p36
        $region42: #{encoder_forward.1} parent=39 // pred_check_branch
          %233 = sbr.rel (%p231) target = $region44
        $region43: #{encoder_forward.1} parent=39 // pred_region
          %s234 = smul.u32 49, %s16
          %p235 = scmp.lt.s32.totalorder %s234, 97
          %s236 = scalar_select %p235, %s234, 97
          %s237 = smul.addr %s236, 8
          %s238 = scalar_lea.vmem %s0, %s237
          %s239 = smul.u32 49, %s16
        $region44: #{encoder_forward.1} parent=39 // pred_fallthru
          _
      $region40: #{encoder_forward.1} parent=5 // pred_fallthru
        _
      %p240 = scmp.le.s32.totalorder 1, %s16
      %p241 = scmp.lt.s32.totalorder %s16, 3
      %p242 = pnand %p240, %p241
      %p243 = pneg %p242
      // Predicated region
      $region45: #{encoder_forward.1} parent=5 // pred_check
        _
      $region46: #{encoder_forward.1} parent=5 // pred_check_branch
        %245 = sbr.rel (%p242) target = $region48
      $region47: #{encoder_forward.1} parent=5 // pred_region
        %s246 = ssub.s32 %s16, 1
        %s247 = smul.u32 49, %s21
        %p248 = scmp.lt.s32.totalorder %s247, 97
        %s249 = scalar_select %p248, %s247, 97
        %s250 = smul.addr %s249, 8
        %s251 = scalar_lea.vmem %s0, %s250
        %p252 = pneg %p42
        %p253 = pneg %p39
        %p254 = pneg %p63
        %p255 = pneg %p60
        %p256 = pneg %p84
        %p257 = pneg %p81
        %p258 = pneg %p105
        %p259 = pneg %p102
        %p260 = pneg %p126
        %p261 = pneg %p123
        %p262 = pneg %p147
        %p263 = pneg %p144
        %p264 = pneg %p168
        %p265 = pneg %p165
        %p266 = pneg %p194
        %p267 = pneg %p191
        %s268 = sand.u32 %s181, 1
        %s269 = scalar_lea.sflag [#allocation7], %s268
        %s270 = sand.u32 %s181, 1
        %s271 = smul.addr %s270, 8
        %s272 = scalar_lea.vmem [#allocation6], %s271
        %s273 = smul.u32 49, %s21
        %p274 = scmp.lt.s32.totalorder %s273, 97
        %s275 = scalar_select %p274, %s273, 97
        %s276 = smul.addr %s275, 8
        %s277 = scalar_lea.vmem %s0, %s276
        %s278 = smul.u32 49, %s21
        %v279 = vld [vmem:[%s277] sm:$0xff]
        %v280 = vld [vmem:[%s277 + $0x8] sm:$0xff]
        %v281 = vld [vmem:[%s277 + $0x10] sm:$0xff]
        %v282 = vld [vmem:[%s277 + $0x18] sm:$0xff]
        %v283 = vld [vmem:[%s277 + $0x20] sm:$0xff]
        %v284 = vld [vmem:[%s277 + $0x28] sm:$0xff]
        %v285 = vld [vmem:[%s277 + $0x30] sm:$0xff]
        %v286 = vld [vmem:[%s277 + $0x38] sm:$0xff]
        %v287 = vld [vmem:[%s277 + $0x40] sm:$0xff]
        %v288 = vld [vmem:[%s277 + $0x48] sm:$0xff]
        %v289 = vld [vmem:[%s277 + $0x50] sm:$0xff]
        %v290 = vld [vmem:[%s277 + $0x58] sm:$0xff]
        %v291 = vld [vmem:[%s277 + $0x60] sm:$0xff]
        %v292 = vld [vmem:[%s277 + $0x68] sm:$0xff]
        %v293 = vld [vmem:[%s277 + $0x70] sm:$0xff]
        %v294 = vld [vmem:[%s277 + $0x78] sm:$0xff]
        %v295 = vld [vmem:[%s277 + $0x80] sm:$0xff]
        %v296 = vld [vmem:[%s277 + $0x88] sm:$0xff]
        %v297 = vld [vmem:[%s277 + $0x90] sm:$0xff]
        %v298 = vld [vmem:[%s277 + $0x98] sm:$0xff]
        %v299 = vld [vmem:[%s277 + $0xa0] sm:$0xff]
        %v300 = vld [vmem:[%s277 + $0xa8] sm:$0xff]
        %v301 = vld [vmem:[%s277 + $0xb0] sm:$0xff]
        %v302 = vld [vmem:[%s277 + $0xb8] sm:$0xff]
        %v303 = vld [vmem:[%s277 + $0xc0] sm:$0xff]
        %v304 = vld [vmem:[%s277 + $0xc8] sm:$0xff]
        %v305 = vld [vmem:[%s277 + $0xd0] sm:$0xff]
        %v306 = vld [vmem:[%s277 + $0xd8] sm:$0xff]
        %v307 = vld [vmem:[%s277 + $0xe0] sm:$0xff]
        %v308 = vld [vmem:[%s277 + $0xe8] sm:$0xff]
        %v309 = vld [vmem:[%s277 + $0xf0] sm:$0xff]
        %v310 = vld [vmem:[%s277 + $0xf8] sm:$0xff]
        %v311 = vld [vmem:[%s277 + $0x100] sm:$0xff]
        %v312 = vld [vmem:[%s277 + $0x108] sm:$0xff]
        %v313 = vld [vmem:[%s277 + $0x110] sm:$0xff]
        %v314 = vld [vmem:[%s277 + $0x118] sm:$0xff]
        %v315 = vld [vmem:[%s277 + $0x120] sm:$0xff]
        %v316 = vld [vmem:[%s277 + $0x128] sm:$0xff]
        %v317 = vld [vmem:[%s277 + $0x130] sm:$0xff]
        %v318 = vld [vmem:[%s277 + $0x138] sm:$0xff]
        %v319 = vld [vmem:[%s277 + $0x140] sm:$0xff]
        %v320 = vld [vmem:[%s277 + $0x148] sm:$0xff]
        %v321 = vld [vmem:[%s277 + $0x150] sm:$0xff]
        %v322 = vld [vmem:[%s277 + $0x158] sm:$0xff]
        %v323 = vld [vmem:[%s277 + $0x160] sm:$0xff]
        %v324 = vld [vmem:[%s277 + $0x168] sm:$0xff]
        %v325 = vld [vmem:[%s277 + $0x170] sm:$0xff]
        %v326 = vld [vmem:[%s277 + $0x178] sm:$0xff]
        %v327 = vld [vmem:[%s277 + $0x180] sm:$0xff]
        %v328 = vld [vmem:[%s1] sm:$0xff]
        %v329 = vld [vmem:[%s1 + $0x8] sm:$0xff]
        %v330 = vld [vmem:[%s1 + $0x10] sm:$0xff]
        %v331 = vld [vmem:[%s1 + $0x18] sm:$0xff]
        %v332 = vld [vmem:[%s1 + $0x20] sm:$0xf]
        %v333 = vld [vmem:[%s2] sm:$0x1]
        %v335 = vlaneseq
        %v336 = vshrl.u32 %v335, 7
        %v337 = vsub.s32 0, %v336
        %v338 = vrot.slane %v333, %v337
        %vm340 = vcmask 293888
        %v342 = vsel %vm340, %v279, 0
        %v345 = vsel %vm340, %v280, 0
        %v348 = vsel %vm340, %v281, 0
        %v351 = vsel %vm340, %v282, 0
        %v354 = vsel %vm340, %v283, 0
        %v357 = vsel %vm340, %v284, 0
        %v360 = vsel %vm340, %v285, 0
        %v363 = vsel %vm340, %v286, 0
        %v366 = vsel %vm340, %v287, 0
        %v369 = vsel %vm340, %v288, 0
        %v372 = vsel %vm340, %v289, 0
        %v375 = vsel %vm340, %v290, 0
        %v378 = vsel %vm340, %v291, 0
        %v381 = vsel %vm340, %v292, 0
        %v384 = vsel %vm340, %v293, 0
        %v387 = vsel %vm340, %v294, 0
        %v390 = vsel %vm340, %v295, 0
        %v393 = vsel %vm340, %v296, 0
        %v396 = vsel %vm340, %v297, 0
        %v399 = vsel %vm340, %v298, 0
        %v402 = vsel %vm340, %v299, 0
        %v405 = vsel %vm340, %v300, 0
        %v408 = vsel %vm340, %v301, 0
        %v411 = vsel %vm340, %v302, 0
        %v414 = vsel %vm340, %v303, 0
        %v417 = vsel %vm340, %v304, 0
        %v420 = vsel %vm340, %v305, 0
        %v423 = vsel %vm340, %v306, 0
        %v426 = vsel %vm340, %v307, 0
        %v429 = vsel %vm340, %v308, 0
        %v432 = vsel %vm340, %v309, 0
        %v435 = vsel %vm340, %v310, 0
        %v438 = vsel %vm340, %v311, 0
        %v441 = vsel %vm340, %v312, 0
        %v444 = vsel %vm340, %v313, 0
        %v447 = vsel %vm340, %v314, 0
        %v450 = vsel %vm340, %v315, 0
        %v453 = vsel %vm340, %v316, 0
        %v456 = vsel %vm340, %v317, 0
        %v459 = vsel %vm340, %v318, 0
        %v462 = vsel %vm340, %v319, 0
        %v465 = vsel %vm340, %v320, 0
        %v468 = vsel %vm340, %v321, 0
        %v471 = vsel %vm340, %v322, 0
        %v474 = vsel %vm340, %v323, 0
        %v477 = vsel %vm340, %v324, 0
        %v480 = vsel %vm340, %v325, 0
        %v483 = vsel %vm340, %v326, 0
        %v486 = vsel %vm340, %v327, 0
        %vm488 = vcmask 1043456
        %v490 = vsel %vm488, %v332, 0
        %492 = vmatprep.subr.mxu0 0.0
        %493 = vmatpush1.msra.mxu0 0.0
        %494 = vmatprep.subr.mxu0 0.0
        %495 = vmatpush1.msra.mxu0 0.0
        %496 = vmatprep.subr.mxu0 0.0
        %497 = vmatpush1.msra.mxu0 0.0
        %498 = vmatprep.subr.mxu0 0.0
        %499 = vmatpush1.msra.mxu0 0.0
        %500 = vmatprep.subr.mxu0 0.0
        %501 = vmatpush1.msra.mxu0 0.0
        %502 = vmatprep.subr.mxu0 0.0
        %503 = vmatpush1.msra.mxu0 0.0
        %504 = vmatprep.subr.mxu0 0.0
        %505 = vmatpush1.msra.mxu0 0.0
        %506 = vmatprep.subr.mxu0 0.0
        %507 = vmatpush1.msra.mxu0 0.0
        %508 = vmatprep.subr.mxu0 0.0
        %509 = vmatpush1.msra.mxu0 0.0
        %510 = vmatprep.subr.mxu0 0.0
        %511 = vmatpush1.msra.mxu0 0.0
        %512 = vmatprep.subr.mxu0 0.0
        %513 = vmatpush1.msra.mxu0 0.0
        %514 = vmatprep.subr.mxu0 0.0
        %515 = vmatpush1.msra.mxu0 %v490
        %516 = vmatprep.subr.mxu0 0.0
        %517 = vmatpush1.msra.mxu0 %v331
        %518 = vmatprep.subr.mxu0 0.0
        %519 = vmatpush1.msra.mxu0 %v330
        %520 = vmatprep.subr.mxu0 0.0
        %521 = vmatpush1.msra.mxu0 %v329
        %522 = vmatprep.subr.mxu0 0.0
        %523 = vmatpush1.msra.mxu0 %v328
        %524 = vmatprep.subr.mxu0 0.0
        %525 = vmatpush2.msra.mxu0 0.0
        %526 = vmatprep.subr.mxu0 0.0
        %527 = vmatpush2.msra.mxu0 0.0
        %528 = vmatprep.subr.mxu0 0.0
        %529 = vmatpush2.msra.mxu0 0.0
        %530 = vmatprep.subr.mxu0 0.0
        %531 = vmatpush2.msra.mxu0 0.0
        %532 = vmatprep.subr.mxu0 0.0
        %533 = vmatpush2.msra.mxu0 0.0
        %534 = vmatprep.subr.mxu0 0.0
        %535 = vmatpush2.msra.mxu0 0.0
        %536 = vmatprep.subr.mxu0 0.0
        %537 = vmatpush2.msra.mxu0 0.0
        %538 = vmatprep.subr.mxu0 0.0
        %539 = vmatpush2.msra.mxu0 0.0
        %540 = vmatprep.subr.mxu0 0.0
        %541 = vmatpush2.msra.mxu0 0.0
        %542 = vmatprep.subr.mxu0 0.0
        %543 = vmatpush2.msra.mxu0 0.0
        %544 = vmatprep.subr.mxu0 0.0
        %545 = vmatpush2.msra.mxu0 0.0
        %546 = vmatprep.subr.mxu0 0.0
        %547 = vmatpush2.msra.mxu0 0.0
        %548 = vmatprep.subr.mxu0 0.0
        %549 = vmatpush2.msra.mxu0 0.0
        %550 = vmatprep.subr.mxu0 0.0
        %551 = vmatpush2.msra.mxu0 0.0
        %552 = vmatprep.subr.mxu0 0.0
        %553 = vmatpush2.msra.mxu0 0.0
        %554 = vmatprep.subr.mxu0 0.0
        %555 = vmatpush2.msra.mxu0 0.0
        %556 = vmatprep.mubr.f32.mxu0 0.0
        %557 = vmatmul.mubr.f32.gmra.mxu0 %v342
        %v558 = vpop.f32.mrf.mxu0
        %v559 = vadd.f32 %v338, %v558
        %v560 = vpop.f32.mrf.mxu0
        %561 = vmatprep.mubr.f32.mxu0 0.0
        %562 = vmatmul.mubr.f32.gmra.mxu0 %v345
        %v563 = vpop.f32.mrf.mxu0
        %v564 = vadd.f32 %v338, %v563
        %v565 = vpop.f32.mrf.mxu0
        %566 = vmatprep.mubr.f32.mxu0 0.0
        %567 = vmatmul.mubr.f32.gmra.mxu0 %v348
        %v568 = vpop.f32.mrf.mxu0
        %v569 = vadd.f32 %v338, %v568
        %v570 = vpop.f32.mrf.mxu0
        %571 = vmatprep.mubr.f32.mxu0 0.0
        %572 = vmatmul.mubr.f32.gmra.mxu0 %v351
        %v573 = vpop.f32.mrf.mxu0
        %v574 = vadd.f32 %v338, %v573
        %v575 = vpop.f32.mrf.mxu0
        %576 = vmatprep.mubr.f32.mxu0 0.0
        %577 = vmatmul.mubr.f32.gmra.mxu0 %v354
        %v578 = vpop.f32.mrf.mxu0
        %v579 = vadd.f32 %v338, %v578
        %v580 = vpop.f32.mrf.mxu0
        %581 = vmatprep.mubr.f32.mxu0 0.0
        %582 = vmatmul.mubr.f32.gmra.mxu0 %v357
        %v583 = vpop.f32.mrf.mxu0
        %v584 = vadd.f32 %v338, %v583
        %v585 = vpop.f32.mrf.mxu0
        %586 = vmatprep.mubr.f32.mxu0 0.0
        %587 = vmatmul.mubr.f32.gmra.mxu0 %v360
        %v588 = vpop.f32.mrf.mxu0
        %v589 = vadd.f32 %v338, %v588
        %v590 = vpop.f32.mrf.mxu0
        %591 = vmatprep.mubr.f32.mxu0 0.0
        %592 = vmatmul.mubr.f32.gmra.mxu0 %v363
        %v593 = vpop.f32.mrf.mxu0
        %v594 = vadd.f32 %v338, %v593
        %v595 = vpop.f32.mrf.mxu0
        %596 = vmatprep.mubr.f32.mxu0 0.0
        %597 = vmatmul.mubr.f32.gmra.mxu0 %v366
        %v598 = vpop.f32.mrf.mxu0
        %v599 = vadd.f32 %v338, %v598
        %v600 = vpop.f32.mrf.mxu0
        %601 = vmatprep.mubr.f32.mxu0 0.0
        %602 = vmatmul.mubr.f32.gmra.mxu0 %v369
        %v603 = vpop.f32.mrf.mxu0
        %v604 = vadd.f32 %v338, %v603
        %v605 = vpop.f32.mrf.mxu0
        %606 = vmatprep.mubr.f32.mxu0 0.0
        %607 = vmatmul.mubr.f32.gmra.mxu0 %v372
        %v608 = vpop.f32.mrf.mxu0
        %v609 = vadd.f32 %v338, %v608
        %v610 = vpop.f32.mrf.mxu0
        %611 = vmatprep.mubr.f32.mxu0 0.0
        %612 = vmatmul.mubr.f32.gmra.mxu0 %v375
        %v613 = vpop.f32.mrf.mxu0
        %v614 = vadd.f32 %v338, %v613
        %v615 = vpop.f32.mrf.mxu0
        %616 = vmatprep.mubr.f32.mxu0 0.0
        %617 = vmatmul.mubr.f32.gmra.mxu0 %v378
        %v618 = vpop.f32.mrf.mxu0
        %v619 = vadd.f32 %v338, %v618
        %v620 = vpop.f32.mrf.mxu0
        %621 = vmatprep.mubr.f32.mxu0 0.0
        %622 = vmatmul.mubr.f32.gmra.mxu0 %v381
        %v623 = vpop.f32.mrf.mxu0
        %v624 = vadd.f32 %v338, %v623
        %v625 = vpop.f32.mrf.mxu0
        %626 = vmatprep.mubr.f32.mxu0 0.0
        %627 = vmatmul.mubr.f32.gmra.mxu0 %v384
        %v628 = vpop.f32.mrf.mxu0
        %v629 = vadd.f32 %v338, %v628
        %v630 = vpop.f32.mrf.mxu0
        %631 = vmatprep.mubr.f32.mxu0 0.0
        %632 = vmatmul.mubr.f32.gmra.mxu0 %v387
        %v633 = vpop.f32.mrf.mxu0
        %v634 = vadd.f32 %v338, %v633
        %v635 = vpop.f32.mrf.mxu0
        %636 = vmatprep.mubr.f32.mxu0 0.0
        %637 = vmatmul.mubr.f32.gmra.mxu0 %v390
        %v638 = vpop.f32.mrf.mxu0
        %v639 = vadd.f32 %v338, %v638
        %v640 = vpop.f32.mrf.mxu0
        %641 = vmatprep.mubr.f32.mxu0 0.0
        %642 = vmatmul.mubr.f32.gmra.mxu0 %v393
        %v643 = vpop.f32.mrf.mxu0
        %v644 = vadd.f32 %v338, %v643
        %v645 = vpop.f32.mrf.mxu0
        %646 = vmatprep.mubr.f32.mxu0 0.0
        %647 = vmatmul.mubr.f32.gmra.mxu0 %v396
        %v648 = vpop.f32.mrf.mxu0
        %v649 = vadd.f32 %v338, %v648
        %v650 = vpop.f32.mrf.mxu0
        %651 = vmatprep.mubr.f32.mxu0 0.0
        %652 = vmatmul.mubr.f32.gmra.mxu0 %v399
        %v653 = vpop.f32.mrf.mxu0
        %v654 = vadd.f32 %v338, %v653
        %v655 = vpop.f32.mrf.mxu0
        %656 = vmatprep.mubr.f32.mxu0 0.0
        %657 = vmatmul.mubr.f32.gmra.mxu0 %v402
        %v658 = vpop.f32.mrf.mxu0
        %v659 = vadd.f32 %v338, %v658
        %v660 = vpop.f32.mrf.mxu0
        %661 = vmatprep.mubr.f32.mxu0 0.0
        %662 = vmatmul.mubr.f32.gmra.mxu0 %v405
        %v663 = vpop.f32.mrf.mxu0
        %v664 = vadd.f32 %v338, %v663
        %v665 = vpop.f32.mrf.mxu0
        %666 = vmatprep.mubr.f32.mxu0 0.0
        %667 = vmatmul.mubr.f32.gmra.mxu0 %v408
        %v668 = vpop.f32.mrf.mxu0
        %v669 = vadd.f32 %v338, %v668
        %v670 = vpop.f32.mrf.mxu0
        %671 = vmatprep.mubr.f32.mxu0 0.0
        %672 = vmatmul.mubr.f32.gmra.mxu0 %v411
        %v673 = vpop.f32.mrf.mxu0
        %v674 = vadd.f32 %v338, %v673
        %v675 = vpop.f32.mrf.mxu0
        %676 = vmatprep.mubr.f32.mxu0 0.0
        %677 = vmatmul.mubr.f32.gmra.mxu0 %v414
        %v678 = vpop.f32.mrf.mxu0
        %v679 = vadd.f32 %v338, %v678
        %v680 = vpop.f32.mrf.mxu0
        %681 = vmatprep.mubr.f32.mxu0 0.0
        %682 = vmatmul.mubr.f32.gmra.mxu0 %v417
        %v683 = vpop.f32.mrf.mxu0
        %v684 = vadd.f32 %v338, %v683
        %v685 = vpop.f32.mrf.mxu0
        %686 = vmatprep.mubr.f32.mxu0 0.0
        %687 = vmatmul.mubr.f32.gmra.mxu0 %v420
        %v688 = vpop.f32.mrf.mxu0
        %v689 = vadd.f32 %v338, %v688
        %v690 = vpop.f32.mrf.mxu0
        %691 = vmatprep.mubr.f32.mxu0 0.0
        %692 = vmatmul.mubr.f32.gmra.mxu0 %v423
        %v693 = vpop.f32.mrf.mxu0
        %v694 = vadd.f32 %v338, %v693
        %v695 = vpop.f32.mrf.mxu0
        %696 = vmatprep.mubr.f32.mxu0 0.0
        %697 = vmatmul.mubr.f32.gmra.mxu0 %v426
        %v698 = vpop.f32.mrf.mxu0
        %v699 = vadd.f32 %v338, %v698
        %v700 = vpop.f32.mrf.mxu0
        %701 = vmatprep.mubr.f32.mxu0 0.0
        %702 = vmatmul.mubr.f32.gmra.mxu0 %v429
        %v703 = vpop.f32.mrf.mxu0
        %v704 = vadd.f32 %v338, %v703
        %v705 = vpop.f32.mrf.mxu0
        %706 = vmatprep.mubr.f32.mxu0 0.0
        %707 = vmatmul.mubr.f32.gmra.mxu0 %v432
        %v708 = vpop.f32.mrf.mxu0
        %v709 = vadd.f32 %v338, %v708
        %v710 = vpop.f32.mrf.mxu0
        %711 = vmatprep.mubr.f32.mxu0 0.0
        %712 = vmatmul.mubr.f32.gmra.mxu0 %v435
        %v713 = vpop.f32.mrf.mxu0
        %v714 = vadd.f32 %v338, %v713
        %v715 = vpop.f32.mrf.mxu0
        %716 = vmatprep.mubr.f32.mxu0 0.0
        %717 = vmatmul.mubr.f32.gmra.mxu0 %v438
        %v718 = vpop.f32.mrf.mxu0
        %v719 = vadd.f32 %v338, %v718
        %v720 = vpop.f32.mrf.mxu0
        %721 = vmatprep.mubr.f32.mxu0 0.0
        %722 = vmatmul.mubr.f32.gmra.mxu0 %v441
        %v723 = vpop.f32.mrf.mxu0
        %v724 = vadd.f32 %v338, %v723
        %v725 = vpop.f32.mrf.mxu0
        %726 = vmatprep.mubr.f32.mxu0 0.0
        %727 = vmatmul.mubr.f32.gmra.mxu0 %v444
        %v728 = vpop.f32.mrf.mxu0
        %v729 = vadd.f32 %v338, %v728
        %v730 = vpop.f32.mrf.mxu0
        %731 = vmatprep.mubr.f32.mxu0 0.0
        %732 = vmatmul.mubr.f32.gmra.mxu0 %v447
        %v733 = vpop.f32.mrf.mxu0
        %v734 = vadd.f32 %v338, %v733
        %v735 = vpop.f32.mrf.mxu0
        %736 = vmatprep.mubr.f32.mxu0 0.0
        %737 = vmatmul.mubr.f32.gmra.mxu0 %v450
        %v738 = vpop.f32.mrf.mxu0
        %v739 = vadd.f32 %v338, %v738
        %v740 = vpop.f32.mrf.mxu0
        %741 = vmatprep.mubr.f32.mxu0 0.0
        %742 = vmatmul.mubr.f32.gmra.mxu0 %v453
        %v743 = vpop.f32.mrf.mxu0
        %v744 = vadd.f32 %v338, %v743
        %v745 = vpop.f32.mrf.mxu0
        %746 = vmatprep.mubr.f32.mxu0 0.0
        %747 = vmatmul.mubr.f32.gmra.mxu0 %v456
        %v748 = vpop.f32.mrf.mxu0
        %v749 = vadd.f32 %v338, %v748
        %v750 = vpop.f32.mrf.mxu0
        %751 = vmatprep.mubr.f32.mxu0 0.0
        %752 = vmatmul.mubr.f32.gmra.mxu0 %v459
        %v753 = vpop.f32.mrf.mxu0
        %v754 = vadd.f32 %v338, %v753
        %v755 = vpop.f32.mrf.mxu0
        %756 = vmatprep.mubr.f32.mxu0 0.0
        %757 = vmatmul.mubr.f32.gmra.mxu0 %v462
        %v758 = vpop.f32.mrf.mxu0
        %v759 = vadd.f32 %v338, %v758
        %v760 = vpop.f32.mrf.mxu0
        %761 = vmatprep.mubr.f32.mxu0 0.0
        %762 = vmatmul.mubr.f32.gmra.mxu0 %v465
        %v763 = vpop.f32.mrf.mxu0
        %v764 = vadd.f32 %v338, %v763
        %v765 = vpop.f32.mrf.mxu0
        %766 = vmatprep.mubr.f32.mxu0 0.0
        %767 = vmatmul.mubr.f32.gmra.mxu0 %v468
        %v768 = vpop.f32.mrf.mxu0
        %v769 = vadd.f32 %v338, %v768
        %v770 = vpop.f32.mrf.mxu0
        %771 = vmatprep.mubr.f32.mxu0 0.0
        %772 = vmatmul.mubr.f32.gmra.mxu0 %v471
        %v773 = vpop.f32.mrf.mxu0
        %v774 = vadd.f32 %v338, %v773
        %v775 = vpop.f32.mrf.mxu0
        %776 = vmatprep.mubr.f32.mxu0 0.0
        %777 = vmatmul.mubr.f32.gmra.mxu0 %v474
        %v778 = vpop.f32.mrf.mxu0
        %v779 = vadd.f32 %v338, %v778
        %v780 = vpop.f32.mrf.mxu0
        %781 = vmatprep.mubr.f32.mxu0 0.0
        %782 = vmatmul.mubr.f32.gmra.mxu0 %v477
        %v783 = vpop.f32.mrf.mxu0
        %v784 = vadd.f32 %v338, %v783
        %v785 = vpop.f32.mrf.mxu0
        %786 = vmatprep.mubr.f32.mxu0 0.0
        %787 = vmatmul.mubr.f32.gmra.mxu0 %v480
        %v788 = vpop.f32.mrf.mxu0
        %v789 = vadd.f32 %v338, %v788
        %v790 = vpop.f32.mrf.mxu0
        %791 = vmatprep.mubr.f32.mxu0 0.0
        %792 = vmatmul.mubr.f32.gmra.mxu0 %v483
        %v793 = vpop.f32.mrf.mxu0
        %v794 = vadd.f32 %v338, %v793
        %v795 = vpop.f32.mrf.mxu0
        %796 = vmatprep.mubr.f32.mxu0 0.0
        %797 = vmatmul.mubr.f32.gmra.mxu0 %v486
        %v798 = vpop.f32.mrf.mxu0
        %v799 = vadd.f32 %v338, %v798
        %v800 = vpop.f32.mrf.mxu0
        %801 = vdwg.mxu0
        %v802 = vmax.f32 %v559, 0.0
        %v803 = vmax.f32 %v564, 0.0
        %v804 = vmax.f32 %v569, 0.0
        %v805 = vmax.f32 %v574, 0.0
        %v806 = vmax.f32 %v579, 0.0
        %v807 = vmax.f32 %v584, 0.0
        %v808 = vmax.f32 %v589, 0.0
        %v809 = vmax.f32 %v594, 0.0
        %v810 = vmax.f32 %v599, 0.0
        %v811 = vmax.f32 %v604, 0.0
        %v812 = vmax.f32 %v609, 0.0
        %v813 = vmax.f32 %v614, 0.0
        %v814 = vmax.f32 %v619, 0.0
        %v815 = vmax.f32 %v624, 0.0
        %v816 = vmax.f32 %v629, 0.0
        %v817 = vmax.f32 %v634, 0.0
        %v818 = vmax.f32 %v639, 0.0
        %v819 = vmax.f32 %v644, 0.0
        %v820 = vmax.f32 %v649, 0.0
        %v821 = vmax.f32 %v654, 0.0
        %v822 = vmax.f32 %v659, 0.0
        %v823 = vmax.f32 %v664, 0.0
        %v824 = vmax.f32 %v669, 0.0
        %v825 = vmax.f32 %v674, 0.0
        %v826 = vmax.f32 %v679, 0.0
        %v827 = vmax.f32 %v684, 0.0
        %v828 = vmax.f32 %v689, 0.0
        %v829 = vmax.f32 %v694, 0.0
        %v830 = vmax.f32 %v699, 0.0
        %v831 = vmax.f32 %v704, 0.0
        %v832 = vmax.f32 %v709, 0.0
        %v833 = vmax.f32 %v714, 0.0
        %v834 = vmax.f32 %v719, 0.0
        %v835 = vmax.f32 %v724, 0.0
        %v836 = vmax.f32 %v729, 0.0
        %v837 = vmax.f32 %v734, 0.0
        %v838 = vmax.f32 %v739, 0.0
        %v839 = vmax.f32 %v744, 0.0
        %v840 = vmax.f32 %v749, 0.0
        %v841 = vmax.f32 %v754, 0.0
        %v842 = vmax.f32 %v759, 0.0
        %v843 = vmax.f32 %v764, 0.0
        %v844 = vmax.f32 %v769, 0.0
        %v845 = vmax.f32 %v774, 0.0
        %v846 = vmax.f32 %v779, 0.0
        %v847 = vmax.f32 %v784, 0.0
        %v848 = vmax.f32 %v789, 0.0
        %v849 = vmax.f32 %v794, 0.0
        %v850 = vmax.f32 %v799, 0.0
        %vm851 = vcmask 523264
        %852 = vst.msk [vmem:[#allocation2] sm:$0xff] %vm851, %v802
        %853 = vst.msk [vmem:[#allocation2 + $0x8] sm:$0xff] %vm851, %v803
        %854 = vst.msk [vmem:[#allocation2 + $0x10] sm:$0xff] %vm851, %v804
        %855 = vst.msk [vmem:[#allocation2 + $0x18] sm:$0xff] %vm851, %v805
        %856 = vst.msk [vmem:[#allocation2 + $0x20] sm:$0xff] %vm851, %v806
        %857 = vst.msk [vmem:[#allocation2 + $0x28] sm:$0xff] %vm851, %v807
        %858 = vst.msk [vmem:[#allocation2 + $0x30] sm:$0xff] %vm851, %v808
        %859 = vst.msk [vmem:[#allocation2 + $0x38] sm:$0xff] %vm851, %v809
        %860 = vst.msk [vmem:[#allocation2 + $0x40] sm:$0xff] %vm851, %v810
        %861 = vst.msk [vmem:[#allocation2 + $0x48] sm:$0xff] %vm851, %v811
        %862 = vst.msk [vmem:[#allocation2 + $0x50] sm:$0xff] %vm851, %v812
        %863 = vst.msk [vmem:[#allocation2 + $0x58] sm:$0xff] %vm851, %v813
        %864 = vst.msk [vmem:[#allocation2 + $0x60] sm:$0xff] %vm851, %v814
        %865 = vst.msk [vmem:[#allocation2 + $0x68] sm:$0xff] %vm851, %v815
        %866 = vst.msk [vmem:[#allocation2 + $0x70] sm:$0xff] %vm851, %v816
        %867 = vst.msk [vmem:[#allocation2 + $0x78] sm:$0xff] %vm851, %v817
        %868 = vst.msk [vmem:[#allocation2 + $0x80] sm:$0xff] %vm851, %v818
        %869 = vst.msk [vmem:[#allocation2 + $0x88] sm:$0xff] %vm851, %v819
        %870 = vst.msk [vmem:[#allocation2 + $0x90] sm:$0xff] %vm851, %v820
        %871 = vst.msk [vmem:[#allocation2 + $0x98] sm:$0xff] %vm851, %v821
        %872 = vst.msk [vmem:[#allocation2 + $0xa0] sm:$0xff] %vm851, %v822
        %873 = vst.msk [vmem:[#allocation2 + $0xa8] sm:$0xff] %vm851, %v823
        %874 = vst.msk [vmem:[#allocation2 + $0xb0] sm:$0xff] %vm851, %v824
        %875 = vst.msk [vmem:[#allocation2 + $0xb8] sm:$0xff] %vm851, %v825
        %876 = vst.msk [vmem:[#allocation2 + $0xc0] sm:$0xff] %vm851, %v826
        %877 = vst.msk [vmem:[#allocation2 + $0xc8] sm:$0xff] %vm851, %v827
        %878 = vst.msk [vmem:[#allocation2 + $0xd0] sm:$0xff] %vm851, %v828
        %879 = vst.msk [vmem:[#allocation2 + $0xd8] sm:$0xff] %vm851, %v829
        %880 = vst.msk [vmem:[#allocation2 + $0xe0] sm:$0xff] %vm851, %v830
        %881 = vst.msk [vmem:[#allocation2 + $0xe8] sm:$0xff] %vm851, %v831
        %882 = vst.msk [vmem:[#allocation2 + $0xf0] sm:$0xff] %vm851, %v832
        %883 = vst.msk [vmem:[#allocation2 + $0xf8] sm:$0xff] %vm851, %v833
        %884 = vst.msk [vmem:[#allocation2 + $0x100] sm:$0xff] %vm851, %v834
        %885 = vst.msk [vmem:[#allocation2 + $0x108] sm:$0xff] %vm851, %v835
        %886 = vst.msk [vmem:[#allocation2 + $0x110] sm:$0xff] %vm851, %v836
        %887 = vst.msk [vmem:[#allocation2 + $0x118] sm:$0xff] %vm851, %v837
        %888 = vst.msk [vmem:[#allocation2 + $0x120] sm:$0xff] %vm851, %v838
        %889 = vst.msk [vmem:[#allocation2 + $0x128] sm:$0xff] %vm851, %v839
        %890 = vst.msk [vmem:[#allocation2 + $0x130] sm:$0xff] %vm851, %v840
        %891 = vst.msk [vmem:[#allocation2 + $0x138] sm:$0xff] %vm851, %v841
        %892 = vst.msk [vmem:[#allocation2 + $0x140] sm:$0xff] %vm851, %v842
        %893 = vst.msk [vmem:[#allocation2 + $0x148] sm:$0xff] %vm851, %v843
        %894 = vst.msk [vmem:[#allocation2 + $0x150] sm:$0xff] %vm851, %v844
        %895 = vst.msk [vmem:[#allocation2 + $0x158] sm:$0xff] %vm851, %v845
        %896 = vst.msk [vmem:[#allocation2 + $0x160] sm:$0xff] %vm851, %v846
        %897 = vst.msk [vmem:[#allocation2 + $0x168] sm:$0xff] %vm851, %v847
        %898 = vst.msk [vmem:[#allocation2 + $0x170] sm:$0xff] %vm851, %v848
        %899 = vst.msk [vmem:[#allocation2 + $0x178] sm:$0xff] %vm851, %v849
        %900 = vst.msk [vmem:[#allocation2 + $0x180] sm:$0xff] %vm851, %v850
        %v901 = vld [vmem:[#allocation2] sm:$0xff]
        %v902 = vld [vmem:[#allocation2 + $0x8] sm:$0xff]
        %v903 = vld [vmem:[#allocation2 + $0x10] sm:$0xff]
        %v904 = vld [vmem:[#allocation2 + $0x18] sm:$0xff]
        %v905 = vld [vmem:[#allocation2 + $0x20] sm:$0xff]
        %v906 = vld [vmem:[#allocation2 + $0x28] sm:$0xff]
        %v907 = vld [vmem:[#allocation2 + $0x30] sm:$0xff]
        %v908 = vld [vmem:[#allocation2 + $0x38] sm:$0xff]
        %v909 = vld [vmem:[#allocation2 + $0x40] sm:$0xff]
        %v910 = vld [vmem:[#allocation2 + $0x48] sm:$0xff]
        %v911 = vld [vmem:[#allocation2 + $0x50] sm:$0xff]
        %v912 = vld [vmem:[#allocation2 + $0x58] sm:$0xff]
        %v913 = vld [vmem:[#allocation2 + $0x60] sm:$0xff]
        %v914 = vld [vmem:[#allocation2 + $0x68] sm:$0xff]
        %v915 = vld [vmem:[#allocation2 + $0x70] sm:$0xff]
        %v916 = vld [vmem:[#allocation2 + $0x78] sm:$0xff]
        %v917 = vld [vmem:[#allocation2 + $0x80] sm:$0xff]
        %v918 = vld [vmem:[#allocation2 + $0x88] sm:$0xff]
        %v919 = vld [vmem:[#allocation2 + $0x90] sm:$0xff]
        %v920 = vld [vmem:[#allocation2 + $0x98] sm:$0xff]
        %v921 = vld [vmem:[#allocation2 + $0xa0] sm:$0xff]
        %v922 = vld [vmem:[#allocation2 + $0xa8] sm:$0xff]
        %v923 = vld [vmem:[#allocation2 + $0xb0] sm:$0xff]
        %v924 = vld [vmem:[#allocation2 + $0xb8] sm:$0xff]
        %v925 = vld [vmem:[#allocation2 + $0xc0] sm:$0xff]
        %v926 = vld [vmem:[#allocation2 + $0xc8] sm:$0xff]
        %v927 = vld [vmem:[#allocation2 + $0xd0] sm:$0xff]
        %v928 = vld [vmem:[#allocation2 + $0xd8] sm:$0xff]
        %v929 = vld [vmem:[#allocation2 + $0xe0] sm:$0xff]
        %v930 = vld [vmem:[#allocation2 + $0xe8] sm:$0xff]
        %v931 = vld [vmem:[#allocation2 + $0xf0] sm:$0xff]
        %v932 = vld [vmem:[#allocation2 + $0xf8] sm:$0xff]
        %v933 = vld [vmem:[#allocation2 + $0x100] sm:$0xff]
        %v934 = vld [vmem:[#allocation2 + $0x108] sm:$0xff]
        %v935 = vld [vmem:[#allocation2 + $0x110] sm:$0xff]
        %v936 = vld [vmem:[#allocation2 + $0x118] sm:$0xff]
        %v937 = vld [vmem:[#allocation2 + $0x120] sm:$0xff]
        %v938 = vld [vmem:[#allocation2 + $0x128] sm:$0xff]
        %v939 = vld [vmem:[#allocation2 + $0x130] sm:$0xff]
        %v940 = vld [vmem:[#allocation2 + $0x138] sm:$0xff]
        %v941 = vld [vmem:[#allocation2 + $0x140] sm:$0xff]
        %vm942 = vcmask 130048
        %943 = vst.msk [vmem:[#allocation3 + $0x80] sm:$0xff] %vm942, %v901
        %944 = vst.msk [vmem:[#allocation3 + $0x90] sm:$0xff] %vm942, %v902
        %945 = vst.msk [vmem:[#allocation3 + $0xa0] sm:$0xff] %vm942, %v903
        %946 = vst.msk [vmem:[#allocation3 + $0xb0] sm:$0xff] %vm942, %v904
        %947 = vst.msk [vmem:[#allocation3 + $0xc0] sm:$0xff] %vm942, %v905
        %948 = vst.msk [vmem:[#allocation3 + $0xd0] sm:$0xff] %vm942, %v906
        %949 = vst.msk [vmem:[#allocation3 + $0xe0] sm:$0xff] %vm942, %v907
        %950 = vst.msk [vmem:[#allocation3 + $0xf0] sm:$0xff] %vm942, %v908
        %951 = vst.msk [vmem:[#allocation3 + $0x100] sm:$0xff] %vm942, %v909
        %952 = vst.msk [vmem:[#allocation3 + $0x110] sm:$0xff] %vm942, %v910
        %953 = vst.msk [vmem:[#allocation3 + $0x120] sm:$0xff] %vm942, %v911
        %954 = vst.msk [vmem:[#allocation3 + $0x130] sm:$0xff] %vm942, %v912
        %955 = vst.msk [vmem:[#allocation3 + $0x140] sm:$0xff] %vm942, %v913
        %956 = vst.msk [vmem:[#allocation3 + $0x150] sm:$0xff] %vm942, %v914
        %957 = vst.msk [vmem:[#allocation3 + $0x160] sm:$0xff] %vm942, %v915
        %958 = vst.msk [vmem:[#allocation3 + $0x170] sm:$0xff] %vm942, %v916
        %959 = vst.msk [vmem:[#allocation3 + $0x180] sm:$0xff] %vm942, %v917
        %960 = vst.msk [vmem:[#allocation3 + $0x190] sm:$0xff] %vm942, %v918
        %961 = vst.msk [vmem:[#allocation3 + $0x1a0] sm:$0xff] %vm942, %v919
        %962 = vst.msk [vmem:[#allocation3 + $0x1b0] sm:$0xff] %vm942, %v920
        %963 = vst.msk [vmem:[#allocation3 + $0x1c0] sm:$0xff] %vm942, %v921
        %964 = vst.msk [vmem:[#allocation3 + $0x1d0] sm:$0xff] %vm942, %v922
        %965 = vst.msk [vmem:[#allocation3 + $0x1e0] sm:$0xff] %vm942, %v923
        %966 = vst.msk [vmem:[#allocation3 + $0x1f0] sm:$0xff] %vm942, %v924
        %967 = vst.msk [vmem:[#allocation3 + $0x200] sm:$0xff] %vm942, %v925
        %968 = vst.msk [vmem:[#allocation3 + $0x210] sm:$0xff] %vm942, %v926
        %969 = vst.msk [vmem:[#allocation3 + $0x220] sm:$0xff] %vm942, %v927
        %970 = vst.msk [vmem:[#allocation3 + $0x230] sm:$0xff] %vm942, %v928
        %971 = vst.msk [vmem:[#allocation3 + $0x240] sm:$0xff] %vm942, %v929
        %972 = vst.msk [vmem:[#allocation3 + $0x250] sm:$0xff] %vm942, %v930
        %973 = vst.msk [vmem:[#allocation3 + $0x260] sm:$0xff] %vm942, %v931
        %974 = vst.msk [vmem:[#allocation3 + $0x270] sm:$0xff] %vm942, %v932
        %975 = vst.msk [vmem:[#allocation3 + $0x280] sm:$0xff] %vm942, %v933
        %976 = vst.msk [vmem:[#allocation3 + $0x290] sm:$0xff] %vm942, %v934
        %977 = vst.msk [vmem:[#allocation3 + $0x2a0] sm:$0xff] %vm942, %v935
        %978 = vst.msk [vmem:[#allocation3 + $0x2b0] sm:$0xff] %vm942, %v936
        %979 = vst.msk [vmem:[#allocation3 + $0x2c0] sm:$0xff] %vm942, %v937
        %980 = vst.msk [vmem:[#allocation3 + $0x2d0] sm:$0xff] %vm942, %v938
        %981 = vst.msk [vmem:[#allocation3 + $0x2e0] sm:$0xff] %vm942, %v939
        %982 = vst.msk [vmem:[#allocation3 + $0x2f0] sm:$0xff] %vm942, %v940
        %983 = vst.msk [vmem:[#allocation3 + $0x300] sm:$0xff] %vm942, %v941
        %984 = vst.msk [vmem:[#allocation3] sm:$0xff] %vm942, 0.0
        %985 = vst.msk [vmem:[#allocation3 + $0x10] sm:$0xff] %vm942, 0.0
        %986 = vst.msk [vmem:[#allocation3 + $0x20] sm:$0xff] %vm942, 0.0
        %987 = vst.msk [vmem:[#allocation3 + $0x30] sm:$0xff] %vm942, 0.0
        %988 = vst.msk [vmem:[#allocation3 + $0x40] sm:$0xff] %vm942, 0.0
        %989 = vst.msk [vmem:[#allocation3 + $0x50] sm:$0xff] %vm942, 0.0
        %990 = vst.msk [vmem:[#allocation3 + $0x60] sm:$0xff] %vm942, 0.0
        %991 = vst.msk [vmem:[#allocation3 + $0x70] sm:$0xff] %vm942, 0.0
        %992 = vst.msk [vmem:[#allocation3 + $0xe0] sm:$0xff] %vm942, 0.0
        %993 = vst.msk [vmem:[#allocation3 + $0x150] sm:$0xff] %vm942, 0.0
        %994 = vst.msk [vmem:[#allocation3 + $0x1c0] sm:$0xff] %vm942, 0.0
        %995 = vst.msk [vmem:[#allocation3 + $0x230] sm:$0xff] %vm942, 0.0
        %996 = vst.msk [vmem:[#allocation3 + $0x2a0] sm:$0xff] %vm942, 0.0
        %v997 = vld [vmem:[#allocation2] sm:$0xff]
        %v998 = vld [vmem:[#allocation2 + $0x8] sm:$0xff]
        %v999 = vld [vmem:[#allocation2 + $0x10] sm:$0xff]
        %v1000 = vld [vmem:[#allocation2 + $0x18] sm:$0xff]
        %v1001 = vld [vmem:[#allocation2 + $0x20] sm:$0xff]
        %v1002 = vld [vmem:[#allocation2 + $0x28] sm:$0xff]
        %v1003 = vld [vmem:[#allocation2 + $0x30] sm:$0xff]
        %v1004 = vld [vmem:[#allocation2 + $0x38] sm:$0xff]
        %v1005 = vld [vmem:[#allocation2 + $0x40] sm:$0xff]
        %v1006 = vld [vmem:[#allocation2 + $0x48] sm:$0xff]
        %v1007 = vld [vmem:[#allocation2 + $0x50] sm:$0xff]
        %v1008 = vld [vmem:[#allocation2 + $0x58] sm:$0xff]
        %v1009 = vld [vmem:[#allocation2 + $0x60] sm:$0xff]
        %v1010 = vld [vmem:[#allocation2 + $0x68] sm:$0xff]
        %v1011 = vld [vmem:[#allocation2 + $0x70] sm:$0xff]
        %v1012 = vld [vmem:[#allocation2 + $0x78] sm:$0xff]
        %v1013 = vld [vmem:[#allocation2 + $0x80] sm:$0xff]
        %v1014 = vld [vmem:[#allocation2 + $0x88] sm:$0xff]
        %v1015 = vld [vmem:[#allocation2 + $0x90] sm:$0xff]
        %v1016 = vld [vmem:[#allocation2 + $0x98] sm:$0xff]
        %v1017 = vld [vmem:[#allocation2 + $0xa0] sm:$0xff]
        %v1018 = vld [vmem:[#allocation2 + $0xa8] sm:$0xff]
        %v1019 = vld [vmem:[#allocation2 + $0xb0] sm:$0xff]
        %v1020 = vld [vmem:[#allocation2 + $0xb8] sm:$0xff]
        %v1021 = vld [vmem:[#allocation2 + $0xc0] sm:$0xff]
        %v1022 = vld [vmem:[#allocation2 + $0xc8] sm:$0xff]
        %v1023 = vld [vmem:[#allocation2 + $0xd0] sm:$0xff]
        %v1024 = vld [vmem:[#allocation2 + $0xd8] sm:$0xff]
        %v1025 = vld [vmem:[#allocation2 + $0xe0] sm:$0xff]
        %v1026 = vld [vmem:[#allocation2 + $0xe8] sm:$0xff]
        %v1027 = vld [vmem:[#allocation2 + $0xf0] sm:$0xff]
        %v1028 = vld [vmem:[#allocation2 + $0xf8] sm:$0xff]
        %v1029 = vld [vmem:[#allocation2 + $0x100] sm:$0xff]
        %v1030 = vld [vmem:[#allocation2 + $0x108] sm:$0xff]
        %v1031 = vld [vmem:[#allocation2 + $0x110] sm:$0xff]
        %v1032 = vld [vmem:[#allocation2 + $0x118] sm:$0xff]
        %v1033 = vld [vmem:[#allocation2 + $0x120] sm:$0xff]
        %v1034 = vld [vmem:[#allocation2 + $0x128] sm:$0xff]
        %v1035 = vld [vmem:[#allocation2 + $0x130] sm:$0xff]
        %v1036 = vld [vmem:[#allocation2 + $0x138] sm:$0xff]
        %v1037 = vld [vmem:[#allocation2 + $0x140] sm:$0xff]
        %v1038 = vld [vmem:[#allocation2 + $0x148] sm:$0xff]
        %vm1039 = vcmask 261248
        %1040 = vst.msk [vmem:[#allocation3 + $0x70] sm:$0xff] %vm1039, %v997
        %1041 = vst.msk [vmem:[#allocation3 + $0x80] sm:$0xff] %vm1039, %v998
        %1042 = vst.msk [vmem:[#allocation3 + $0x90] sm:$0xff] %vm1039, %v999
        %1043 = vst.msk [vmem:[#allocation3 + $0xa0] sm:$0xff] %vm1039, %v1000
        %1044 = vst.msk [vmem:[#allocation3 + $0xb0] sm:$0xff] %vm1039, %v1001
        %1045 = vst.msk [vmem:[#allocation3 + $0xc0] sm:$0xff] %vm1039, %v1002
        %1046 = vst.msk [vmem:[#allocation3 + $0xd0] sm:$0xff] %vm1039, %v1003
        %1047 = vst.msk [vmem:[#allocation3 + $0xe0] sm:$0xff] %vm1039, %v1004
        %1048 = vst.msk [vmem:[#allocation3 + $0xf0] sm:$0xff] %vm1039, %v1005
        %1049 = vst.msk [vmem:[#allocation3 + $0x100] sm:$0xff] %vm1039, %v1006
        %1050 = vst.msk [vmem:[#allocation3 + $0x110] sm:$0xff] %vm1039, %v1007
        %1051 = vst.msk [vmem:[#allocation3 + $0x120] sm:$0xff] %vm1039, %v1008
        %1052 = vst.msk [vmem:[#allocation3 + $0x130] sm:$0xff] %vm1039, %v1009
        %1053 = vst.msk [vmem:[#allocation3 + $0x140] sm:$0xff] %vm1039, %v1010
        %1054 = vst.msk [vmem:[#allocation3 + $0x150] sm:$0xff] %vm1039, %v1011
        %1055 = vst.msk [vmem:[#allocation3 + $0x160] sm:$0xff] %vm1039, %v1012
        %1056 = vst.msk [vmem:[#allocation3 + $0x170] sm:$0xff] %vm1039, %v1013
        %1057 = vst.msk [vmem:[#allocation3 + $0x180] sm:$0xff] %vm1039, %v1014
        %1058 = vst.msk [vmem:[#allocation3 + $0x190] sm:$0xff] %vm1039, %v1015
        %1059 = vst.msk [vmem:[#allocation3 + $0x1a0] sm:$0xff] %vm1039, %v1016
        %1060 = vst.msk [vmem:[#allocation3 + $0x1b0] sm:$0xff] %vm1039, %v1017
        %1061 = vst.msk [vmem:[#allocation3 + $0x1c0] sm:$0xff] %vm1039, %v1018
        %1062 = vst.msk [vmem:[#allocation3 + $0x1d0] sm:$0xff] %vm1039, %v1019
        %1063 = vst.msk [vmem:[#allocation3 + $0x1e0] sm:$0xff] %vm1039, %v1020
        %1064 = vst.msk [vmem:[#allocation3 + $0x1f0] sm:$0xff] %vm1039, %v1021
        %1065 = vst.msk [vmem:[#allocation3 + $0x200] sm:$0xff] %vm1039, %v1022
        %1066 = vst.msk [vmem:[#allocation3 + $0x210] sm:$0xff] %vm1039, %v1023
        %1067 = vst.msk [vmem:[#allocation3 + $0x220] sm:$0xff] %vm1039, %v1024
        %1068 = vst.msk [vmem:[#allocation3 + $0x230] sm:$0xff] %vm1039, %v1025
        %1069 = vst.msk [vmem:[#allocation3 + $0x240] sm:$0xff] %vm1039, %v1026
        %1070 = vst.msk [vmem:[#allocation3 + $0x250] sm:$0xff] %vm1039, %v1027
        %1071 = vst.msk [vmem:[#allocation3 + $0x260] sm:$0xff] %vm1039, %v1028
        %1072 = vst.msk [vmem:[#allocation3 + $0x270] sm:$0xff] %vm1039, %v1029
        %1073 = vst.msk [vmem:[#allocation3 + $0x280] sm:$0xff] %vm1039, %v1030
        %1074 = vst.msk [vmem:[#allocation3 + $0x290] sm:$0xff] %vm1039, %v1031
        %1075 = vst.msk [vmem:[#allocation3 + $0x2a0] sm:$0xff] %vm1039, %v1032
        %1076 = vst.msk [vmem:[#allocation3 + $0x2b0] sm:$0xff] %vm1039, %v1033
        %1077 = vst.msk [vmem:[#allocation3 + $0x2c0] sm:$0xff] %vm1039, %v1034
        %1078 = vst.msk [vmem:[#allocation3 + $0x2d0] sm:$0xff] %vm1039, %v1035
        %1079 = vst.msk [vmem:[#allocation3 + $0x2e0] sm:$0xff] %vm1039, %v1036
        %1080 = vst.msk [vmem:[#allocation3 + $0x2f0] sm:$0xff] %vm1039, %v1037
        %1081 = vst.msk [vmem:[#allocation3 + $0x300] sm:$0xff] %vm1039, %v1038
        %1082 = vst.msk [vmem:[#allocation3] sm:$0xff] %vm1039, 0.0
        %1083 = vst.msk [vmem:[#allocation3 + $0x10] sm:$0xff] %vm1039, 0.0
        %1084 = vst.msk [vmem:[#allocation3 + $0x20] sm:$0xff] %vm1039, 0.0
        %1085 = vst.msk [vmem:[#allocation3 + $0x30] sm:$0xff] %vm1039, 0.0
        %1086 = vst.msk [vmem:[#allocation3 + $0x40] sm:$0xff] %vm1039, 0.0
        %1087 = vst.msk [vmem:[#allocation3 + $0x50] sm:$0xff] %vm1039, 0.0
        %1088 = vst.msk [vmem:[#allocation3 + $0x60] sm:$0xff] %vm1039, 0.0
        %v1089 = vld [vmem:[#allocation2] sm:$0xff]
        %v1090 = vld [vmem:[#allocation2 + $0x8] sm:$0xff]
        %v1091 = vld [vmem:[#allocation2 + $0x10] sm:$0xff]
        %v1092 = vld [vmem:[#allocation2 + $0x18] sm:$0xff]
        %v1093 = vld [vmem:[#allocation2 + $0x20] sm:$0xff]
        %v1094 = vld [vmem:[#allocation2 + $0x28] sm:$0xff]
        %v1095 = vld [vmem:[#allocation2 + $0x30] sm:$0xff]
        %v1096 = vld [vmem:[#allocation2 + $0x38] sm:$0xff]
        %v1097 = vld [vmem:[#allocation2 + $0x40] sm:$0xff]
        %v1098 = vld [vmem:[#allocation2 + $0x48] sm:$0xff]
        %v1099 = vld [vmem:[#allocation2 + $0x50] sm:$0xff]
        %v1100 = vld [vmem:[#allocation2 + $0x58] sm:$0xff]
        %v1101 = vld [vmem:[#allocation2 + $0x60] sm:$0xff]
        %v1102 = vld [vmem:[#allocation2 + $0x68] sm:$0xff]
        %v1103 = vld [vmem:[#allocation2 + $0x70] sm:$0xff]
        %v1104 = vld [vmem:[#allocation2 + $0x78] sm:$0xff]
        %v1105 = vld [vmem:[#allocation2 + $0x80] sm:$0xff]
        %v1106 = vld [vmem:[#allocation2 + $0x88] sm:$0xff]
        %v1107 = vld [vmem:[#allocation2 + $0x90] sm:$0xff]
        %v1108 = vld [vmem:[#allocation2 + $0x98] sm:$0xff]
        %v1109 = vld [vmem:[#allocation2 + $0xa0] sm:$0xff]
        %v1110 = vld [vmem:[#allocation2 + $0xa8] sm:$0xff]
        %v1111 = vld [vmem:[#allocation2 + $0xb0] sm:$0xff]
        %v1112 = vld [vmem:[#allocation2 + $0xb8] sm:$0xff]
        %v1113 = vld [vmem:[#allocation2 + $0xc0] sm:$0xff]
        %v1114 = vld [vmem:[#allocation2 + $0xc8] sm:$0xff]
        %v1115 = vld [vmem:[#allocation2 + $0xd0] sm:$0xff]
        %v1116 = vld [vmem:[#allocation2 + $0xd8] sm:$0xff]
        %v1117 = vld [vmem:[#allocation2 + $0xe0] sm:$0xff]
        %v1118 = vld [vmem:[#allocation2 + $0xe8] sm:$0xff]
        %v1119 = vld [vmem:[#allocation2 + $0xf0] sm:$0xff]
        %v1120 = vld [vmem:[#allocation2 + $0xf8] sm:$0xff]
        %v1121 = vld [vmem:[#allocation2 + $0x100] sm:$0xff]
        %v1122 = vld [vmem:[#allocation2 + $0x108] sm:$0xff]
        %v1123 = vld [vmem:[#allocation2 + $0x110] sm:$0xff]
        %v1124 = vld [vmem:[#allocation2 + $0x118] sm:$0xff]
        %v1125 = vld [vmem:[#allocation2 + $0x120] sm:$0xff]
        %v1126 = vld [vmem:[#allocation2 + $0x128] sm:$0xff]
        %v1127 = vld [vmem:[#allocation2 + $0x130] sm:$0xff]
        %v1128 = vld [vmem:[#allocation2 + $0x138] sm:$0xff]
        %v1129 = vld [vmem:[#allocation2 + $0x140] sm:$0xff]
        %v1130 = vld [vmem:[#allocation2 + $0x148] sm:$0xff]
        %1173 = vrot.lane.b32.xlu0 %v1089, 32
        %v1174 = vpop.permute.xlu0 %1173
        %1175 = vrot.lane.b32.xlu0 %v1090, 32
        %v1176 = vpop.permute.xlu0 %1175
        %1177 = vrot.lane.b32.xlu0 %v1091, 32
        %v1178 = vpop.permute.xlu0 %1177
        %1179 = vrot.lane.b32.xlu0 %v1092, 32
        %v1180 = vpop.permute.xlu0 %1179
        %1181 = vrot.lane.b32.xlu0 %v1093, 32
        %v1182 = vpop.permute.xlu0 %1181
        %1183 = vrot.lane.b32.xlu0 %v1094, 32
        %v1184 = vpop.permute.xlu0 %1183
        %1185 = vrot.lane.b32.xlu0 %v1095, 32
        %v1186 = vpop.permute.xlu0 %1185
        %1187 = vrot.lane.b32.xlu0 %v1096, 32
        %v1188 = vpop.permute.xlu0 %1187
        %1189 = vrot.lane.b32.xlu0 %v1097, 32
        %v1190 = vpop.permute.xlu0 %1189
        %1191 = vrot.lane.b32.xlu0 %v1098, 32
        %v1192 = vpop.permute.xlu0 %1191
        %1193 = vrot.lane.b32.xlu0 %v1099, 32
        %v1194 = vpop.permute.xlu0 %1193
        %1195 = vrot.lane.b32.xlu0 %v1100, 32
        %v1196 = vpop.permute.xlu0 %1195
        %1197 = vrot.lane.b32.xlu0 %v1101, 32
        %v1198 = vpop.permute.xlu0 %1197
        %1199 = vrot.lane.b32.xlu0 %v1102, 32
        %v1200 = vpop.permute.xlu0 %1199
        %1201 = vrot.lane.b32.xlu0 %v1103, 32
        %v1202 = vpop.permute.xlu0 %1201
        %1203 = vrot.lane.b32.xlu0 %v1104, 32
        %v1204 = vpop.permute.xlu0 %1203
        %1205 = vrot.lane.b32.xlu0 %v1105, 32
        %v1206 = vpop.permute.xlu0 %1205
        %1207 = vrot.lane.b32.xlu0 %v1106, 32
        %v1208 = vpop.permute.xlu0 %1207
        %1209 = vrot.lane.b32.xlu0 %v1107, 32
        %v1210 = vpop.permute.xlu0 %1209
        %1211 = vrot.lane.b32.xlu0 %v1108, 32
        %v1212 = vpop.permute.xlu0 %1211
        %1213 = vrot.lane.b32.xlu0 %v1109, 32
        %v1214 = vpop.permute.xlu0 %1213
        %1215 = vrot.lane.b32.xlu0 %v1110, 32
        %v1216 = vpop.permute.xlu0 %1215
        %1217 = vrot.lane.b32.xlu0 %v1111, 32
        %v1218 = vpop.permute.xlu0 %1217
        %1219 = vrot.lane.b32.xlu0 %v1112, 32
        %v1220 = vpop.permute.xlu0 %1219
        %1221 = vrot.lane.b32.xlu0 %v1113, 32
        %v1222 = vpop.permute.xlu0 %1221
        %1223 = vrot.lane.b32.xlu0 %v1114, 32
        %v1224 = vpop.permute.xlu0 %1223
        %1225 = vrot.lane.b32.xlu0 %v1115, 32
        %v1226 = vpop.permute.xlu0 %1225
        %1227 = vrot.lane.b32.xlu0 %v1116, 32
        %v1228 = vpop.permute.xlu0 %1227
        %1229 = vrot.lane.b32.xlu0 %v1117, 32
        %v1230 = vpop.permute.xlu0 %1229
        %1231 = vrot.lane.b32.xlu0 %v1118, 32
        %v1232 = vpop.permute.xlu0 %1231
        %1233 = vrot.lane.b32.xlu0 %v1119, 32
        %v1234 = vpop.permute.xlu0 %1233
        %1235 = vrot.lane.b32.xlu0 %v1120, 32
        %v1236 = vpop.permute.xlu0 %1235
        %1237 = vrot.lane.b32.xlu0 %v1121, 32
        %v1238 = vpop.permute.xlu0 %1237
        %1239 = vrot.lane.b32.xlu0 %v1122, 32
        %v1240 = vpop.permute.xlu0 %1239
        %1241 = vrot.lane.b32.xlu0 %v1123, 32
        %v1242 = vpop.permute.xlu0 %1241
        %1243 = vrot.lane.b32.xlu0 %v1124, 32
        %v1244 = vpop.permute.xlu0 %1243
        %1245 = vrot.lane.b32.xlu0 %v1125, 32
        %v1246 = vpop.permute.xlu0 %1245
        %1247 = vrot.lane.b32.xlu0 %v1126, 32
        %v1248 = vpop.permute.xlu0 %1247
        %1249 = vrot.lane.b32.xlu0 %v1127, 32
        %v1250 = vpop.permute.xlu0 %1249
        %1251 = vrot.lane.b32.xlu0 %v1128, 32
        %v1252 = vpop.permute.xlu0 %1251
        %1253 = vrot.lane.b32.xlu0 %v1129, 32
        %v1254 = vpop.permute.xlu0 %1253
        %1255 = vrot.lane.b32.xlu0 %v1130, 32
        %v1256 = vpop.permute.xlu0 %1255
        %vm1299 = vcmask 392448
        %1300 = vst.msk [vmem:[#allocation3 + $0x70] sm:$0xff] %vm1299, %v1174
        %1301 = vst.msk [vmem:[#allocation3 + $0x80] sm:$0xff] %vm1299, %v1176
        %1302 = vst.msk [vmem:[#allocation3 + $0x90] sm:$0xff] %vm1299, %v1178
        %1303 = vst.msk [vmem:[#allocation3 + $0xa0] sm:$0xff] %vm1299, %v1180
        %1304 = vst.msk [vmem:[#allocation3 + $0xb0] sm:$0xff] %vm1299, %v1182
        %1305 = vst.msk [vmem:[#allocation3 + $0xc0] sm:$0xff] %vm1299, %v1184
        %1306 = vst.msk [vmem:[#allocation3 + $0xd0] sm:$0xff] %vm1299, %v1186
        %1307 = vst.msk [vmem:[#allocation3 + $0xe0] sm:$0xff] %vm1299, %v1188
        %1308 = vst.msk [vmem:[#allocation3 + $0xf0] sm:$0xff] %vm1299, %v1190
        %1309 = vst.msk [vmem:[#allocation3 + $0x100] sm:$0xff] %vm1299, %v1192
        %1310 = vst.msk [vmem:[#allocation3 + $0x110] sm:$0xff] %vm1299, %v1194
        %1311 = vst.msk [vmem:[#allocation3 + $0x120] sm:$0xff] %vm1299, %v1196
        %1312 = vst.msk [vmem:[#allocation3 + $0x130] sm:$0xff] %vm1299, %v1198
        %1313 = vst.msk [vmem:[#allocation3 + $0x140] sm:$0xff] %vm1299, %v1200
        %1314 = vst.msk [vmem:[#allocation3 + $0x150] sm:$0xff] %vm1299, %v1202
        %1315 = vst.msk [vmem:[#allocation3 + $0x160] sm:$0xff] %vm1299, %v1204
        %1316 = vst.msk [vmem:[#allocation3 + $0x170] sm:$0xff] %vm1299, %v1206
        %1317 = vst.msk [vmem:[#allocation3 + $0x180] sm:$0xff] %vm1299, %v1208
        %1318 = vst.msk [vmem:[#allocation3 + $0x190] sm:$0xff] %vm1299, %v1210
        %1319 = vst.msk [vmem:[#allocation3 + $0x1a0] sm:$0xff] %vm1299, %v1212
        %1320 = vst.msk [vmem:[#allocation3 + $0x1b0] sm:$0xff] %vm1299, %v1214
        %1321 = vst.msk [vmem:[#allocation3 + $0x1c0] sm:$0xff] %vm1299, %v1216
        %1322 = vst.msk [vmem:[#allocation3 + $0x1d0] sm:$0xff] %vm1299, %v1218
        %1323 = vst.msk [vmem:[#allocation3 + $0x1e0] sm:$0xff] %vm1299, %v1220
        %1324 = vst.msk [vmem:[#allocation3 + $0x1f0] sm:$0xff] %vm1299, %v1222
        %1325 = vst.msk [vmem:[#allocation3 + $0x200] sm:$0xff] %vm1299, %v1224
        %1326 = vst.msk [vmem:[#allocation3 + $0x210] sm:$0xff] %vm1299, %v1226
        %1327 = vst.msk [vmem:[#allocation3 + $0x220] sm:$0xff] %vm1299, %v1228
        %1328 = vst.msk [vmem:[#allocation3 + $0x230] sm:$0xff] %vm1299, %v1230
        %1329 = vst.msk [vmem:[#allocation3 + $0x240] sm:$0xff] %vm1299, %v1232
        %1330 = vst.msk [vmem:[#allocation3 + $0x250] sm:$0xff] %vm1299, %v1234
        %1331 = vst.msk [vmem:[#allocation3 + $0x260] sm:$0xff] %vm1299, %v1236
        %1332 = vst.msk [vmem:[#allocation3 + $0x270] sm:$0xff] %vm1299, %v1238
        %1333 = vst.msk [vmem:[#allocation3 + $0x280] sm:$0xff] %vm1299, %v1240
        %1334 = vst.msk [vmem:[#allocation3 + $0x290] sm:$0xff] %vm1299, %v1242
        %1335 = vst.msk [vmem:[#allocation3 + $0x2a0] sm:$0xff] %vm1299, %v1244
        %1336 = vst.msk [vmem:[#allocation3 + $0x2b0] sm:$0xff] %vm1299, %v1246
        %1337 = vst.msk [vmem:[#allocation3 + $0x2c0] sm:$0xff] %vm1299, %v1248
        %1338 = vst.msk [vmem:[#allocation3 + $0x2d0] sm:$0xff] %vm1299, %v1250
        %1339 = vst.msk [vmem:[#allocation3 + $0x2e0] sm:$0xff] %vm1299, %v1252
        %1340 = vst.msk [vmem:[#allocation3 + $0x2f0] sm:$0xff] %vm1299, %v1254
        %1341 = vst.msk [vmem:[#allocation3 + $0x300] sm:$0xff] %vm1299, %v1256
        %1342 = vst.msk [vmem:[#allocation3] sm:$0xff] %vm1299, 0.0
        %1343 = vst.msk [vmem:[#allocation3 + $0x10] sm:$0xff] %vm1299, 0.0
        %1344 = vst.msk [vmem:[#allocation3 + $0x20] sm:$0xff] %vm1299, 0.0
        %1345 = vst.msk [vmem:[#allocation3 + $0x30] sm:$0xff] %vm1299, 0.0
        %1346 = vst.msk [vmem:[#allocation3 + $0x40] sm:$0xff] %vm1299, 0.0
        %1347 = vst.msk [vmem:[#allocation3 + $0x50] sm:$0xff] %vm1299, 0.0
        %1348 = vst.msk [vmem:[#allocation3 + $0x60] sm:$0xff] %vm1299, 0.0
        %v1349 = vld [vmem:[#allocation2] sm:$0xff]
        %v1350 = vld [vmem:[#allocation2 + $0x8] sm:$0xff]
        %v1351 = vld [vmem:[#allocation2 + $0x10] sm:$0xff]
        %v1352 = vld [vmem:[#allocation2 + $0x18] sm:$0xff]
        %v1353 = vld [vmem:[#allocation2 + $0x20] sm:$0xff]
        %v1354 = vld [vmem:[#allocation2 + $0x28] sm:$0xff]
        %v1355 = vld [vmem:[#allocation2 + $0x30] sm:$0xff]
        %v1356 = vld [vmem:[#allocation2 + $0x38] sm:$0xff]
        %v1357 = vld [vmem:[#allocation2 + $0x40] sm:$0xff]
        %v1358 = vld [vmem:[#allocation2 + $0x48] sm:$0xff]
        %v1359 = vld [vmem:[#allocation2 + $0x50] sm:$0xff]
        %v1360 = vld [vmem:[#allocation2 + $0x58] sm:$0xff]
        %v1361 = vld [vmem:[#allocation2 + $0x60] sm:$0xff]
        %v1362 = vld [vmem:[#allocation2 + $0x68] sm:$0xff]
        %v1363 = vld [vmem:[#allocation2 + $0x70] sm:$0xff]
        %v1364 = vld [vmem:[#allocation2 + $0x78] sm:$0xff]
        %v1365 = vld [vmem:[#allocation2 + $0x80] sm:$0xff]
        %v1366 = vld [vmem:[#allocation2 + $0x88] sm:$0xff]
        %v1367 = vld [vmem:[#allocation2 + $0x90] sm:$0xff]
        %v1368 = vld [vmem:[#allocation2 + $0x98] sm:$0xff]
        %v1369 = vld [vmem:[#allocation2 + $0xa0] sm:$0xff]
        %v1370 = vld [vmem:[#allocation2 + $0xa8] sm:$0xff]
        %v1371 = vld [vmem:[#allocation2 + $0xb0] sm:$0xff]
        %v1372 = vld [vmem:[#allocation2 + $0xb8] sm:$0xff]
        %v1373 = vld [vmem:[#allocation2 + $0xc0] sm:$0xff]
        %v1374 = vld [vmem:[#allocation2 + $0xc8] sm:$0xff]
        %v1375 = vld [vmem:[#allocation2 + $0xd0] sm:$0xff]
        %v1376 = vld [vmem:[#allocation2 + $0xd8] sm:$0xff]
        %v1377 = vld [vmem:[#allocation2 + $0xe0] sm:$0xff]
        %v1378 = vld [vmem:[#allocation2 + $0xe8] sm:$0xff]
        %v1379 = vld [vmem:[#allocation2 + $0xf0] sm:$0xff]
        %v1380 = vld [vmem:[#allocation2 + $0xf8] sm:$0xff]
        %v1381 = vld [vmem:[#allocation2 + $0x100] sm:$0xff]
        %v1382 = vld [vmem:[#allocation2 + $0x108] sm:$0xff]
        %v1383 = vld [vmem:[#allocation2 + $0x110] sm:$0xff]
        %v1384 = vld [vmem:[#allocation2 + $0x118] sm:$0xff]
        %v1385 = vld [vmem:[#allocation2 + $0x120] sm:$0xff]
        %v1386 = vld [vmem:[#allocation2 + $0x128] sm:$0xff]
        %v1387 = vld [vmem:[#allocation2 + $0x130] sm:$0xff]
        %v1388 = vld [vmem:[#allocation2 + $0x138] sm:$0xff]
        %v1389 = vld [vmem:[#allocation2 + $0x140] sm:$0xff]
        %v1390 = vld [vmem:[#allocation2 + $0x148] sm:$0xff]
        %v1391 = vld [vmem:[#allocation2 + $0x150] sm:$0xff]
        %v1392 = vld [vmem:[#allocation2 + $0x158] sm:$0xff]
        %v1393 = vld [vmem:[#allocation2 + $0x160] sm:$0xff]
        %v1394 = vld [vmem:[#allocation2 + $0x168] sm:$0xff]
        %v1395 = vld [vmem:[#allocation2 + $0x170] sm:$0xff]
        %v1396 = vld [vmem:[#allocation2 + $0x178] sm:$0xff]
        %1445 = vrot.lane.b32.xlu0 %v1349, 16
        %v1446 = vpop.permute.xlu0 %1445
        %1447 = vrot.lane.b32.xlu0 %v1350, 16
        %v1448 = vpop.permute.xlu0 %1447
        %1449 = vrot.lane.b32.xlu0 %v1351, 16
        %v1450 = vpop.permute.xlu0 %1449
        %1451 = vrot.lane.b32.xlu0 %v1352, 16
        %v1452 = vpop.permute.xlu0 %1451
        %1453 = vrot.lane.b32.xlu0 %v1353, 16
        %v1454 = vpop.permute.xlu0 %1453
        %1455 = vrot.lane.b32.xlu0 %v1354, 16
        %v1456 = vpop.permute.xlu0 %1455
        %1457 = vrot.lane.b32.xlu0 %v1355, 16
        %v1458 = vpop.permute.xlu0 %1457
        %1459 = vrot.lane.b32.xlu0 %v1356, 16
        %v1460 = vpop.permute.xlu0 %1459
        %1461 = vrot.lane.b32.xlu0 %v1357, 16
        %v1462 = vpop.permute.xlu0 %1461
        %1463 = vrot.lane.b32.xlu0 %v1358, 16
        %v1464 = vpop.permute.xlu0 %1463
        %1465 = vrot.lane.b32.xlu0 %v1359, 16
        %v1466 = vpop.permute.xlu0 %1465
        %1467 = vrot.lane.b32.xlu0 %v1360, 16
        %v1468 = vpop.permute.xlu0 %1467
        %1469 = vrot.lane.b32.xlu0 %v1361, 16
        %v1470 = vpop.permute.xlu0 %1469
        %1471 = vrot.lane.b32.xlu0 %v1362, 16
        %v1472 = vpop.permute.xlu0 %1471
        %1473 = vrot.lane.b32.xlu0 %v1363, 16
        %v1474 = vpop.permute.xlu0 %1473
        %1475 = vrot.lane.b32.xlu0 %v1364, 16
        %v1476 = vpop.permute.xlu0 %1475
        %1477 = vrot.lane.b32.xlu0 %v1365, 16
        %v1478 = vpop.permute.xlu0 %1477
        %1479 = vrot.lane.b32.xlu0 %v1366, 16
        %v1480 = vpop.permute.xlu0 %1479
        %1481 = vrot.lane.b32.xlu0 %v1367, 16
        %v1482 = vpop.permute.xlu0 %1481
        %1483 = vrot.lane.b32.xlu0 %v1368, 16
        %v1484 = vpop.permute.xlu0 %1483
        %1485 = vrot.lane.b32.xlu0 %v1369, 16
        %v1486 = vpop.permute.xlu0 %1485
        %1487 = vrot.lane.b32.xlu0 %v1370, 16
        %v1488 = vpop.permute.xlu0 %1487
        %1489 = vrot.lane.b32.xlu0 %v1371, 16
        %v1490 = vpop.permute.xlu0 %1489
        %1491 = vrot.lane.b32.xlu0 %v1372, 16
        %v1492 = vpop.permute.xlu0 %1491
        %1493 = vrot.lane.b32.xlu0 %v1373, 16
        %v1494 = vpop.permute.xlu0 %1493
        %1495 = vrot.lane.b32.xlu0 %v1374, 16
        %v1496 = vpop.permute.xlu0 %1495
        %1497 = vrot.lane.b32.xlu0 %v1375, 16
        %v1498 = vpop.permute.xlu0 %1497
        %1499 = vrot.lane.b32.xlu0 %v1376, 16
        %v1500 = vpop.permute.xlu0 %1499
        %1501 = vrot.lane.b32.xlu0 %v1377, 16
        %v1502 = vpop.permute.xlu0 %1501
        %1503 = vrot.lane.b32.xlu0 %v1378, 16
        %v1504 = vpop.permute.xlu0 %1503
        %1505 = vrot.lane.b32.xlu0 %v1379, 16
        %v1506 = vpop.permute.xlu0 %1505
        %1507 = vrot.lane.b32.xlu0 %v1380, 16
        %v1508 = vpop.permute.xlu0 %1507
        %1509 = vrot.lane.b32.xlu0 %v1381, 16
        %v1510 = vpop.permute.xlu0 %1509
        %1511 = vrot.lane.b32.xlu0 %v1382, 16
        %v1512 = vpop.permute.xlu0 %1511
        %1513 = vrot.lane.b32.xlu0 %v1383, 16
        %v1514 = vpop.permute.xlu0 %1513
        %1515 = vrot.lane.b32.xlu0 %v1384, 16
        %v1516 = vpop.permute.xlu0 %1515
        %1517 = vrot.lane.b32.xlu0 %v1385, 16
        %v1518 = vpop.permute.xlu0 %1517
        %1519 = vrot.lane.b32.xlu0 %v1386, 16
        %v1520 = vpop.permute.xlu0 %1519
        %1521 = vrot.lane.b32.xlu0 %v1387, 16
        %v1522 = vpop.permute.xlu0 %1521
        %1523 = vrot.lane.b32.xlu0 %v1388, 16
        %v1524 = vpop.permute.xlu0 %1523
        %1525 = vrot.lane.b32.xlu0 %v1389, 16
        %v1526 = vpop.permute.xlu0 %1525
        %1527 = vrot.lane.b32.xlu0 %v1390, 16
        %v1528 = vpop.permute.xlu0 %1527
        %1529 = vrot.lane.b32.xlu0 %v1391, 16
        %v1530 = vpop.permute.xlu0 %1529
        %1531 = vrot.lane.b32.xlu0 %v1392, 16
        %v1532 = vpop.permute.xlu0 %1531
        %1533 = vrot.lane.b32.xlu0 %v1393, 16
        %v1534 = vpop.permute.xlu0 %1533
        %1535 = vrot.lane.b32.xlu0 %v1394, 16
        %v1536 = vpop.permute.xlu0 %1535
        %1537 = vrot.lane.b32.xlu0 %v1395, 16
        %v1538 = vpop.permute.xlu0 %1537
        %1539 = vrot.lane.b32.xlu0 %v1396, 16
        %v1540 = vpop.permute.xlu0 %1539
        %vm1589 = vcmask 523648
        %1590 = vst.msk [vmem:[#allocation3 + $0x10] sm:$0xff] %vm1589, %v1446
        %1591 = vst.msk [vmem:[#allocation3 + $0x20] sm:$0xff] %vm1589, %v1448
        %1592 = vst.msk [vmem:[#allocation3 + $0x30] sm:$0xff] %vm1589, %v1450
        %1593 = vst.msk [vmem:[#allocation3 + $0x40] sm:$0xff] %vm1589, %v1452
        %1594 = vst.msk [vmem:[#allocation3 + $0x50] sm:$0xff] %vm1589, %v1454
        %1595 = vst.msk [vmem:[#allocation3 + $0x60] sm:$0xff] %vm1589, %v1456
        %1596 = vst.msk [vmem:[#allocation3 + $0x70] sm:$0xff] %vm1589, %v1458
        %1597 = vst.msk [vmem:[#allocation3 + $0x80] sm:$0xff] %vm1589, %v1460
        %1598 = vst.msk [vmem:[#allocation3 + $0x90] sm:$0xff] %vm1589, %v1462
        %1599 = vst.msk [vmem:[#allocation3 + $0xa0] sm:$0xff] %vm1589, %v1464
        %1600 = vst.msk [vmem:[#allocation3 + $0xb0] sm:$0xff] %vm1589, %v1466
        %1601 = vst.msk [vmem:[#allocation3 + $0xc0] sm:$0xff] %vm1589, %v1468
        %1602 = vst.msk [vmem:[#allocation3 + $0xd0] sm:$0xff] %vm1589, %v1470
        %1603 = vst.msk [vmem:[#allocation3 + $0xe0] sm:$0xff] %vm1589, %v1472
        %1604 = vst.msk [vmem:[#allocation3 + $0xf0] sm:$0xff] %vm1589, %v1474
        %1605 = vst.msk [vmem:[#allocation3 + $0x100] sm:$0xff] %vm1589, %v1476
        %1606 = vst.msk [vmem:[#allocation3 + $0x110] sm:$0xff] %vm1589, %v1478
        %1607 = vst.msk [vmem:[#allocation3 + $0x120] sm:$0xff] %vm1589, %v1480
        %1608 = vst.msk [vmem:[#allocation3 + $0x130] sm:$0xff] %vm1589, %v1482
        %1609 = vst.msk [vmem:[#allocation3 + $0x140] sm:$0xff] %vm1589, %v1484
        %1610 = vst.msk [vmem:[#allocation3 + $0x150] sm:$0xff] %vm1589, %v1486
        %1611 = vst.msk [vmem:[#allocation3 + $0x160] sm:$0xff] %vm1589, %v1488
        %1612 = vst.msk [vmem:[#allocation3 + $0x170] sm:$0xff] %vm1589, %v1490
        %1613 = vst.msk [vmem:[#allocation3 + $0x180] sm:$0xff] %vm1589, %v1492
        %1614 = vst.msk [vmem:[#allocation3 + $0x190] sm:$0xff] %vm1589, %v1494
        %1615 = vst.msk [vmem:[#allocation3 + $0x1a0] sm:$0xff] %vm1589, %v1496
        %1616 = vst.msk [vmem:[#allocation3 + $0x1b0] sm:$0xff] %vm1589, %v1498
        %1617 = vst.msk [vmem:[#allocation3 + $0x1c0] sm:$0xff] %vm1589, %v1500
        %1618 = vst.msk [vmem:[#allocation3 + $0x1d0] sm:$0xff] %vm1589, %v1502
        %1619 = vst.msk [vmem:[#allocation3 + $0x1e0] sm:$0xff] %vm1589, %v1504
        %1620 = vst.msk [vmem:[#allocation3 + $0x1f0] sm:$0xff] %vm1589, %v1506
        %1621 = vst.msk [vmem:[#allocation3 + $0x200] sm:$0xff] %vm1589, %v1508
        %1622 = vst.msk [vmem:[#allocation3 + $0x210] sm:$0xff] %vm1589, %v1510
        %1623 = vst.msk [vmem:[#allocation3 + $0x220] sm:$0xff] %vm1589, %v1512
        %1624 = vst.msk [vmem:[#allocation3 + $0x230] sm:$0xff] %vm1589, %v1514
        %1625 = vst.msk [vmem:[#allocation3 + $0x240] sm:$0xff] %vm1589, %v1516
        %1626 = vst.msk [vmem:[#allocation3 + $0x250] sm:$0xff] %vm1589, %v1518
        %1627 = vst.msk [vmem:[#allocation3 + $0x260] sm:$0xff] %vm1589, %v1520
        %1628 = vst.msk [vmem:[#allocation3 + $0x270] sm:$0xff] %vm1589, %v1522
        %1629 = vst.msk [vmem:[#allocation3 + $0x280] sm:$0xff] %vm1589, %v1524
        %1630 = vst.msk [vmem:[#allocation3 + $0x290] sm:$0xff] %vm1589, %v1526
        %1631 = vst.msk [vmem:[#allocation3 + $0x2a0] sm:$0xff] %vm1589, %v1528
        %1632 = vst.msk [vmem:[#allocation3 + $0x2b0] sm:$0xff] %vm1589, %v1530
        %1633 = vst.msk [vmem:[#allocation3 + $0x2c0] sm:$0xff] %vm1589, %v1532
        %1634 = vst.msk [vmem:[#allocation3 + $0x2d0] sm:$0xff] %vm1589, %v1534
        %1635 = vst.msk [vmem:[#allocation3 + $0x2e0] sm:$0xff] %vm1589, %v1536
        %1636 = vst.msk [vmem:[#allocation3 + $0x2f0] sm:$0xff] %vm1589, %v1538
        %1637 = vst.msk [vmem:[#allocation3 + $0x300] sm:$0xff] %vm1589, %v1540
        %1638 = vst.msk [vmem:[#allocation3] sm:$0xff] %vm1589, 0.0
        %1639 = vst.msk [vmem:[#allocation3 + $0x70] sm:$0xff] %vm1589, 0.0
        %1640 = vst.msk [vmem:[#allocation3 + $0xe0] sm:$0xff] %vm1589, 0.0
        %1641 = vst.msk [vmem:[#allocation3 + $0x150] sm:$0xff] %vm1589, 0.0
        %1642 = vst.msk [vmem:[#allocation3 + $0x1c0] sm:$0xff] %vm1589, 0.0
        %1643 = vst.msk [vmem:[#allocation3 + $0x230] sm:$0xff] %vm1589, 0.0
        %1644 = vst.msk [vmem:[#allocation3 + $0x2a0] sm:$0xff] %vm1589, 0.0
        %v1645 = vld [vmem:[#allocation2] sm:$0xff]
        %v1646 = vld [vmem:[#allocation2 + $0x8] sm:$0xff]
        %v1647 = vld [vmem:[#allocation2 + $0x10] sm:$0xff]
        %v1648 = vld [vmem:[#allocation2 + $0x18] sm:$0xff]
        %v1649 = vld [vmem:[#allocation2 + $0x20] sm:$0xff]
        %v1650 = vld [vmem:[#allocation2 + $0x28] sm:$0xff]
        %v1651 = vld [vmem:[#allocation2 + $0x30] sm:$0xff]
        %v1652 = vld [vmem:[#allocation2 + $0x38] sm:$0xff]
        %v1653 = vld [vmem:[#allocation2 + $0x40] sm:$0xff]
        %v1654 = vld [vmem:[#allocation2 + $0x48] sm:$0xff]
        %v1655 = vld [vmem:[#allocation2 + $0x50] sm:$0xff]
        %v1656 = vld [vmem:[#allocation2 + $0x58] sm:$0xff]
        %v1657 = vld [vmem:[#allocation2 + $0x60] sm:$0xff]
        %v1658 = vld [vmem:[#allocation2 + $0x68] sm:$0xff]
        %v1659 = vld [vmem:[#allocation2 + $0x70] sm:$0xff]
        %v1660 = vld [vmem:[#allocation2 + $0x78] sm:$0xff]
        %v1661 = vld [vmem:[#allocation2 + $0x80] sm:$0xff]
        %v1662 = vld [vmem:[#allocation2 + $0x88] sm:$0xff]
        %v1663 = vld [vmem:[#allocation2 + $0x90] sm:$0xff]
        %v1664 = vld [vmem:[#allocation2 + $0x98] sm:$0xff]
        %v1665 = vld [vmem:[#allocation2 + $0xa0] sm:$0xff]
        %v1666 = vld [vmem:[#allocation2 + $0xa8] sm:$0xff]
        %v1667 = vld [vmem:[#allocation2 + $0xb0] sm:$0xff]
        %v1668 = vld [vmem:[#allocation2 + $0xb8] sm:$0xff]
        %v1669 = vld [vmem:[#allocation2 + $0xc0] sm:$0xff]
        %v1670 = vld [vmem:[#allocation2 + $0xc8] sm:$0xff]
        %v1671 = vld [vmem:[#allocation2 + $0xd0] sm:$0xff]
        %v1672 = vld [vmem:[#allocation2 + $0xd8] sm:$0xff]
        %v1673 = vld [vmem:[#allocation2 + $0xe0] sm:$0xff]
        %v1674 = vld [vmem:[#allocation2 + $0xe8] sm:$0xff]
        %v1675 = vld [vmem:[#allocation2 + $0xf0] sm:$0xff]
        %v1676 = vld [vmem:[#allocation2 + $0xf8] sm:$0xff]
        %v1677 = vld [vmem:[#allocation2 + $0x100] sm:$0xff]
        %v1678 = vld [vmem:[#allocation2 + $0x108] sm:$0xff]
        %v1679 = vld [vmem:[#allocation2 + $0x110] sm:$0xff]
        %v1680 = vld [vmem:[#allocation2 + $0x118] sm:$0xff]
        %v1681 = vld [vmem:[#allocation2 + $0x120] sm:$0xff]
        %v1682 = vld [vmem:[#allocation2 + $0x128] sm:$0xff]
        %v1683 = vld [vmem:[#allocation2 + $0x130] sm:$0xff]
        %v1684 = vld [vmem:[#allocation2 + $0x138] sm:$0xff]
        %v1685 = vld [vmem:[#allocation2 + $0x140] sm:$0xff]
        %v1686 = vld [vmem:[#allocation2 + $0x148] sm:$0xff]
        %v1687 = vld [vmem:[#allocation2 + $0x150] sm:$0xff]
        %v1688 = vld [vmem:[#allocation2 + $0x158] sm:$0xff]
        %v1689 = vld [vmem:[#allocation2 + $0x160] sm:$0xff]
        %v1690 = vld [vmem:[#allocation2 + $0x168] sm:$0xff]
        %v1691 = vld [vmem:[#allocation2 + $0x170] sm:$0xff]
        %v1692 = vld [vmem:[#allocation2 + $0x178] sm:$0xff]
        %v1693 = vld [vmem:[#allocation2 + $0x180] sm:$0xff]
        %1743 = vrot.lane.b32.xlu0 %v1645, 16
        %v1744 = vpop.permute.xlu0 %1743
        %1745 = vrot.lane.b32.xlu0 %v1646, 16
        %v1746 = vpop.permute.xlu0 %1745
        %1747 = vrot.lane.b32.xlu0 %v1647, 16
        %v1748 = vpop.permute.xlu0 %1747
        %1749 = vrot.lane.b32.xlu0 %v1648, 16
        %v1750 = vpop.permute.xlu0 %1749
        %1751 = vrot.lane.b32.xlu0 %v1649, 16
        %v1752 = vpop.permute.xlu0 %1751
        %1753 = vrot.lane.b32.xlu0 %v1650, 16
        %v1754 = vpop.permute.xlu0 %1753
        %1755 = vrot.lane.b32.xlu0 %v1651, 16
        %v1756 = vpop.permute.xlu0 %1755
        %1757 = vrot.lane.b32.xlu0 %v1652, 16
        %v1758 = vpop.permute.xlu0 %1757
        %1759 = vrot.lane.b32.xlu0 %v1653, 16
        %v1760 = vpop.permute.xlu0 %1759
        %1761 = vrot.lane.b32.xlu0 %v1654, 16
        %v1762 = vpop.permute.xlu0 %1761
        %1763 = vrot.lane.b32.xlu0 %v1655, 16
        %v1764 = vpop.permute.xlu0 %1763
        %1765 = vrot.lane.b32.xlu0 %v1656, 16
        %v1766 = vpop.permute.xlu0 %1765
        %1767 = vrot.lane.b32.xlu0 %v1657, 16
        %v1768 = vpop.permute.xlu0 %1767
        %1769 = vrot.lane.b32.xlu0 %v1658, 16
        %v1770 = vpop.permute.xlu0 %1769
        %1771 = vrot.lane.b32.xlu0 %v1659, 16
        %v1772 = vpop.permute.xlu0 %1771
        %1773 = vrot.lane.b32.xlu0 %v1660, 16
        %v1774 = vpop.permute.xlu0 %1773
        %1775 = vrot.lane.b32.xlu0 %v1661, 16
        %v1776 = vpop.permute.xlu0 %1775
        %1777 = vrot.lane.b32.xlu0 %v1662, 16
        %v1778 = vpop.permute.xlu0 %1777
        %1779 = vrot.lane.b32.xlu0 %v1663, 16
        %v1780 = vpop.permute.xlu0 %1779
        %1781 = vrot.lane.b32.xlu0 %v1664, 16
        %v1782 = vpop.permute.xlu0 %1781
        %1783 = vrot.lane.b32.xlu0 %v1665, 16
        %v1784 = vpop.permute.xlu0 %1783
        %1785 = vrot.lane.b32.xlu0 %v1666, 16
        %v1786 = vpop.permute.xlu0 %1785
        %1787 = vrot.lane.b32.xlu0 %v1667, 16
        %v1788 = vpop.permute.xlu0 %1787
        %1789 = vrot.lane.b32.xlu0 %v1668, 16
        %v1790 = vpop.permute.xlu0 %1789
        %1791 = vrot.lane.b32.xlu0 %v1669, 16
        %v1792 = vpop.permute.xlu0 %1791
        %1793 = vrot.lane.b32.xlu0 %v1670, 16
        %v1794 = vpop.permute.xlu0 %1793
        %1795 = vrot.lane.b32.xlu0 %v1671, 16
        %v1796 = vpop.permute.xlu0 %1795
        %1797 = vrot.lane.b32.xlu0 %v1672, 16
        %v1798 = vpop.permute.xlu0 %1797
        %1799 = vrot.lane.b32.xlu0 %v1673, 16
        %v1800 = vpop.permute.xlu0 %1799
        %1801 = vrot.lane.b32.xlu0 %v1674, 16
        %v1802 = vpop.permute.xlu0 %1801
        %1803 = vrot.lane.b32.xlu0 %v1675, 16
        %v1804 = vpop.permute.xlu0 %1803
        %1805 = vrot.lane.b32.xlu0 %v1676, 16
        %v1806 = vpop.permute.xlu0 %1805
        %1807 = vrot.lane.b32.xlu0 %v1677, 16
        %v1808 = vpop.permute.xlu0 %1807
        %1809 = vrot.lane.b32.xlu0 %v1678, 16
        %v1810 = vpop.permute.xlu0 %1809
        %1811 = vrot.lane.b32.xlu0 %v1679, 16
        %v1812 = vpop.permute.xlu0 %1811
        %1813 = vrot.lane.b32.xlu0 %v1680, 16
        %v1814 = vpop.permute.xlu0 %1813
        %1815 = vrot.lane.b32.xlu0 %v1681, 16
        %v1816 = vpop.permute.xlu0 %1815
        %1817 = vrot.lane.b32.xlu0 %v1682, 16
        %v1818 = vpop.permute.xlu0 %1817
        %1819 = vrot.lane.b32.xlu0 %v1683, 16
        %v1820 = vpop.permute.xlu0 %1819
        %1821 = vrot.lane.b32.xlu0 %v1684, 16
        %v1822 = vpop.permute.xlu0 %1821
        %1823 = vrot.lane.b32.xlu0 %v1685, 16
        %v1824 = vpop.permute.xlu0 %1823
        %1825 = vrot.lane.b32.xlu0 %v1686, 16
        %v1826 = vpop.permute.xlu0 %1825
        %1827 = vrot.lane.b32.xlu0 %v1687, 16
        %v1828 = vpop.permute.xlu0 %1827
        %1829 = vrot.lane.b32.xlu0 %v1688, 16
        %v1830 = vpop.permute.xlu0 %1829
        %1831 = vrot.lane.b32.xlu0 %v1689, 16
        %v1832 = vpop.permute.xlu0 %1831
        %1833 = vrot.lane.b32.xlu0 %v1690, 16
        %v1834 = vpop.permute.xlu0 %1833
        %1835 = vrot.lane.b32.xlu0 %v1691, 16
        %v1836 = vpop.permute.xlu0 %1835
        %1837 = vrot.lane.b32.xlu0 %v1692, 16
        %v1838 = vpop.permute.xlu0 %1837
        %1839 = vrot.lane.b32.xlu0 %v1693, 16
        %v1840 = vpop.permute.xlu0 %1839
        %vm1890 = vcmask 654848
        %1891 = vst.msk [vmem:[#allocation3] sm:$0xff] %vm1890, %v1744
        %1892 = vst.msk [vmem:[#allocation3 + $0x10] sm:$0xff] %vm1890, %v1746
        %1893 = vst.msk [vmem:[#allocation3 + $0x20] sm:$0xff] %vm1890, %v1748
        %1894 = vst.msk [vmem:[#allocation3 + $0x30] sm:$0xff] %vm1890, %v1750
        %1895 = vst.msk [vmem:[#allocation3 + $0x40] sm:$0xff] %vm1890, %v1752
        %1896 = vst.msk [vmem:[#allocation3 + $0x50] sm:$0xff] %vm1890, %v1754
        %1897 = vst.msk [vmem:[#allocation3 + $0x60] sm:$0xff] %vm1890, %v1756
        %1898 = vst.msk [vmem:[#allocation3 + $0x70] sm:$0xff] %vm1890, %v1758
        %1899 = vst.msk [vmem:[#allocation3 + $0x80] sm:$0xff] %vm1890, %v1760
        %1900 = vst.msk [vmem:[#allocation3 + $0x90] sm:$0xff] %vm1890, %v1762
        %1901 = vst.msk [vmem:[#allocation3 + $0xa0] sm:$0xff] %vm1890, %v1764
        %1902 = vst.msk [vmem:[#allocation3 + $0xb0] sm:$0xff] %vm1890, %v1766
        %1903 = vst.msk [vmem:[#allocation3 + $0xc0] sm:$0xff] %vm1890, %v1768
        %1904 = vst.msk [vmem:[#allocation3 + $0xd0] sm:$0xff] %vm1890, %v1770
        %1905 = vst.msk [vmem:[#allocation3 + $0xe0] sm:$0xff] %vm1890, %v1772
        %1906 = vst.msk [vmem:[#allocation3 + $0xf0] sm:$0xff] %vm1890, %v1774
        %1907 = vst.msk [vmem:[#allocation3 + $0x100] sm:$0xff] %vm1890, %v1776
        %1908 = vst.msk [vmem:[#allocation3 + $0x110] sm:$0xff] %vm1890, %v1778
        %1909 = vst.msk [vmem:[#allocation3 + $0x120] sm:$0xff] %vm1890, %v1780
        %1910 = vst.msk [vmem:[#allocation3 + $0x130] sm:$0xff] %vm1890, %v1782
        %1911 = vst.msk [vmem:[#allocation3 + $0x140] sm:$0xff] %vm1890, %v1784
        %1912 = vst.msk [vmem:[#allocation3 + $0x150] sm:$0xff] %vm1890, %v1786
        %1913 = vst.msk [vmem:[#allocation3 + $0x160] sm:$0xff] %vm1890, %v1788
        %1914 = vst.msk [vmem:[#allocation3 + $0x170] sm:$0xff] %vm1890, %v1790
        %1915 = vst.msk [vmem:[#allocation3 + $0x180] sm:$0xff] %vm1890, %v1792
        %1916 = vst.msk [vmem:[#allocation3 + $0x190] sm:$0xff] %vm1890, %v1794
        %1917 = vst.msk [vmem:[#allocation3 + $0x1a0] sm:$0xff] %vm1890, %v1796
        %1918 = vst.msk [vmem:[#allocation3 + $0x1b0] sm:$0xff] %vm1890, %v1798
        %1919 = vst.msk [vmem:[#allocation3 + $0x1c0] sm:$0xff] %vm1890, %v1800
        %1920 = vst.msk [vmem:[#allocation3 + $0x1d0] sm:$0xff] %vm1890, %v1802
        %1921 = vst.msk [vmem:[#allocation3 + $0x1e0] sm:$0xff] %vm1890, %v1804
        %1922 = vst.msk [vmem:[#allocation3 + $0x1f0] sm:$0xff] %vm1890, %v1806
        %1923 = vst.msk [vmem:[#allocation3 + $0x200] sm:$0xff] %vm1890, %v1808
        %1924 = vst.msk [vmem:[#allocation3 + $0x210] sm:$0xff] %vm1890, %v1810
        %1925 = vst.msk [vmem:[#allocation3 + $0x220] sm:$0xff] %vm1890, %v1812
        %1926 = vst.msk [vmem:[#allocation3 + $0x230] sm:$0xff] %vm1890, %v1814
        %1927 = vst.msk [vmem:[#allocation3 + $0x240] sm:$0xff] %vm1890, %v1816
        %1928 = vst.msk [vmem:[#allocation3 + $0x250] sm:$0xff] %vm1890, %v1818
        %1929 = vst.msk [vmem:[#allocation3 + $0x260] sm:$0xff] %vm1890, %v1820
        %1930 = vst.msk [vmem:[#allocation3 + $0x270] sm:$0xff] %vm1890, %v1822
        %1931 = vst.msk [vmem:[#allocation3 + $0x280] sm:$0xff] %vm1890, %v1824
        %1932 = vst.msk [vmem:[#allocation3 + $0x290] sm:$0xff] %vm1890, %v1826
        %1933 = vst.msk [vmem:[#allocation3 + $0x2a0] sm:$0xff] %vm1890, %v1828
        %1934 = vst.msk [vmem:[#allocation3 + $0x2b0] sm:$0xff] %vm1890, %v1830
        %1935 = vst.msk [vmem:[#allocation3 + $0x2c0] sm:$0xff] %vm1890, %v1832
        %1936 = vst.msk [vmem:[#allocation3 + $0x2d0] sm:$0xff] %vm1890, %v1834
        %1937 = vst.msk [vmem:[#allocation3 + $0x2e0] sm:$0xff] %vm1890, %v1836
        %1938 = vst.msk [vmem:[#allocation3 + $0x2f0] sm:$0xff] %vm1890, %v1838
        %1939 = vst.msk [vmem:[#allocation3 + $0x300] sm:$0xff] %vm1890, %v1840
        %v1940 = vld [vmem:[#allocation2] sm:$0xff]
        %v1941 = vld [vmem:[#allocation2 + $0x8] sm:$0xff]
        %v1942 = vld [vmem:[#allocation2 + $0x10] sm:$0xff]
        %v1943 = vld [vmem:[#allocation2 + $0x18] sm:$0xff]
        %v1944 = vld [vmem:[#allocation2 + $0x20] sm:$0xff]
        %v1945 = vld [vmem:[#allocation2 + $0x28] sm:$0xff]
        %v1946 = vld [vmem:[#allocation2 + $0x30] sm:$0xff]
        %v1947 = vld [vmem:[#allocation2 + $0x38] sm:$0xff]
        %v1948 = vld [vmem:[#allocation2 + $0x40] sm:$0xff]
        %v1949 = vld [vmem:[#allocation2 + $0x48] sm:$0xff]
        %v1950 = vld [vmem:[#allocation2 + $0x50] sm:$0xff]
        %v1951 = vld [vmem:[#allocation2 + $0x58] sm:$0xff]
        %v1952 = vld [vmem:[#allocation2 + $0x60] sm:$0xff]
        %v1953 = vld [vmem:[#allocation2 + $0x68] sm:$0xff]
        %v1954 = vld [vmem:[#allocation2 + $0x70] sm:$0xff]
        %v1955 = vld [vmem:[#allocation2 + $0x78] sm:$0xff]
        %v1956 = vld [vmem:[#allocation2 + $0x80] sm:$0xff]
        %v1957 = vld [vmem:[#allocation2 + $0x88] sm:$0xff]
        %v1958 = vld [vmem:[#allocation2 + $0x90] sm:$0xff]
        %v1959 = vld [vmem:[#allocation2 + $0x98] sm:$0xff]
        %v1960 = vld [vmem:[#allocation2 + $0xa0] sm:$0xff]
        %v1961 = vld [vmem:[#allocation2 + $0xa8] sm:$0xff]
        %v1962 = vld [vmem:[#allocation2 + $0xb0] sm:$0xff]
        %v1963 = vld [vmem:[#allocation2 + $0xb8] sm:$0xff]
        %v1964 = vld [vmem:[#allocation2 + $0xc0] sm:$0xff]
        %v1965 = vld [vmem:[#allocation2 + $0xc8] sm:$0xff]
        %v1966 = vld [vmem:[#allocation2 + $0xd0] sm:$0xff]
        %v1967 = vld [vmem:[#allocation2 + $0xd8] sm:$0xff]
        %v1968 = vld [vmem:[#allocation2 + $0xe0] sm:$0xff]
        %v1969 = vld [vmem:[#allocation2 + $0xe8] sm:$0xff]
        %v1970 = vld [vmem:[#allocation2 + $0xf0] sm:$0xff]
        %v1971 = vld [vmem:[#allocation2 + $0xf8] sm:$0xff]
        %v1972 = vld [vmem:[#allocation2 + $0x100] sm:$0xff]
        %v1973 = vld [vmem:[#allocation2 + $0x108] sm:$0xff]
        %v1974 = vld [vmem:[#allocation2 + $0x110] sm:$0xff]
        %v1975 = vld [vmem:[#allocation2 + $0x118] sm:$0xff]
        %v1976 = vld [vmem:[#allocation2 + $0x120] sm:$0xff]
        %v1977 = vld [vmem:[#allocation2 + $0x128] sm:$0xff]
        %v1978 = vld [vmem:[#allocation2 + $0x130] sm:$0xff]
        %v1979 = vld [vmem:[#allocation2 + $0x138] sm:$0xff]
        %v1980 = vld [vmem:[#allocation2 + $0x140] sm:$0xff]
        %v1981 = vld [vmem:[#allocation2 + $0x148] sm:$0xff]
        %v1982 = vld [vmem:[#allocation2 + $0x150] sm:$0xff]
        %v1983 = vld [vmem:[#allocation2 + $0x158] sm:$0xff]
        %v1984 = vld [vmem:[#allocation2 + $0x160] sm:$0xff]
        %v1985 = vld [vmem:[#allocation2 + $0x168] sm:$0xff]
        %v1986 = vld [vmem:[#allocation2 + $0x170] sm:$0xff]
        %v1987 = vld [vmem:[#allocation2 + $0x178] sm:$0xff]
        %v1988 = vld [vmem:[#allocation2 + $0x180] sm:$0xff]
        %2038 = vrot.lane.b32.xlu0 %v1940, 48
        %v2039 = vpop.permute.xlu0 %2038
        %2040 = vrot.lane.b32.xlu0 %v1941, 48
        %v2041 = vpop.permute.xlu0 %2040
        %2042 = vrot.lane.b32.xlu0 %v1942, 48
        %v2043 = vpop.permute.xlu0 %2042
        %2044 = vrot.lane.b32.xlu0 %v1943, 48
        %v2045 = vpop.permute.xlu0 %2044
        %2046 = vrot.lane.b32.xlu0 %v1944, 48
        %v2047 = vpop.permute.xlu0 %2046
        %2048 = vrot.lane.b32.xlu0 %v1945, 48
        %v2049 = vpop.permute.xlu0 %2048
        %2050 = vrot.lane.b32.xlu0 %v1946, 48
        %v2051 = vpop.permute.xlu0 %2050
        %2052 = vrot.lane.b32.xlu0 %v1947, 48
        %v2053 = vpop.permute.xlu0 %2052
        %2054 = vrot.lane.b32.xlu0 %v1948, 48
        %v2055 = vpop.permute.xlu0 %2054
        %2056 = vrot.lane.b32.xlu0 %v1949, 48
        %v2057 = vpop.permute.xlu0 %2056
        %2058 = vrot.lane.b32.xlu0 %v1950, 48
        %v2059 = vpop.permute.xlu0 %2058
        %2060 = vrot.lane.b32.xlu0 %v1951, 48
        %v2061 = vpop.permute.xlu0 %2060
        %2062 = vrot.lane.b32.xlu0 %v1952, 48
        %v2063 = vpop.permute.xlu0 %2062
        %2064 = vrot.lane.b32.xlu0 %v1953, 48
        %v2065 = vpop.permute.xlu0 %2064
        %2066 = vrot.lane.b32.xlu0 %v1954, 48
        %v2067 = vpop.permute.xlu0 %2066
        %2068 = vrot.lane.b32.xlu0 %v1955, 48
        %v2069 = vpop.permute.xlu0 %2068
        %2070 = vrot.lane.b32.xlu0 %v1956, 48
        %v2071 = vpop.permute.xlu0 %2070
        %2072 = vrot.lane.b32.xlu0 %v1957, 48
        %v2073 = vpop.permute.xlu0 %2072
        %2074 = vrot.lane.b32.xlu0 %v1958, 48
        %v2075 = vpop.permute.xlu0 %2074
        %2076 = vrot.lane.b32.xlu0 %v1959, 48
        %v2077 = vpop.permute.xlu0 %2076
        %2078 = vrot.lane.b32.xlu0 %v1960, 48
        %v2079 = vpop.permute.xlu0 %2078
        %2080 = vrot.lane.b32.xlu0 %v1961, 48
        %v2081 = vpop.permute.xlu0 %2080
        %2082 = vrot.lane.b32.xlu0 %v1962, 48
        %v2083 = vpop.permute.xlu0 %2082
        %2084 = vrot.lane.b32.xlu0 %v1963, 48
        %v2085 = vpop.permute.xlu0 %2084
        %2086 = vrot.lane.b32.xlu0 %v1964, 48
        %v2087 = vpop.permute.xlu0 %2086
        %2088 = vrot.lane.b32.xlu0 %v1965, 48
        %v2089 = vpop.permute.xlu0 %2088
        %2090 = vrot.lane.b32.xlu0 %v1966, 48
        %v2091 = vpop.permute.xlu0 %2090
        %2092 = vrot.lane.b32.xlu0 %v1967, 48
        %v2093 = vpop.permute.xlu0 %2092
        %2094 = vrot.lane.b32.xlu0 %v1968, 48
        %v2095 = vpop.permute.xlu0 %2094
        %2096 = vrot.lane.b32.xlu0 %v1969, 48
        %v2097 = vpop.permute.xlu0 %2096
        %2098 = vrot.lane.b32.xlu0 %v1970, 48
        %v2099 = vpop.permute.xlu0 %2098
        %2100 = vrot.lane.b32.xlu0 %v1971, 48
        %v2101 = vpop.permute.xlu0 %2100
        %2102 = vrot.lane.b32.xlu0 %v1972, 48
        %v2103 = vpop.permute.xlu0 %2102
        %2104 = vrot.lane.b32.xlu0 %v1973, 48
        %v2105 = vpop.permute.xlu0 %2104
        %2106 = vrot.lane.b32.xlu0 %v1974, 48
        %v2107 = vpop.permute.xlu0 %2106
        %2108 = vrot.lane.b32.xlu0 %v1975, 48
        %v2109 = vpop.permute.xlu0 %2108
        %2110 = vrot.lane.b32.xlu0 %v1976, 48
        %v2111 = vpop.permute.xlu0 %2110
        %2112 = vrot.lane.b32.xlu0 %v1977, 48
        %v2113 = vpop.permute.xlu0 %2112
        %2114 = vrot.lane.b32.xlu0 %v1978, 48
        %v2115 = vpop.permute.xlu0 %2114
        %2116 = vrot.lane.b32.xlu0 %v1979, 48
        %v2117 = vpop.permute.xlu0 %2116
        %2118 = vrot.lane.b32.xlu0 %v1980, 48
        %v2119 = vpop.permute.xlu0 %2118
        %2120 = vrot.lane.b32.xlu0 %v1981, 48
        %v2121 = vpop.permute.xlu0 %2120
        %2122 = vrot.lane.b32.xlu0 %v1982, 48
        %v2123 = vpop.permute.xlu0 %2122
        %2124 = vrot.lane.b32.xlu0 %v1983, 48
        %v2125 = vpop.permute.xlu0 %2124
        %2126 = vrot.lane.b32.xlu0 %v1984, 48
        %v2127 = vpop.permute.xlu0 %2126
        %2128 = vrot.lane.b32.xlu0 %v1985, 48
        %v2129 = vpop.permute.xlu0 %2128
        %2130 = vrot.lane.b32.xlu0 %v1986, 48
        %v2131 = vpop.permute.xlu0 %2130
        %2132 = vrot.lane.b32.xlu0 %v1987, 48
        %v2133 = vpop.permute.xlu0 %2132
        %2134 = vrot.lane.b32.xlu0 %v1988, 48
        %v2135 = vpop.permute.xlu0 %2134
        %vm2185 = vcmask 786048
        %2186 = vst.msk [vmem:[#allocation3] sm:$0xff] %vm2185, %v2039
        %2187 = vst.msk [vmem:[#allocation3 + $0x10] sm:$0xff] %vm2185, %v2041
        %2188 = vst.msk [vmem:[#allocation3 + $0x20] sm:$0xff] %vm2185, %v2043
        %2189 = vst.msk [vmem:[#allocation3 + $0x30] sm:$0xff] %vm2185, %v2045
        %2190 = vst.msk [vmem:[#allocation3 + $0x40] sm:$0xff] %vm2185, %v2047
        %2191 = vst.msk [vmem:[#allocation3 + $0x50] sm:$0xff] %vm2185, %v2049
        %2192 = vst.msk [vmem:[#allocation3 + $0x60] sm:$0xff] %vm2185, %v2051
        %2193 = vst.msk [vmem:[#allocation3 + $0x70] sm:$0xff] %vm2185, %v2053
        %2194 = vst.msk [vmem:[#allocation3 + $0x80] sm:$0xff] %vm2185, %v2055
        %2195 = vst.msk [vmem:[#allocation3 + $0x90] sm:$0xff] %vm2185, %v2057
        %2196 = vst.msk [vmem:[#allocation3 + $0xa0] sm:$0xff] %vm2185, %v2059
        %2197 = vst.msk [vmem:[#allocation3 + $0xb0] sm:$0xff] %vm2185, %v2061
        %2198 = vst.msk [vmem:[#allocation3 + $0xc0] sm:$0xff] %vm2185, %v2063
        %2199 = vst.msk [vmem:[#allocation3 + $0xd0] sm:$0xff] %vm2185, %v2065
        %2200 = vst.msk [vmem:[#allocation3 + $0xe0] sm:$0xff] %vm2185, %v2067
        %2201 = vst.msk [vmem:[#allocation3 + $0xf0] sm:$0xff] %vm2185, %v2069
        %2202 = vst.msk [vmem:[#allocation3 + $0x100] sm:$0xff] %vm2185, %v2071
        %2203 = vst.msk [vmem:[#allocation3 + $0x110] sm:$0xff] %vm2185, %v2073
        %2204 = vst.msk [vmem:[#allocation3 + $0x120] sm:$0xff] %vm2185, %v2075
        %2205 = vst.msk [vmem:[#allocation3 + $0x130] sm:$0xff] %vm2185, %v2077
        %2206 = vst.msk [vmem:[#allocation3 + $0x140] sm:$0xff] %vm2185, %v2079
        %2207 = vst.msk [vmem:[#allocation3 + $0x150] sm:$0xff] %vm2185, %v2081
        %2208 = vst.msk [vmem:[#allocation3 + $0x160] sm:$0xff] %vm2185, %v2083
        %2209 = vst.msk [vmem:[#allocation3 + $0x170] sm:$0xff] %vm2185, %v2085
        %2210 = vst.msk [vmem:[#allocation3 + $0x180] sm:$0xff] %vm2185, %v2087
        %2211 = vst.msk [vmem:[#allocation3 + $0x190] sm:$0xff] %vm2185, %v2089
        %2212 = vst.msk [vmem:[#allocation3 + $0x1a0] sm:$0xff] %vm2185, %v2091
        %2213 = vst.msk [vmem:[#allocation3 + $0x1b0] sm:$0xff] %vm2185, %v2093
        %2214 = vst.msk [vmem:[#allocation3 + $0x1c0] sm:$0xff] %vm2185, %v2095
        %2215 = vst.msk [vmem:[#allocation3 + $0x1d0] sm:$0xff] %vm2185, %v2097
        %2216 = vst.msk [vmem:[#allocation3 + $0x1e0] sm:$0xff] %vm2185, %v2099
        %2217 = vst.msk [vmem:[#allocation3 + $0x1f0] sm:$0xff] %vm2185, %v2101
        %2218 = vst.msk [vmem:[#allocation3 + $0x200] sm:$0xff] %vm2185, %v2103
        %2219 = vst.msk [vmem:[#allocation3 + $0x210] sm:$0xff] %vm2185, %v2105
        %2220 = vst.msk [vmem:[#allocation3 + $0x220] sm:$0xff] %vm2185, %v2107
        %2221 = vst.msk [vmem:[#allocation3 + $0x230] sm:$0xff] %vm2185, %v2109
        %2222 = vst.msk [vmem:[#allocation3 + $0x240] sm:$0xff] %vm2185, %v2111
        %2223 = vst.msk [vmem:[#allocation3 + $0x250] sm:$0xff] %vm2185, %v2113
        %2224 = vst.msk [vmem:[#allocation3 + $0x260] sm:$0xff] %vm2185, %v2115
        %2225 = vst.msk [vmem:[#allocation3 + $0x270] sm:$0xff] %vm2185, %v2117
        %2226 = vst.msk [vmem:[#allocation3 + $0x280] sm:$0xff] %vm2185, %v2119
        %2227 = vst.msk [vmem:[#allocation3 + $0x290] sm:$0xff] %vm2185, %v2121
        %2228 = vst.msk [vmem:[#allocation3 + $0x2a0] sm:$0xff] %vm2185, %v2123
        %2229 = vst.msk [vmem:[#allocation3 + $0x2b0] sm:$0xff] %vm2185, %v2125
        %2230 = vst.msk [vmem:[#allocation3 + $0x2c0] sm:$0xff] %vm2185, %v2127
        %2231 = vst.msk [vmem:[#allocation3 + $0x2d0] sm:$0xff] %vm2185, %v2129
        %2232 = vst.msk [vmem:[#allocation3 + $0x2e0] sm:$0xff] %vm2185, %v2131
        %2233 = vst.msk [vmem:[#allocation3 + $0x2f0] sm:$0xff] %vm2185, %v2133
        %2234 = vst.msk [vmem:[#allocation3 + $0x300] sm:$0xff] %vm2185, %v2135
        %v2235 = vld [vmem:[#allocation2] sm:$0xff]
        %v2236 = vld [vmem:[#allocation2 + $0x8] sm:$0xff]
        %v2237 = vld [vmem:[#allocation2 + $0x10] sm:$0xff]
        %v2238 = vld [vmem:[#allocation2 + $0x18] sm:$0xff]
        %v2239 = vld [vmem:[#allocation2 + $0x20] sm:$0xff]
        %v2240 = vld [vmem:[#allocation2 + $0x28] sm:$0xff]
        %v2241 = vld [vmem:[#allocation2 + $0x30] sm:$0xff]
        %v2242 = vld [vmem:[#allocation2 + $0x38] sm:$0xff]
        %v2243 = vld [vmem:[#allocation2 + $0x40] sm:$0xff]
        %v2244 = vld [vmem:[#allocation2 + $0x48] sm:$0xff]
        %v2245 = vld [vmem:[#allocation2 + $0x50] sm:$0xff]
        %v2246 = vld [vmem:[#allocation2 + $0x58] sm:$0xff]
        %v2247 = vld [vmem:[#allocation2 + $0x60] sm:$0xff]
        %v2248 = vld [vmem:[#allocation2 + $0x68] sm:$0xff]
        %v2249 = vld [vmem:[#allocation2 + $0x70] sm:$0xff]
        %v2250 = vld [vmem:[#allocation2 + $0x78] sm:$0xff]
        %v2251 = vld [vmem:[#allocation2 + $0x80] sm:$0xff]
        %v2252 = vld [vmem:[#allocation2 + $0x88] sm:$0xff]
        %v2253 = vld [vmem:[#allocation2 + $0x90] sm:$0xff]
        %v2254 = vld [vmem:[#allocation2 + $0x98] sm:$0xff]
        %v2255 = vld [vmem:[#allocation2 + $0xa0] sm:$0xff]
        %v2256 = vld [vmem:[#allocation2 + $0xa8] sm:$0xff]
        %v2257 = vld [vmem:[#allocation2 + $0xb0] sm:$0xff]
        %v2258 = vld [vmem:[#allocation2 + $0xb8] sm:$0xff]
        %v2259 = vld [vmem:[#allocation2 + $0xc0] sm:$0xff]
        %v2260 = vld [vmem:[#allocation2 + $0xc8] sm:$0xff]
        %v2261 = vld [vmem:[#allocation2 + $0xd0] sm:$0xff]
        %v2262 = vld [vmem:[#allocation2 + $0xd8] sm:$0xff]
        %v2263 = vld [vmem:[#allocation2 + $0xe0] sm:$0xff]
        %v2264 = vld [vmem:[#allocation2 + $0xe8] sm:$0xff]
        %v2265 = vld [vmem:[#allocation2 + $0xf0] sm:$0xff]
        %v2266 = vld [vmem:[#allocation2 + $0xf8] sm:$0xff]
        %v2267 = vld [vmem:[#allocation2 + $0x100] sm:$0xff]
        %v2268 = vld [vmem:[#allocation2 + $0x108] sm:$0xff]
        %v2269 = vld [vmem:[#allocation2 + $0x110] sm:$0xff]
        %v2270 = vld [vmem:[#allocation2 + $0x118] sm:$0xff]
        %v2271 = vld [vmem:[#allocation2 + $0x120] sm:$0xff]
        %v2272 = vld [vmem:[#allocation2 + $0x128] sm:$0xff]
        %v2273 = vld [vmem:[#allocation2 + $0x130] sm:$0xff]
        %v2274 = vld [vmem:[#allocation2 + $0x138] sm:$0xff]
        %v2275 = vld [vmem:[#allocation2 + $0x140] sm:$0xff]
        %v2276 = vld [vmem:[#allocation2 + $0x148] sm:$0xff]
        %v2277 = vld [vmem:[#allocation2 + $0x150] sm:$0xff]
        %v2278 = vld [vmem:[#allocation2 + $0x158] sm:$0xff]
        %v2279 = vld [vmem:[#allocation2 + $0x160] sm:$0xff]
        %v2280 = vld [vmem:[#allocation2 + $0x168] sm:$0xff]
        %v2281 = vld [vmem:[#allocation2 + $0x170] sm:$0xff]
        %v2282 = vld [vmem:[#allocation2 + $0x178] sm:$0xff]
        %2331 = vrot.lane.b32.xlu0 %v2235, 96
        %v2332 = vpop.permute.xlu0 %2331
        %2333 = vrot.lane.b32.xlu0 %v2236, 96
        %v2334 = vpop.permute.xlu0 %2333
        %2335 = vrot.lane.b32.xlu0 %v2237, 96
        %v2336 = vpop.permute.xlu0 %2335
        %2337 = vrot.lane.b32.xlu0 %v2238, 96
        %v2338 = vpop.permute.xlu0 %2337
        %2339 = vrot.lane.b32.xlu0 %v2239, 96
        %v2340 = vpop.permute.xlu0 %2339
        %2341 = vrot.lane.b32.xlu0 %v2240, 96
        %v2342 = vpop.permute.xlu0 %2341
        %2343 = vrot.lane.b32.xlu0 %v2241, 96
        %v2344 = vpop.permute.xlu0 %2343
        %2345 = vrot.lane.b32.xlu0 %v2242, 96
        %v2346 = vpop.permute.xlu0 %2345
        %2347 = vrot.lane.b32.xlu0 %v2243, 96
        %v2348 = vpop.permute.xlu0 %2347
        %2349 = vrot.lane.b32.xlu0 %v2244, 96
        %v2350 = vpop.permute.xlu0 %2349
        %2351 = vrot.lane.b32.xlu0 %v2245, 96
        %v2352 = vpop.permute.xlu0 %2351
        %2353 = vrot.lane.b32.xlu0 %v2246, 96
        %v2354 = vpop.permute.xlu0 %2353
        %2355 = vrot.lane.b32.xlu0 %v2247, 96
        %v2356 = vpop.permute.xlu0 %2355
        %2357 = vrot.lane.b32.xlu0 %v2248, 96
        %v2358 = vpop.permute.xlu0 %2357
        %2359 = vrot.lane.b32.xlu0 %v2249, 96
        %v2360 = vpop.permute.xlu0 %2359
        %2361 = vrot.lane.b32.xlu0 %v2250, 96
        %v2362 = vpop.permute.xlu0 %2361
        %2363 = vrot.lane.b32.xlu0 %v2251, 96
        %v2364 = vpop.permute.xlu0 %2363
        %2365 = vrot.lane.b32.xlu0 %v2252, 96
        %v2366 = vpop.permute.xlu0 %2365
        %2367 = vrot.lane.b32.xlu0 %v2253, 96
        %v2368 = vpop.permute.xlu0 %2367
        %2369 = vrot.lane.b32.xlu0 %v2254, 96
        %v2370 = vpop.permute.xlu0 %2369
        %2371 = vrot.lane.b32.xlu0 %v2255, 96
        %v2372 = vpop.permute.xlu0 %2371
        %2373 = vrot.lane.b32.xlu0 %v2256, 96
        %v2374 = vpop.permute.xlu0 %2373
        %2375 = vrot.lane.b32.xlu0 %v2257, 96
        %v2376 = vpop.permute.xlu0 %2375
        %2377 = vrot.lane.b32.xlu0 %v2258, 96
        %v2378 = vpop.permute.xlu0 %2377
        %2379 = vrot.lane.b32.xlu0 %v2259, 96
        %v2380 = vpop.permute.xlu0 %2379
        %2381 = vrot.lane.b32.xlu0 %v2260, 96
        %v2382 = vpop.permute.xlu0 %2381
        %2383 = vrot.lane.b32.xlu0 %v2261, 96
        %v2384 = vpop.permute.xlu0 %2383
        %2385 = vrot.lane.b32.xlu0 %v2262, 96
        %v2386 = vpop.permute.xlu0 %2385
        %2387 = vrot.lane.b32.xlu0 %v2263, 96
        %v2388 = vpop.permute.xlu0 %2387
        %2389 = vrot.lane.b32.xlu0 %v2264, 96
        %v2390 = vpop.permute.xlu0 %2389
        %2391 = vrot.lane.b32.xlu0 %v2265, 96
        %v2392 = vpop.permute.xlu0 %2391
        %2393 = vrot.lane.b32.xlu0 %v2266, 96
        %v2394 = vpop.permute.xlu0 %2393
        %2395 = vrot.lane.b32.xlu0 %v2267, 96
        %v2396 = vpop.permute.xlu0 %2395
        %2397 = vrot.lane.b32.xlu0 %v2268, 96
        %v2398 = vpop.permute.xlu0 %2397
        %2399 = vrot.lane.b32.xlu0 %v2269, 96
        %v2400 = vpop.permute.xlu0 %2399
        %2401 = vrot.lane.b32.xlu0 %v2270, 96
        %v2402 = vpop.permute.xlu0 %2401
        %2403 = vrot.lane.b32.xlu0 %v2271, 96
        %v2404 = vpop.permute.xlu0 %2403
        %2405 = vrot.lane.b32.xlu0 %v2272, 96
        %v2406 = vpop.permute.xlu0 %2405
        %2407 = vrot.lane.b32.xlu0 %v2273, 96
        %v2408 = vpop.permute.xlu0 %2407
        %2409 = vrot.lane.b32.xlu0 %v2274, 96
        %v2410 = vpop.permute.xlu0 %2409
        %2411 = vrot.lane.b32.xlu0 %v2275, 96
        %v2412 = vpop.permute.xlu0 %2411
        %2413 = vrot.lane.b32.xlu0 %v2276, 96
        %v2414 = vpop.permute.xlu0 %2413
        %2415 = vrot.lane.b32.xlu0 %v2277, 96
        %v2416 = vpop.permute.xlu0 %2415
        %2417 = vrot.lane.b32.xlu0 %v2278, 96
        %v2418 = vpop.permute.xlu0 %2417
        %2419 = vrot.lane.b32.xlu0 %v2279, 96
        %v2420 = vpop.permute.xlu0 %2419
        %2421 = vrot.lane.b32.xlu0 %v2280, 96
        %v2422 = vpop.permute.xlu0 %2421
        %2423 = vrot.lane.b32.xlu0 %v2281, 96
        %v2424 = vpop.permute.xlu0 %2423
        %2425 = vrot.lane.b32.xlu0 %v2282, 96
        %v2426 = vpop.permute.xlu0 %2425
        %vm2475 = vcmask 917248
        %2476 = vst.msk [vmem:[#allocation3 + $0x10] sm:$0xff] %vm2475, %v2332
        %2477 = vst.msk [vmem:[#allocation3 + $0x20] sm:$0xff] %vm2475, %v2334
        %2478 = vst.msk [vmem:[#allocation3 + $0x30] sm:$0xff] %vm2475, %v2336
        %2479 = vst.msk [vmem:[#allocation3 + $0x40] sm:$0xff] %vm2475, %v2338
        %2480 = vst.msk [vmem:[#allocation3 + $0x50] sm:$0xff] %vm2475, %v2340
        %2481 = vst.msk [vmem:[#allocation3 + $0x60] sm:$0xff] %vm2475, %v2342
        %2482 = vst.msk [vmem:[#allocation3 + $0x70] sm:$0xff] %vm2475, %v2344
        %2483 = vst.msk [vmem:[#allocation3 + $0x80] sm:$0xff] %vm2475, %v2346
        %2484 = vst.msk [vmem:[#allocation3 + $0x90] sm:$0xff] %vm2475, %v2348
        %2485 = vst.msk [vmem:[#allocation3 + $0xa0] sm:$0xff] %vm2475, %v2350
        %2486 = vst.msk [vmem:[#allocation3 + $0xb0] sm:$0xff] %vm2475, %v2352
        %2487 = vst.msk [vmem:[#allocation3 + $0xc0] sm:$0xff] %vm2475, %v2354
        %2488 = vst.msk [vmem:[#allocation3 + $0xd0] sm:$0xff] %vm2475, %v2356
        %2489 = vst.msk [vmem:[#allocation3 + $0xe0] sm:$0xff] %vm2475, %v2358
        %2490 = vst.msk [vmem:[#allocation3 + $0xf0] sm:$0xff] %vm2475, %v2360
        %2491 = vst.msk [vmem:[#allocation3 + $0x100] sm:$0xff] %vm2475, %v2362
        %2492 = vst.msk [vmem:[#allocation3 + $0x110] sm:$0xff] %vm2475, %v2364
        %2493 = vst.msk [vmem:[#allocation3 + $0x120] sm:$0xff] %vm2475, %v2366
        %2494 = vst.msk [vmem:[#allocation3 + $0x130] sm:$0xff] %vm2475, %v2368
        %2495 = vst.msk [vmem:[#allocation3 + $0x140] sm:$0xff] %vm2475, %v2370
        %2496 = vst.msk [vmem:[#allocation3 + $0x150] sm:$0xff] %vm2475, %v2372
        %2497 = vst.msk [vmem:[#allocation3 + $0x160] sm:$0xff] %vm2475, %v2374
        %2498 = vst.msk [vmem:[#allocation3 + $0x170] sm:$0xff] %vm2475, %v2376
        %2499 = vst.msk [vmem:[#allocation3 + $0x180] sm:$0xff] %vm2475, %v2378
        %2500 = vst.msk [vmem:[#allocation3 + $0x190] sm:$0xff] %vm2475, %v2380
        %2501 = vst.msk [vmem:[#allocation3 + $0x1a0] sm:$0xff] %vm2475, %v2382
        %2502 = vst.msk [vmem:[#allocation3 + $0x1b0] sm:$0xff] %vm2475, %v2384
        %2503 = vst.msk [vmem:[#allocation3 + $0x1c0] sm:$0xff] %vm2475, %v2386
        %2504 = vst.msk [vmem:[#allocation3 + $0x1d0] sm:$0xff] %vm2475, %v2388
        %2505 = vst.msk [vmem:[#allocation3 + $0x1e0] sm:$0xff] %vm2475, %v2390
        %2506 = vst.msk [vmem:[#allocation3 + $0x1f0] sm:$0xff] %vm2475, %v2392
        %2507 = vst.msk [vmem:[#allocation3 + $0x200] sm:$0xff] %vm2475, %v2394
        %2508 = vst.msk [vmem:[#allocation3 + $0x210] sm:$0xff] %vm2475, %v2396
        %2509 = vst.msk [vmem:[#allocation3 + $0x220] sm:$0xff] %vm2475, %v2398
        %2510 = vst.msk [vmem:[#allocation3 + $0x230] sm:$0xff] %vm2475, %v2400
        %2511 = vst.msk [vmem:[#allocation3 + $0x240] sm:$0xff] %vm2475, %v2402
        %2512 = vst.msk [vmem:[#allocation3 + $0x250] sm:$0xff] %vm2475, %v2404
        %2513 = vst.msk [vmem:[#allocation3 + $0x260] sm:$0xff] %vm2475, %v2406
        %2514 = vst.msk [vmem:[#allocation3 + $0x270] sm:$0xff] %vm2475, %v2408
        %2515 = vst.msk [vmem:[#allocation3 + $0x280] sm:$0xff] %vm2475, %v2410
        %2516 = vst.msk [vmem:[#allocation3 + $0x290] sm:$0xff] %vm2475, %v2412
        %2517 = vst.msk [vmem:[#allocation3 + $0x2a0] sm:$0xff] %vm2475, %v2414
        %2518 = vst.msk [vmem:[#allocation3 + $0x2b0] sm:$0xff] %vm2475, %v2416
        %2519 = vst.msk [vmem:[#allocation3 + $0x2c0] sm:$0xff] %vm2475, %v2418
        %2520 = vst.msk [vmem:[#allocation3 + $0x2d0] sm:$0xff] %vm2475, %v2420
        %2521 = vst.msk [vmem:[#allocation3 + $0x2e0] sm:$0xff] %vm2475, %v2422
        %2522 = vst.msk [vmem:[#allocation3 + $0x2f0] sm:$0xff] %vm2475, %v2424
        %2523 = vst.msk [vmem:[#allocation3 + $0x300] sm:$0xff] %vm2475, %v2426
        %2524 = vst.msk [vmem:[#allocation3] sm:$0xff] %vm2475, 0.0
        %2525 = vst.msk [vmem:[#allocation3 + $0x70] sm:$0xff] %vm2475, 0.0
        %2526 = vst.msk [vmem:[#allocation3 + $0xe0] sm:$0xff] %vm2475, 0.0
        %2527 = vst.msk [vmem:[#allocation3 + $0x150] sm:$0xff] %vm2475, 0.0
        %2528 = vst.msk [vmem:[#allocation3 + $0x1c0] sm:$0xff] %vm2475, 0.0
        %2529 = vst.msk [vmem:[#allocation3 + $0x230] sm:$0xff] %vm2475, 0.0
        %2530 = vst.msk [vmem:[#allocation3 + $0x2a0] sm:$0xff] %vm2475, 0.0
        %v2531 = vld [vmem:[#allocation2] sm:$0xff]
        %v2532 = vld [vmem:[#allocation2 + $0x8] sm:$0xff]
        %v2533 = vld [vmem:[#allocation2 + $0x10] sm:$0xff]
        %v2534 = vld [vmem:[#allocation2 + $0x18] sm:$0xff]
        %v2535 = vld [vmem:[#allocation2 + $0x20] sm:$0xff]
        %v2536 = vld [vmem:[#allocation2 + $0x28] sm:$0xff]
        %v2537 = vld [vmem:[#allocation2 + $0x30] sm:$0xff]
        %v2538 = vld [vmem:[#allocation2 + $0x38] sm:$0xff]
        %v2539 = vld [vmem:[#allocation2 + $0x40] sm:$0xff]
        %v2540 = vld [vmem:[#allocation2 + $0x48] sm:$0xff]
        %v2541 = vld [vmem:[#allocation2 + $0x50] sm:$0xff]
        %v2542 = vld [vmem:[#allocation2 + $0x58] sm:$0xff]
        %v2543 = vld [vmem:[#allocation2 + $0x60] sm:$0xff]
        %v2544 = vld [vmem:[#allocation2 + $0x68] sm:$0xff]
        %v2545 = vld [vmem:[#allocation2 + $0x70] sm:$0xff]
        %v2546 = vld [vmem:[#allocation2 + $0x78] sm:$0xff]
        %v2547 = vld [vmem:[#allocation2 + $0x80] sm:$0xff]
        %v2548 = vld [vmem:[#allocation2 + $0x88] sm:$0xff]
        %v2549 = vld [vmem:[#allocation2 + $0x90] sm:$0xff]
        %v2550 = vld [vmem:[#allocation2 + $0x98] sm:$0xff]
        %v2551 = vld [vmem:[#allocation2 + $0xa0] sm:$0xff]
        %v2552 = vld [vmem:[#allocation2 + $0xa8] sm:$0xff]
        %v2553 = vld [vmem:[#allocation2 + $0xb0] sm:$0xff]
        %v2554 = vld [vmem:[#allocation2 + $0xb8] sm:$0xff]
        %v2555 = vld [vmem:[#allocation2 + $0xc0] sm:$0xff]
        %v2556 = vld [vmem:[#allocation2 + $0xc8] sm:$0xff]
        %v2557 = vld [vmem:[#allocation2 + $0xd0] sm:$0xff]
        %v2558 = vld [vmem:[#allocation2 + $0xd8] sm:$0xff]
        %v2559 = vld [vmem:[#allocation2 + $0xe0] sm:$0xff]
        %v2560 = vld [vmem:[#allocation2 + $0xe8] sm:$0xff]
        %v2561 = vld [vmem:[#allocation2 + $0xf0] sm:$0xff]
        %v2562 = vld [vmem:[#allocation2 + $0xf8] sm:$0xff]
        %v2563 = vld [vmem:[#allocation2 + $0x100] sm:$0xff]
        %v2564 = vld [vmem:[#allocation2 + $0x108] sm:$0xff]
        %v2565 = vld [vmem:[#allocation2 + $0x110] sm:$0xff]
        %v2566 = vld [vmem:[#allocation2 + $0x118] sm:$0xff]
        %v2567 = vld [vmem:[#allocation2 + $0x120] sm:$0xff]
        %v2568 = vld [vmem:[#allocation2 + $0x128] sm:$0xff]
        %v2569 = vld [vmem:[#allocation2 + $0x130] sm:$0xff]
        %v2570 = vld [vmem:[#allocation2 + $0x138] sm:$0xff]
        %v2571 = vld [vmem:[#allocation2 + $0x140] sm:$0xff]
        %v2572 = vld [vmem:[#allocation2 + $0x148] sm:$0xff]
        %v2573 = vld [vmem:[#allocation2 + $0x150] sm:$0xff]
        %v2574 = vld [vmem:[#allocation2 + $0x158] sm:$0xff]
        %v2575 = vld [vmem:[#allocation2 + $0x160] sm:$0xff]
        %v2576 = vld [vmem:[#allocation2 + $0x168] sm:$0xff]
        %v2577 = vld [vmem:[#allocation2 + $0x170] sm:$0xff]
        %v2578 = vld [vmem:[#allocation2 + $0x178] sm:$0xff]
        %v2579 = vld [vmem:[#allocation2 + $0x180] sm:$0xff]
        %2629 = vrot.lane.b32.xlu0 %v2531, 96
        %v2630 = vpop.permute.xlu0 %2629
        %2631 = vrot.lane.b32.xlu0 %v2532, 96
        %v2632 = vpop.permute.xlu0 %2631
        %2633 = vrot.lane.b32.xlu0 %v2533, 96
        %v2634 = vpop.permute.xlu0 %2633
        %2635 = vrot.lane.b32.xlu0 %v2534, 96
        %v2636 = vpop.permute.xlu0 %2635
        %2637 = vrot.lane.b32.xlu0 %v2535, 96
        %v2638 = vpop.permute.xlu0 %2637
        %2639 = vrot.lane.b32.xlu0 %v2536, 96
        %v2640 = vpop.permute.xlu0 %2639
        %2641 = vrot.lane.b32.xlu0 %v2537, 96
        %v2642 = vpop.permute.xlu0 %2641
        %2643 = vrot.lane.b32.xlu0 %v2538, 96
        %v2644 = vpop.permute.xlu0 %2643
        %2645 = vrot.lane.b32.xlu0 %v2539, 96
        %v2646 = vpop.permute.xlu0 %2645
        %2647 = vrot.lane.b32.xlu0 %v2540, 96
        %v2648 = vpop.permute.xlu0 %2647
        %2649 = vrot.lane.b32.xlu0 %v2541, 96
        %v2650 = vpop.permute.xlu0 %2649
        %2651 = vrot.lane.b32.xlu0 %v2542, 96
        %v2652 = vpop.permute.xlu0 %2651
        %2653 = vrot.lane.b32.xlu0 %v2543, 96
        %v2654 = vpop.permute.xlu0 %2653
        %2655 = vrot.lane.b32.xlu0 %v2544, 96
        %v2656 = vpop.permute.xlu0 %2655
        %2657 = vrot.lane.b32.xlu0 %v2545, 96
        %v2658 = vpop.permute.xlu0 %2657
        %2659 = vrot.lane.b32.xlu0 %v2546, 96
        %v2660 = vpop.permute.xlu0 %2659
        %2661 = vrot.lane.b32.xlu0 %v2547, 96
        %v2662 = vpop.permute.xlu0 %2661
        %2663 = vrot.lane.b32.xlu0 %v2548, 96
        %v2664 = vpop.permute.xlu0 %2663
        %2665 = vrot.lane.b32.xlu0 %v2549, 96
        %v2666 = vpop.permute.xlu0 %2665
        %2667 = vrot.lane.b32.xlu0 %v2550, 96
        %v2668 = vpop.permute.xlu0 %2667
        %2669 = vrot.lane.b32.xlu0 %v2551, 96
        %v2670 = vpop.permute.xlu0 %2669
        %2671 = vrot.lane.b32.xlu0 %v2552, 96
        %v2672 = vpop.permute.xlu0 %2671
        %2673 = vrot.lane.b32.xlu0 %v2553, 96
        %v2674 = vpop.permute.xlu0 %2673
        %2675 = vrot.lane.b32.xlu0 %v2554, 96
        %v2676 = vpop.permute.xlu0 %2675
        %2677 = vrot.lane.b32.xlu0 %v2555, 96
        %v2678 = vpop.permute.xlu0 %2677
        %2679 = vrot.lane.b32.xlu0 %v2556, 96
        %v2680 = vpop.permute.xlu0 %2679
        %2681 = vrot.lane.b32.xlu0 %v2557, 96
        %v2682 = vpop.permute.xlu0 %2681
        %2683 = vrot.lane.b32.xlu0 %v2558, 96
        %v2684 = vpop.permute.xlu0 %2683
        %2685 = vrot.lane.b32.xlu0 %v2559, 96
        %v2686 = vpop.permute.xlu0 %2685
        %2687 = vrot.lane.b32.xlu0 %v2560, 96
        %v2688 = vpop.permute.xlu0 %2687
        %2689 = vrot.lane.b32.xlu0 %v2561, 96
        %v2690 = vpop.permute.xlu0 %2689
        %2691 = vrot.lane.b32.xlu0 %v2562, 96
        %v2692 = vpop.permute.xlu0 %2691
        %2693 = vrot.lane.b32.xlu0 %v2563, 96
        %v2694 = vpop.permute.xlu0 %2693
        %2695 = vrot.lane.b32.xlu0 %v2564, 96
        %v2696 = vpop.permute.xlu0 %2695
        %2697 = vrot.lane.b32.xlu0 %v2565, 96
        %v2698 = vpop.permute.xlu0 %2697
        %2699 = vrot.lane.b32.xlu0 %v2566, 96
        %v2700 = vpop.permute.xlu0 %2699
        %2701 = vrot.lane.b32.xlu0 %v2567, 96
        %v2702 = vpop.permute.xlu0 %2701
        %2703 = vrot.lane.b32.xlu0 %v2568, 96
        %v2704 = vpop.permute.xlu0 %2703
        %2705 = vrot.lane.b32.xlu0 %v2569, 96
        %v2706 = vpop.permute.xlu0 %2705
        %2707 = vrot.lane.b32.xlu0 %v2570, 96
        %v2708 = vpop.permute.xlu0 %2707
        %2709 = vrot.lane.b32.xlu0 %v2571, 96
        %v2710 = vpop.permute.xlu0 %2709
        %2711 = vrot.lane.b32.xlu0 %v2572, 96
        %v2712 = vpop.permute.xlu0 %2711
        %2713 = vrot.lane.b32.xlu0 %v2573, 96
        %v2714 = vpop.permute.xlu0 %2713
        %2715 = vrot.lane.b32.xlu0 %v2574, 96
        %v2716 = vpop.permute.xlu0 %2715
        %2717 = vrot.lane.b32.xlu0 %v2575, 96
        %v2718 = vpop.permute.xlu0 %2717
        %2719 = vrot.lane.b32.xlu0 %v2576, 96
        %v2720 = vpop.permute.xlu0 %2719
        %2721 = vrot.lane.b32.xlu0 %v2577, 96
        %v2722 = vpop.permute.xlu0 %2721
        %2723 = vrot.lane.b32.xlu0 %v2578, 96
        %v2724 = vpop.permute.xlu0 %2723
        %2725 = vrot.lane.b32.xlu0 %v2579, 96
        %v2726 = vpop.permute.xlu0 %2725
        %vm2776 = vcmask 1048448
        %2777 = vst.msk [vmem:[#allocation3] sm:$0xff] %vm2776, %v2630
        %2778 = vst.msk [vmem:[#allocation3 + $0x10] sm:$0xff] %vm2776, %v2632
        %2779 = vst.msk [vmem:[#allocation3 + $0x20] sm:$0xff] %vm2776, %v2634
        %2780 = vst.msk [vmem:[#allocation3 + $0x30] sm:$0xff] %vm2776, %v2636
        %2781 = vst.msk [vmem:[#allocation3 + $0x40] sm:$0xff] %vm2776, %v2638
        %2782 = vst.msk [vmem:[#allocation3 + $0x50] sm:$0xff] %vm2776, %v2640
        %2783 = vst.msk [vmem:[#allocation3 + $0x60] sm:$0xff] %vm2776, %v2642
        %2784 = vst.msk [vmem:[#allocation3 + $0x70] sm:$0xff] %vm2776, %v2644
        %2785 = vst.msk [vmem:[#allocation3 + $0x80] sm:$0xff] %vm2776, %v2646
        %2786 = vst.msk [vmem:[#allocation3 + $0x90] sm:$0xff] %vm2776, %v2648
        %2787 = vst.msk [vmem:[#allocation3 + $0xa0] sm:$0xff] %vm2776, %v2650
        %2788 = vst.msk [vmem:[#allocation3 + $0xb0] sm:$0xff] %vm2776, %v2652
        %2789 = vst.msk [vmem:[#allocation3 + $0xc0] sm:$0xff] %vm2776, %v2654
        %2790 = vst.msk [vmem:[#allocation3 + $0xd0] sm:$0xff] %vm2776, %v2656
        %2791 = vst.msk [vmem:[#allocation3 + $0xe0] sm:$0xff] %vm2776, %v2658
        %2792 = vst.msk [vmem:[#allocation3 + $0xf0] sm:$0xff] %vm2776, %v2660
        %2793 = vst.msk [vmem:[#allocation3 + $0x100] sm:$0xff] %vm2776, %v2662
        %2794 = vst.msk [vmem:[#allocation3 + $0x110] sm:$0xff] %vm2776, %v2664
        %2795 = vst.msk [vmem:[#allocation3 + $0x120] sm:$0xff] %vm2776, %v2666
        %2796 = vst.msk [vmem:[#allocation3 + $0x130] sm:$0xff] %vm2776, %v2668
        %2797 = vst.msk [vmem:[#allocation3 + $0x140] sm:$0xff] %vm2776, %v2670
        %2798 = vst.msk [vmem:[#allocation3 + $0x150] sm:$0xff] %vm2776, %v2672
        %2799 = vst.msk [vmem:[#allocation3 + $0x160] sm:$0xff] %vm2776, %v2674
        %2800 = vst.msk [vmem:[#allocation3 + $0x170] sm:$0xff] %vm2776, %v2676
        %2801 = vst.msk [vmem:[#allocation3 + $0x180] sm:$0xff] %vm2776, %v2678
        %2802 = vst.msk [vmem:[#allocation3 + $0x190] sm:$0xff] %vm2776, %v2680
        %2803 = vst.msk [vmem:[#allocation3 + $0x1a0] sm:$0xff] %vm2776, %v2682
        %2804 = vst.msk [vmem:[#allocation3 + $0x1b0] sm:$0xff] %vm2776, %v2684
        %2805 = vst.msk [vmem:[#allocation3 + $0x1c0] sm:$0xff] %vm2776, %v2686
        %2806 = vst.msk [vmem:[#allocation3 + $0x1d0] sm:$0xff] %vm2776, %v2688
        %2807 = vst.msk [vmem:[#allocation3 + $0x1e0] sm:$0xff] %vm2776, %v2690
        %2808 = vst.msk [vmem:[#allocation3 + $0x1f0] sm:$0xff] %vm2776, %v2692
        %2809 = vst.msk [vmem:[#allocation3 + $0x200] sm:$0xff] %vm2776, %v2694
        %2810 = vst.msk [vmem:[#allocation3 + $0x210] sm:$0xff] %vm2776, %v2696
        %2811 = vst.msk [vmem:[#allocation3 + $0x220] sm:$0xff] %vm2776, %v2698
        %2812 = vst.msk [vmem:[#allocation3 + $0x230] sm:$0xff] %vm2776, %v2700
        %2813 = vst.msk [vmem:[#allocation3 + $0x240] sm:$0xff] %vm2776, %v2702
        %2814 = vst.msk [vmem:[#allocation3 + $0x250] sm:$0xff] %vm2776, %v2704
        %2815 = vst.msk [vmem:[#allocation3 + $0x260] sm:$0xff] %vm2776, %v2706
        %2816 = vst.msk [vmem:[#allocation3 + $0x270] sm:$0xff] %vm2776, %v2708
        %2817 = vst.msk [vmem:[#allocation3 + $0x280] sm:$0xff] %vm2776, %v2710
        %2818 = vst.msk [vmem:[#allocation3 + $0x290] sm:$0xff] %vm2776, %v2712
        %2819 = vst.msk [vmem:[#allocation3 + $0x2a0] sm:$0xff] %vm2776, %v2714
        %2820 = vst.msk [vmem:[#allocation3 + $0x2b0] sm:$0xff] %vm2776, %v2716
        %2821 = vst.msk [vmem:[#allocation3 + $0x2c0] sm:$0xff] %vm2776, %v2718
        %2822 = vst.msk [vmem:[#allocation3 + $0x2d0] sm:$0xff] %vm2776, %v2720
        %2823 = vst.msk [vmem:[#allocation3 + $0x2e0] sm:$0xff] %vm2776, %v2722
        %2824 = vst.msk [vmem:[#allocation3 + $0x2f0] sm:$0xff] %vm2776, %v2724
        %2825 = vst.msk [vmem:[#allocation3 + $0x300] sm:$0xff] %vm2776, %v2726
        %v2826 = vld [vmem:[#allocation2] sm:$0xff]
        %v2827 = vld [vmem:[#allocation2 + $0x8] sm:$0xff]
        %v2828 = vld [vmem:[#allocation2 + $0x10] sm:$0xff]
        %v2829 = vld [vmem:[#allocation2 + $0x18] sm:$0xff]
        %v2830 = vld [vmem:[#allocation2 + $0x20] sm:$0xff]
        %v2831 = vld [vmem:[#allocation2 + $0x28] sm:$0xff]
        %v2832 = vld [vmem:[#allocation2 + $0x30] sm:$0xff]
        %v2833 = vld [vmem:[#allocation2 + $0x38] sm:$0xff]
        %v2834 = vld [vmem:[#allocation2 + $0x40] sm:$0xff]
        %v2835 = vld [vmem:[#allocation2 + $0x48] sm:$0xff]
        %v2836 = vld [vmem:[#allocation2 + $0x50] sm:$0xff]
        %v2837 = vld [vmem:[#allocation2 + $0x58] sm:$0xff]
        %v2838 = vld [vmem:[#allocation2 + $0x60] sm:$0xff]
        %v2839 = vld [vmem:[#allocation2 + $0x68] sm:$0xff]
        %v2840 = vld [vmem:[#allocation2 + $0x70] sm:$0xff]
        %v2841 = vld [vmem:[#allocation2 + $0x78] sm:$0xff]
        %v2842 = vld [vmem:[#allocation2 + $0x80] sm:$0xff]
        %v2843 = vld [vmem:[#allocation2 + $0x88] sm:$0xff]
        %v2844 = vld [vmem:[#allocation2 + $0x90] sm:$0xff]
        %v2845 = vld [vmem:[#allocation2 + $0x98] sm:$0xff]
        %v2846 = vld [vmem:[#allocation2 + $0xa0] sm:$0xff]
        %v2847 = vld [vmem:[#allocation2 + $0xa8] sm:$0xff]
        %v2848 = vld [vmem:[#allocation2 + $0xb0] sm:$0xff]
        %v2849 = vld [vmem:[#allocation2 + $0xb8] sm:$0xff]
        %v2850 = vld [vmem:[#allocation2 + $0xc0] sm:$0xff]
        %v2851 = vld [vmem:[#allocation2 + $0xc8] sm:$0xff]
        %v2852 = vld [vmem:[#allocation2 + $0xd0] sm:$0xff]
        %v2853 = vld [vmem:[#allocation2 + $0xd8] sm:$0xff]
        %v2854 = vld [vmem:[#allocation2 + $0xe0] sm:$0xff]
        %v2855 = vld [vmem:[#allocation2 + $0xe8] sm:$0xff]
        %v2856 = vld [vmem:[#allocation2 + $0xf0] sm:$0xff]
        %v2857 = vld [vmem:[#allocation2 + $0xf8] sm:$0xff]
        %v2858 = vld [vmem:[#allocation2 + $0x100] sm:$0xff]
        %v2859 = vld [vmem:[#allocation2 + $0x108] sm:$0xff]
        %v2860 = vld [vmem:[#allocation2 + $0x110] sm:$0xff]
        %v2861 = vld [vmem:[#allocation2 + $0x118] sm:$0xff]
        %v2862 = vld [vmem:[#allocation2 + $0x120] sm:$0xff]
        %v2863 = vld [vmem:[#allocation2 + $0x128] sm:$0xff]
        %v2864 = vld [vmem:[#allocation2 + $0x130] sm:$0xff]
        %v2865 = vld [vmem:[#allocation2 + $0x138] sm:$0xff]
        %v2866 = vld [vmem:[#allocation2 + $0x140] sm:$0xff]
        %v2867 = vld [vmem:[#allocation2 + $0x148] sm:$0xff]
        %v2868 = vld [vmem:[#allocation2 + $0x150] sm:$0xff]
        %v2869 = vld [vmem:[#allocation2 + $0x158] sm:$0xff]
        %v2870 = vld [vmem:[#allocation2 + $0x160] sm:$0xff]
        %v2871 = vld [vmem:[#allocation2 + $0x168] sm:$0xff]
        %v2872 = vld [vmem:[#allocation2 + $0x170] sm:$0xff]
        %v2873 = vld [vmem:[#allocation2 + $0x178] sm:$0xff]
        %v2874 = vld [vmem:[#allocation2 + $0x180] sm:$0xff]
        %2875 = vst.msk [vmem:[#allocation3 + $0x8] sm:$0xff] %vm942, %v2826
        %2876 = vst.msk [vmem:[#allocation3 + $0x18] sm:$0xff] %vm942, %v2827
        %2877 = vst.msk [vmem:[#allocation3 + $0x28] sm:$0xff] %vm942, %v2828
        %2878 = vst.msk [vmem:[#allocation3 + $0x38] sm:$0xff] %vm942, %v2829
        %2879 = vst.msk [vmem:[#allocation3 + $0x48] sm:$0xff] %vm942, %v2830
        %2880 = vst.msk [vmem:[#allocation3 + $0x58] sm:$0xff] %vm942, %v2831
        %2881 = vst.msk [vmem:[#allocation3 + $0x68] sm:$0xff] %vm942, %v2832
        %2882 = vst.msk [vmem:[#allocation3 + $0x78] sm:$0xff] %vm942, %v2833
        %2883 = vst.msk [vmem:[#allocation3 + $0x88] sm:$0xff] %vm942, %v2834
        %2884 = vst.msk [vmem:[#allocation3 + $0x98] sm:$0xff] %vm942, %v2835
        %2885 = vst.msk [vmem:[#allocation3 + $0xa8] sm:$0xff] %vm942, %v2836
        %2886 = vst.msk [vmem:[#allocation3 + $0xb8] sm:$0xff] %vm942, %v2837
        %2887 = vst.msk [vmem:[#allocation3 + $0xc8] sm:$0xff] %vm942, %v2838
        %2888 = vst.msk [vmem:[#allocation3 + $0xd8] sm:$0xff] %vm942, %v2839
        %2889 = vst.msk [vmem:[#allocation3 + $0xe8] sm:$0xff] %vm942, %v2840
        %2890 = vst.msk [vmem:[#allocation3 + $0xf8] sm:$0xff] %vm942, %v2841
        %2891 = vst.msk [vmem:[#allocation3 + $0x108] sm:$0xff] %vm942, %v2842
        %2892 = vst.msk [vmem:[#allocation3 + $0x118] sm:$0xff] %vm942, %v2843
        %2893 = vst.msk [vmem:[#allocation3 + $0x128] sm:$0xff] %vm942, %v2844
        %2894 = vst.msk [vmem:[#allocation3 + $0x138] sm:$0xff] %vm942, %v2845
        %2895 = vst.msk [vmem:[#allocation3 + $0x148] sm:$0xff] %vm942, %v2846
        %2896 = vst.msk [vmem:[#allocation3 + $0x158] sm:$0xff] %vm942, %v2847
        %2897 = vst.msk [vmem:[#allocation3 + $0x168] sm:$0xff] %vm942, %v2848
        %2898 = vst.msk [vmem:[#allocation3 + $0x178] sm:$0xff] %vm942, %v2849
        %2899 = vst.msk [vmem:[#allocation3 + $0x188] sm:$0xff] %vm942, %v2850
        %2900 = vst.msk [vmem:[#allocation3 + $0x198] sm:$0xff] %vm942, %v2851
        %2901 = vst.msk [vmem:[#allocation3 + $0x1a8] sm:$0xff] %vm942, %v2852
        %2902 = vst.msk [vmem:[#allocation3 + $0x1b8] sm:$0xff] %vm942, %v2853
        %2903 = vst.msk [vmem:[#allocation3 + $0x1c8] sm:$0xff] %vm942, %v2854
        %2904 = vst.msk [vmem:[#allocation3 + $0x1d8] sm:$0xff] %vm942, %v2855
        %2905 = vst.msk [vmem:[#allocation3 + $0x1e8] sm:$0xff] %vm942, %v2856
        %2906 = vst.msk [vmem:[#allocation3 + $0x1f8] sm:$0xff] %vm942, %v2857
        %2907 = vst.msk [vmem:[#allocation3 + $0x208] sm:$0xff] %vm942, %v2858
        %2908 = vst.msk [vmem:[#allocation3 + $0x218] sm:$0xff] %vm942, %v2859
        %2909 = vst.msk [vmem:[#allocation3 + $0x228] sm:$0xff] %vm942, %v2860
        %2910 = vst.msk [vmem:[#allocation3 + $0x238] sm:$0xff] %vm942, %v2861
        %2911 = vst.msk [vmem:[#allocation3 + $0x248] sm:$0xff] %vm942, %v2862
        %2912 = vst.msk [vmem:[#allocation3 + $0x258] sm:$0xff] %vm942, %v2863
        %2913 = vst.msk [vmem:[#allocation3 + $0x268] sm:$0xff] %vm942, %v2864
        %2914 = vst.msk [vmem:[#allocation3 + $0x278] sm:$0xff] %vm942, %v2865
        %2915 = vst.msk [vmem:[#allocation3 + $0x288] sm:$0xff] %vm942, %v2866
        %2916 = vst.msk [vmem:[#allocation3 + $0x298] sm:$0xff] %vm942, %v2867
        %2917 = vst.msk [vmem:[#allocation3 + $0x2a8] sm:$0xff] %vm942, %v2868
        %2918 = vst.msk [vmem:[#allocation3 + $0x2b8] sm:$0xff] %vm942, %v2869
        %2919 = vst.msk [vmem:[#allocation3 + $0x2c8] sm:$0xff] %vm942, %v2870
        %2920 = vst.msk [vmem:[#allocation3 + $0x2d8] sm:$0xff] %vm942, %v2871
        %2921 = vst.msk [vmem:[#allocation3 + $0x2e8] sm:$0xff] %vm942, %v2872
        %2922 = vst.msk [vmem:[#allocation3 + $0x2f8] sm:$0xff] %vm942, %v2873
        %2923 = vst.msk [vmem:[#allocation3 + $0x308] sm:$0xff] %vm942, %v2874
        %v2924 = vld [vmem:[#allocation3] sm:$0xff]
        %v2925 = vld [vmem:[#allocation3 + $0x8] sm:$0xff]
        %v2926 = vld [vmem:[#allocation3 + $0x10] sm:$0xff]
        %v2927 = vld [vmem:[#allocation3 + $0x18] sm:$0xff]
        %v2928 = vld [vmem:[#allocation3 + $0x20] sm:$0xff]
        %v2929 = vld [vmem:[#allocation3 + $0x28] sm:$0xff]
        %v2930 = vld [vmem:[#allocation3 + $0x30] sm:$0xff]
        %v2931 = vld [vmem:[#allocation3 + $0x38] sm:$0xff]
        %v2932 = vld [vmem:[#allocation3 + $0x40] sm:$0xff]
        %v2933 = vld [vmem:[#allocation3 + $0x48] sm:$0xff]
        %v2934 = vld [vmem:[#allocation3 + $0x50] sm:$0xff]
        %v2935 = vld [vmem:[#allocation3 + $0x58] sm:$0xff]
        %v2936 = vld [vmem:[#allocation3 + $0x60] sm:$0xff]
        %v2937 = vld [vmem:[#allocation3 + $0x68] sm:$0xff]
        %v2938 = vld [vmem:[#allocation3 + $0x70] sm:$0xff]
        %v2939 = vld [vmem:[#allocation3 + $0x78] sm:$0xff]
        %v2940 = vld [vmem:[#allocation3 + $0x80] sm:$0xff]
        %v2941 = vld [vmem:[#allocation3 + $0x88] sm:$0xff]
        %v2942 = vld [vmem:[#allocation3 + $0x90] sm:$0xff]
        %v2943 = vld [vmem:[#allocation3 + $0x98] sm:$0xff]
        %v2944 = vld [vmem:[#allocation3 + $0xa0] sm:$0xff]
        %v2945 = vld [vmem:[#allocation3 + $0xa8] sm:$0xff]
        %v2946 = vld [vmem:[#allocation3 + $0xb0] sm:$0xff]
        %v2947 = vld [vmem:[#allocation3 + $0xb8] sm:$0xff]
        %v2948 = vld [vmem:[#allocation3 + $0xc0] sm:$0xff]
        %v2949 = vld [vmem:[#allocation3 + $0xc8] sm:$0xff]
        %v2950 = vld [vmem:[#allocation3 + $0xd0] sm:$0xff]
        %v2951 = vld [vmem:[#allocation3 + $0xd8] sm:$0xff]
        %v2952 = vld [vmem:[#allocation3 + $0xe0] sm:$0xff]
        %v2953 = vld [vmem:[#allocation3 + $0xe8] sm:$0xff]
        %v2954 = vld [vmem:[#allocation3 + $0xf0] sm:$0xff]
        %v2955 = vld [vmem:[#allocation3 + $0xf8] sm:$0xff]
        %v2956 = vld [vmem:[#allocation3 + $0x100] sm:$0xff]
        %v2957 = vld [vmem:[#allocation3 + $0x108] sm:$0xff]
        %v2958 = vld [vmem:[#allocation3 + $0x110] sm:$0xff]
        %v2959 = vld [vmem:[#allocation3 + $0x118] sm:$0xff]
        %v2960 = vld [vmem:[#allocation3 + $0x120] sm:$0xff]
        %v2961 = vld [vmem:[#allocation3 + $0x128] sm:$0xff]
        %v2962 = vld [vmem:[#allocation3 + $0x130] sm:$0xff]
        %v2963 = vld [vmem:[#allocation3 + $0x138] sm:$0xff]
        %v2964 = vld [vmem:[#allocation3 + $0x140] sm:$0xff]
        %v2965 = vld [vmem:[#allocation3 + $0x148] sm:$0xff]
        %v2966 = vld [vmem:[#allocation3 + $0x150] sm:$0xff]
        %v2967 = vld [vmem:[#allocation3 + $0x158] sm:$0xff]
        %v2968 = vld [vmem:[#allocation3 + $0x160] sm:$0xff]
        %v2969 = vld [vmem:[#allocation3 + $0x168] sm:$0xff]
        %v2970 = vld [vmem:[#allocation3 + $0x170] sm:$0xff]
        %v2971 = vld [vmem:[#allocation3 + $0x178] sm:$0xff]
        %v2972 = vld [vmem:[#allocation3 + $0x180] sm:$0xff]
        %v2973 = vld [vmem:[#allocation3 + $0x188] sm:$0xff]
        %v2974 = vld [vmem:[#allocation3 + $0x190] sm:$0xff]
        %v2975 = vld [vmem:[#allocation3 + $0x198] sm:$0xff]
        %v2976 = vld [vmem:[#allocation3 + $0x1a0] sm:$0xff]
        %v2977 = vld [vmem:[#allocation3 + $0x1a8] sm:$0xff]
        %v2978 = vld [vmem:[#allocation3 + $0x1b0] sm:$0xff]
        %v2979 = vld [vmem:[#allocation3 + $0x1b8] sm:$0xff]
        %v2980 = vld [vmem:[#allocation3 + $0x1c0] sm:$0xff]
        %v2981 = vld [vmem:[#allocation3 + $0x1c8] sm:$0xff]
        %v2982 = vld [vmem:[#allocation3 + $0x1d0] sm:$0xff]
        %v2983 = vld [vmem:[#allocation3 + $0x1d8] sm:$0xff]
        %v2984 = vld [vmem:[#allocation3 + $0x1e0] sm:$0xff]
        %v2985 = vld [vmem:[#allocation3 + $0x1e8] sm:$0xff]
        %v2986 = vld [vmem:[#allocation3 + $0x1f0] sm:$0xff]
        %v2987 = vld [vmem:[#allocation3 + $0x1f8] sm:$0xff]
        %v2988 = vld [vmem:[#allocation3 + $0x200] sm:$0xff]
        %v2989 = vld [vmem:[#allocation3 + $0x208] sm:$0xff]
        %v2990 = vld [vmem:[#allocation3 + $0x210] sm:$0xff]
        %v2991 = vld [vmem:[#allocation3 + $0x218] sm:$0xff]
        %v2992 = vld [vmem:[#allocation3 + $0x220] sm:$0xff]
        %v2993 = vld [vmem:[#allocation3 + $0x228] sm:$0xff]
        %v2994 = vld [vmem:[#allocation3 + $0x230] sm:$0xff]
        %v2995 = vld [vmem:[#allocation3 + $0x238] sm:$0xff]
        %v2996 = vld [vmem:[#allocation3 + $0x240] sm:$0xff]
        %v2997 = vld [vmem:[#allocation3 + $0x248] sm:$0xff]
        %v2998 = vld [vmem:[#allocation3 + $0x250] sm:$0xff]
        %v2999 = vld [vmem:[#allocation3 + $0x258] sm:$0xff]
        %v3000 = vld [vmem:[#allocation3 + $0x260] sm:$0xff]
        %v3001 = vld [vmem:[#allocation3 + $0x268] sm:$0xff]
        %v3002 = vld [vmem:[#allocation3 + $0x270] sm:$0xff]
        %v3003 = vld [vmem:[#allocation3 + $0x278] sm:$0xff]
        %v3004 = vld [vmem:[#allocation3 + $0x280] sm:$0xff]
        %v3005 = vld [vmem:[#allocation3 + $0x288] sm:$0xff]
        %v3006 = vld [vmem:[#allocation3 + $0x290] sm:$0xff]
        %v3007 = vld [vmem:[#allocation3 + $0x298] sm:$0xff]
        %v3008 = vld [vmem:[#allocation3 + $0x2a0] sm:$0xff]
        %v3009 = vld [vmem:[#allocation3 + $0x2a8] sm:$0xff]
        %v3010 = vld [vmem:[#allocation3 + $0x2b0] sm:$0xff]
        %v3011 = vld [vmem:[#allocation3 + $0x2b8] sm:$0xff]
        %v3012 = vld [vmem:[#allocation3 + $0x2c0] sm:$0xff]
        %v3013 = vld [vmem:[#allocation3 + $0x2c8] sm:$0xff]
        %v3014 = vld [vmem:[#allocation3 + $0x2d0] sm:$0xff]
        %v3015 = vld [vmem:[#allocation3 + $0x2d8] sm:$0xff]
        %v3016 = vld [vmem:[#allocation3 + $0x2e0] sm:$0xff]
        %v3017 = vld [vmem:[#allocation3 + $0x2e8] sm:$0xff]
        %v3018 = vld [vmem:[#allocation3 + $0x2f0] sm:$0xff]
        %v3019 = vld [vmem:[#allocation3 + $0x2f8] sm:$0xff]
        %v3020 = vld [vmem:[#allocation3 + $0x300] sm:$0xff]
        %v3021 = vld [vmem:[#allocation3 + $0x308] sm:$0xff]
        %v3022 = vld [vmem:[%s3] sm:$0xff]
        %v3023 = vld [vmem:[%s3 + $0x8] sm:$0xff]
        %v3024 = vld [vmem:[%s3 + $0x10] sm:$0xff]
        %v3025 = vld [vmem:[%s3 + $0x18] sm:$0xff]
        %v3026 = vld [vmem:[%s3 + $0x20] sm:$0xff]
        %v3027 = vld [vmem:[%s3 + $0x28] sm:$0xff]
        %v3028 = vld [vmem:[%s3 + $0x30] sm:$0xff]
        %v3029 = vld [vmem:[%s3 + $0x38] sm:$0xff]
        %v3030 = vld [vmem:[%s3 + $0x40] sm:$0xff]
        %v3031 = vld [vmem:[%s3 + $0x48] sm:$0xff]
        %v3032 = vld [vmem:[%s3 + $0x50] sm:$0xff]
        %v3033 = vld [vmem:[%s3 + $0x58] sm:$0xff]
        %v3034 = vld [vmem:[%s3 + $0x60] sm:$0xff]
        %v3035 = vld [vmem:[%s3 + $0x68] sm:$0xff]
        %v3036 = vld [vmem:[%s3 + $0x70] sm:$0xff]
        %v3037 = vld [vmem:[%s3 + $0x78] sm:$0xff]
        %v3038 = vld [vmem:[%s3 + $0x80] sm:$0xff]
        %v3039 = vld [vmem:[%s3 + $0x88] sm:$0xff]
        %v3040 = vld [vmem:[%s4] sm:$0x1]
        %v3042 = vlaneseq
        %v3043 = vshrl.u32 %v3042, 7
        %v3044 = vsub.s32 0, %v3043
        %v3045 = vrot.slane %v3040, %v3044
        %v3048 = vsel %vm942, %v2925, 0
        %v3051 = vsel %vm942, %v2927, 0
        %v3054 = vsel %vm942, %v2929, 0
        %v3057 = vsel %vm942, %v2931, 0
        %v3060 = vsel %vm942, %v2933, 0
        %v3063 = vsel %vm942, %v2935, 0
        %v3066 = vsel %vm942, %v2937, 0
        %v3069 = vsel %vm942, %v2939, 0
        %v3072 = vsel %vm942, %v2941, 0
        %v3075 = vsel %vm942, %v2943, 0
        %v3078 = vsel %vm942, %v2945, 0
        %v3081 = vsel %vm942, %v2947, 0
        %v3084 = vsel %vm942, %v2949, 0
        %v3087 = vsel %vm942, %v2951, 0
        %v3090 = vsel %vm942, %v2953, 0
        %v3093 = vsel %vm942, %v2955, 0
        %v3096 = vsel %vm942, %v2957, 0
        %v3099 = vsel %vm942, %v2959, 0
        %v3102 = vsel %vm942, %v2961, 0
        %v3105 = vsel %vm942, %v2963, 0
        %v3108 = vsel %vm942, %v2965, 0
        %v3111 = vsel %vm942, %v2967, 0
        %v3114 = vsel %vm942, %v2969, 0
        %v3117 = vsel %vm942, %v2971, 0
        %v3120 = vsel %vm942, %v2973, 0
        %v3123 = vsel %vm942, %v2975, 0
        %v3126 = vsel %vm942, %v2977, 0
        %v3129 = vsel %vm942, %v2979, 0
        %v3132 = vsel %vm942, %v2981, 0
        %v3135 = vsel %vm942, %v2983, 0
        %v3138 = vsel %vm942, %v2985, 0
        %v3141 = vsel %vm942, %v2987, 0
        %v3144 = vsel %vm942, %v2989, 0
        %v3147 = vsel %vm942, %v2991, 0
        %v3150 = vsel %vm942, %v2993, 0
        %v3153 = vsel %vm942, %v2995, 0
        %v3156 = vsel %vm942, %v2997, 0
        %v3159 = vsel %vm942, %v2999, 0
        %v3162 = vsel %vm942, %v3001, 0
        %v3165 = vsel %vm942, %v3003, 0
        %v3168 = vsel %vm942, %v3005, 0
        %v3171 = vsel %vm942, %v3007, 0
        %v3174 = vsel %vm942, %v3009, 0
        %v3177 = vsel %vm942, %v3011, 0
        %v3180 = vsel %vm942, %v3013, 0
        %v3183 = vsel %vm942, %v3015, 0
        %v3186 = vsel %vm942, %v3017, 0
        %v3189 = vsel %vm942, %v3019, 0
        %v3192 = vsel %vm942, %v3021, 0
        %3194 = vmatprep.subr.mxu0 0.0
        %3195 = vmatpush1.msra.mxu0 %v3037
        %3196 = vmatprep.subr.mxu0 0.0
        %3197 = vmatpush1.msra.mxu0 %v3036
        %3198 = vmatprep.subr.mxu0 0.0
        %3199 = vmatpush1.msra.mxu0 %v3035
        %3200 = vmatprep.subr.mxu0 0.0
        %3201 = vmatpush1.msra.mxu0 %v3034
        %3202 = vmatprep.subr.mxu0 0.0
        %3203 = vmatpush1.msra.mxu0 %v3033
        %3204 = vmatprep.subr.mxu0 0.0
        %3205 = vmatpush1.msra.mxu0 %v3032
        %3206 = vmatprep.subr.mxu0 0.0
        %3207 = vmatpush1.msra.mxu0 %v3031
        %3208 = vmatprep.subr.mxu0 0.0
        %3209 = vmatpush1.msra.mxu0 %v3030
        %3210 = vmatprep.subr.mxu0 0.0
        %3211 = vmatpush1.msra.mxu0 %v3029
        %3212 = vmatprep.subr.mxu0 0.0
        %3213 = vmatpush1.msra.mxu0 %v3028
        %3214 = vmatprep.subr.mxu0 0.0
        %3215 = vmatpush1.msra.mxu0 %v3027
        %3216 = vmatprep.subr.mxu0 0.0
        %3217 = vmatpush1.msra.mxu0 %v3026
        %3218 = vmatprep.subr.mxu0 0.0
        %3219 = vmatpush1.msra.mxu0 %v3025
        %3220 = vmatprep.subr.mxu0 0.0
        %3221 = vmatpush1.msra.mxu0 %v3024
        %3222 = vmatprep.subr.mxu0 0.0
        %3223 = vmatpush1.msra.mxu0 %v3023
        %3224 = vmatprep.subr.mxu0 0.0
        %3225 = vmatpush1.msra.mxu0 %v3022
        %3226 = vmatprep.subr.mxu0 0.0
        %3227 = vmatpush2.msra.mxu0 0.0
        %3228 = vmatprep.subr.mxu0 0.0
        %3229 = vmatpush2.msra.mxu0 0.0
        %3230 = vmatprep.subr.mxu0 0.0
        %3231 = vmatpush2.msra.mxu0 0.0
        %3232 = vmatprep.subr.mxu0 0.0
        %3233 = vmatpush2.msra.mxu0 0.0
        %3234 = vmatprep.subr.mxu0 0.0
        %3235 = vmatpush2.msra.mxu0 0.0
        %3236 = vmatprep.subr.mxu0 0.0
        %3237 = vmatpush2.msra.mxu0 0.0
        %3238 = vmatprep.subr.mxu0 0.0
        %3239 = vmatpush2.msra.mxu0 0.0
        %3240 = vmatprep.subr.mxu0 0.0
        %3241 = vmatpush2.msra.mxu0 0.0
        %3242 = vmatprep.subr.mxu0 0.0
        %3243 = vmatpush2.msra.mxu0 0.0
        %3244 = vmatprep.subr.mxu0 0.0
        %3245 = vmatpush2.msra.mxu0 0.0
        %3246 = vmatprep.subr.mxu0 0.0
        %3247 = vmatpush2.msra.mxu0 0.0
        %3248 = vmatprep.subr.mxu0 0.0
        %3249 = vmatpush2.msra.mxu0 0.0
        %3250 = vmatprep.subr.mxu0 0.0
        %3251 = vmatpush2.msra.mxu0 0.0
        %3252 = vmatprep.subr.mxu0 0.0
        %3253 = vmatpush2.msra.mxu0 0.0
        %3254 = vmatprep.subr.mxu0 0.0
        %3255 = vmatpush2.msra.mxu0 %v3039
        %3256 = vmatprep.subr.mxu0 0.0
        %3257 = vmatpush2.msra.mxu0 %v3038
        %3258 = vmatprep.mubr.f32.mxu0 %v3048
        %3259 = vmatmul.mubr.f32.gmra.mxu0 %v2924
        %v3260 = vpop.f32.mrf.mxu0
        %v3261 = vadd.f32 %v3045, %v3260
        %v3262 = vpop.f32.mrf.mxu0
        %3263 = vmatprep.mubr.f32.mxu0 %v3051
        %3264 = vmatmul.mubr.f32.gmra.mxu0 %v2926
        %v3265 = vpop.f32.mrf.mxu0
        %v3266 = vadd.f32 %v3045, %v3265
        %v3267 = vpop.f32.mrf.mxu0
        %3268 = vmatprep.mubr.f32.mxu0 %v3054
        %3269 = vmatmul.mubr.f32.gmra.mxu0 %v2928
        %v3270 = vpop.f32.mrf.mxu0
        %v3271 = vadd.f32 %v3045, %v3270
        %v3272 = vpop.f32.mrf.mxu0
        %3273 = vmatprep.mubr.f32.mxu0 %v3057
        %3274 = vmatmul.mubr.f32.gmra.mxu0 %v2930
        %v3275 = vpop.f32.mrf.mxu0
        %v3276 = vadd.f32 %v3045, %v3275
        %v3277 = vpop.f32.mrf.mxu0
        %3278 = vmatprep.mubr.f32.mxu0 %v3060
        %3279 = vmatmul.mubr.f32.gmra.mxu0 %v2932
        %v3280 = vpop.f32.mrf.mxu0
        %v3281 = vadd.f32 %v3045, %v3280
        %v3282 = vpop.f32.mrf.mxu0
        %3283 = vmatprep.mubr.f32.mxu0 %v3063
        %3284 = vmatmul.mubr.f32.gmra.mxu0 %v2934
        %v3285 = vpop.f32.mrf.mxu0
        %v3286 = vadd.f32 %v3045, %v3285
        %v3287 = vpop.f32.mrf.mxu0
        %3288 = vmatprep.mubr.f32.mxu0 %v3066
        %3289 = vmatmul.mubr.f32.gmra.mxu0 %v2936
        %v3290 = vpop.f32.mrf.mxu0
        %v3291 = vadd.f32 %v3045, %v3290
        %v3292 = vpop.f32.mrf.mxu0
        %3293 = vmatprep.mubr.f32.mxu0 %v3069
        %3294 = vmatmul.mubr.f32.gmra.mxu0 %v2938
        %v3295 = vpop.f32.mrf.mxu0
        %v3296 = vadd.f32 %v3045, %v3295
        %v3297 = vpop.f32.mrf.mxu0
        %3298 = vmatprep.mubr.f32.mxu0 %v3072
        %3299 = vmatmul.mubr.f32.gmra.mxu0 %v2940
        %v3300 = vpop.f32.mrf.mxu0
        %v3301 = vadd.f32 %v3045, %v3300
        %v3302 = vpop.f32.mrf.mxu0
        %3303 = vmatprep.mubr.f32.mxu0 %v3075
        %3304 = vmatmul.mubr.f32.gmra.mxu0 %v2942
        %v3305 = vpop.f32.mrf.mxu0
        %v3306 = vadd.f32 %v3045, %v3305
        %v3307 = vpop.f32.mrf.mxu0
        %3308 = vmatprep.mubr.f32.mxu0 %v3078
        %3309 = vmatmul.mubr.f32.gmra.mxu0 %v2944
        %v3310 = vpop.f32.mrf.mxu0
        %v3311 = vadd.f32 %v3045, %v3310
        %v3312 = vpop.f32.mrf.mxu0
        %3313 = vmatprep.mubr.f32.mxu0 %v3081
        %3314 = vmatmul.mubr.f32.gmra.mxu0 %v2946
        %v3315 = vpop.f32.mrf.mxu0
        %v3316 = vadd.f32 %v3045, %v3315
        %v3317 = vpop.f32.mrf.mxu0
        %3318 = vmatprep.mubr.f32.mxu0 %v3084
        %3319 = vmatmul.mubr.f32.gmra.mxu0 %v2948
        %v3320 = vpop.f32.mrf.mxu0
        %v3321 = vadd.f32 %v3045, %v3320
        %v3322 = vpop.f32.mrf.mxu0
        %3323 = vmatprep.mubr.f32.mxu0 %v3087
        %3324 = vmatmul.mubr.f32.gmra.mxu0 %v2950
        %v3325 = vpop.f32.mrf.mxu0
        %v3326 = vadd.f32 %v3045, %v3325
        %v3327 = vpop.f32.mrf.mxu0
        %3328 = vmatprep.mubr.f32.mxu0 %v3090
        %3329 = vmatmul.mubr.f32.gmra.mxu0 %v2952
        %v3330 = vpop.f32.mrf.mxu0
        %v3331 = vadd.f32 %v3045, %v3330
        %v3332 = vpop.f32.mrf.mxu0
        %3333 = vmatprep.mubr.f32.mxu0 %v3093
        %3334 = vmatmul.mubr.f32.gmra.mxu0 %v2954
        %v3335 = vpop.f32.mrf.mxu0
        %v3336 = vadd.f32 %v3045, %v3335
        %v3337 = vpop.f32.mrf.mxu0
        %3338 = vmatprep.mubr.f32.mxu0 %v3096
        %3339 = vmatmul.mubr.f32.gmra.mxu0 %v2956
        %v3340 = vpop.f32.mrf.mxu0
        %v3341 = vadd.f32 %v3045, %v3340
        %v3342 = vpop.f32.mrf.mxu0
        %3343 = vmatprep.mubr.f32.mxu0 %v3099
        %3344 = vmatmul.mubr.f32.gmra.mxu0 %v2958
        %v3345 = vpop.f32.mrf.mxu0
        %v3346 = vadd.f32 %v3045, %v3345
        %v3347 = vpop.f32.mrf.mxu0
        %3348 = vmatprep.mubr.f32.mxu0 %v3102
        %3349 = vmatmul.mubr.f32.gmra.mxu0 %v2960
        %v3350 = vpop.f32.mrf.mxu0
        %v3351 = vadd.f32 %v3045, %v3350
        %v3352 = vpop.f32.mrf.mxu0
        %3353 = vmatprep.mubr.f32.mxu0 %v3105
        %3354 = vmatmul.mubr.f32.gmra.mxu0 %v2962
        %v3355 = vpop.f32.mrf.mxu0
        %v3356 = vadd.f32 %v3045, %v3355
        %v3357 = vpop.f32.mrf.mxu0
        %3358 = vmatprep.mubr.f32.mxu0 %v3108
        %3359 = vmatmul.mubr.f32.gmra.mxu0 %v2964
        %v3360 = vpop.f32.mrf.mxu0
        %v3361 = vadd.f32 %v3045, %v3360
        %v3362 = vpop.f32.mrf.mxu0
        %3363 = vmatprep.mubr.f32.mxu0 %v3111
        %3364 = vmatmul.mubr.f32.gmra.mxu0 %v2966
        %v3365 = vpop.f32.mrf.mxu0
        %v3366 = vadd.f32 %v3045, %v3365
        %v3367 = vpop.f32.mrf.mxu0
        %3368 = vmatprep.mubr.f32.mxu0 %v3114
        %3369 = vmatmul.mubr.f32.gmra.mxu0 %v2968
        %v3370 = vpop.f32.mrf.mxu0
        %v3371 = vadd.f32 %v3045, %v3370
        %v3372 = vpop.f32.mrf.mxu0
        %3373 = vmatprep.mubr.f32.mxu0 %v3117
        %3374 = vmatmul.mubr.f32.gmra.mxu0 %v2970
        %v3375 = vpop.f32.mrf.mxu0
        %v3376 = vadd.f32 %v3045, %v3375
        %v3377 = vpop.f32.mrf.mxu0
        %3378 = vmatprep.mubr.f32.mxu0 %v3120
        %3379 = vmatmul.mubr.f32.gmra.mxu0 %v2972
        %v3380 = vpop.f32.mrf.mxu0
        %v3381 = vadd.f32 %v3045, %v3380
        %v3382 = vpop.f32.mrf.mxu0
        %3383 = vmatprep.mubr.f32.mxu0 %v3123
        %3384 = vmatmul.mubr.f32.gmra.mxu0 %v2974
        %v3385 = vpop.f32.mrf.mxu0
        %v3386 = vadd.f32 %v3045, %v3385
        %v3387 = vpop.f32.mrf.mxu0
        %3388 = vmatprep.mubr.f32.mxu0 %v3126
        %3389 = vmatmul.mubr.f32.gmra.mxu0 %v2976
        %v3390 = vpop.f32.mrf.mxu0
        %v3391 = vadd.f32 %v3045, %v3390
        %v3392 = vpop.f32.mrf.mxu0
        %3393 = vmatprep.mubr.f32.mxu0 %v3129
        %3394 = vmatmul.mubr.f32.gmra.mxu0 %v2978
        %v3395 = vpop.f32.mrf.mxu0
        %v3396 = vadd.f32 %v3045, %v3395
        %v3397 = vpop.f32.mrf.mxu0
        %3398 = vmatprep.mubr.f32.mxu0 %v3132
        %3399 = vmatmul.mubr.f32.gmra.mxu0 %v2980
        %v3400 = vpop.f32.mrf.mxu0
        %v3401 = vadd.f32 %v3045, %v3400
        %v3402 = vpop.f32.mrf.mxu0
        %3403 = vmatprep.mubr.f32.mxu0 %v3135
        %3404 = vmatmul.mubr.f32.gmra.mxu0 %v2982
        %v3405 = vpop.f32.mrf.mxu0
        %v3406 = vadd.f32 %v3045, %v3405
        %v3407 = vpop.f32.mrf.mxu0
        %3408 = vmatprep.mubr.f32.mxu0 %v3138
        %3409 = vmatmul.mubr.f32.gmra.mxu0 %v2984
        %v3410 = vpop.f32.mrf.mxu0
        %v3411 = vadd.f32 %v3045, %v3410
        %v3412 = vpop.f32.mrf.mxu0
        %3413 = vmatprep.mubr.f32.mxu0 %v3141
        %3414 = vmatmul.mubr.f32.gmra.mxu0 %v2986
        %v3415 = vpop.f32.mrf.mxu0
        %v3416 = vadd.f32 %v3045, %v3415
        %v3417 = vpop.f32.mrf.mxu0
        %3418 = vmatprep.mubr.f32.mxu0 %v3144
        %3419 = vmatmul.mubr.f32.gmra.mxu0 %v2988
        %v3420 = vpop.f32.mrf.mxu0
        %v3421 = vadd.f32 %v3045, %v3420
        %v3422 = vpop.f32.mrf.mxu0
        %3423 = vmatprep.mubr.f32.mxu0 %v3147
        %3424 = vmatmul.mubr.f32.gmra.mxu0 %v2990
        %v3425 = vpop.f32.mrf.mxu0
        %v3426 = vadd.f32 %v3045, %v3425
        %v3427 = vpop.f32.mrf.mxu0
        %3428 = vmatprep.mubr.f32.mxu0 %v3150
        %3429 = vmatmul.mubr.f32.gmra.mxu0 %v2992
        %v3430 = vpop.f32.mrf.mxu0
        %v3431 = vadd.f32 %v3045, %v3430
        %v3432 = vpop.f32.mrf.mxu0
        %3433 = vmatprep.mubr.f32.mxu0 %v3153
        %3434 = vmatmul.mubr.f32.gmra.mxu0 %v2994
        %v3435 = vpop.f32.mrf.mxu0
        %v3436 = vadd.f32 %v3045, %v3435
        %v3437 = vpop.f32.mrf.mxu0
        %3438 = vmatprep.mubr.f32.mxu0 %v3156
        %3439 = vmatmul.mubr.f32.gmra.mxu0 %v2996
        %v3440 = vpop.f32.mrf.mxu0
        %v3441 = vadd.f32 %v3045, %v3440
        %v3442 = vpop.f32.mrf.mxu0
        %3443 = vmatprep.mubr.f32.mxu0 %v3159
        %3444 = vmatmul.mubr.f32.gmra.mxu0 %v2998
        %v3445 = vpop.f32.mrf.mxu0
        %v3446 = vadd.f32 %v3045, %v3445
        %v3447 = vpop.f32.mrf.mxu0
        %3448 = vmatprep.mubr.f32.mxu0 %v3162
        %3449 = vmatmul.mubr.f32.gmra.mxu0 %v3000
        %v3450 = vpop.f32.mrf.mxu0
        %v3451 = vadd.f32 %v3045, %v3450
        %v3452 = vpop.f32.mrf.mxu0
        %3453 = vmatprep.mubr.f32.mxu0 %v3165
        %3454 = vmatmul.mubr.f32.gmra.mxu0 %v3002
        %v3455 = vpop.f32.mrf.mxu0
        %v3456 = vadd.f32 %v3045, %v3455
        %v3457 = vpop.f32.mrf.mxu0
        %3458 = vmatprep.mubr.f32.mxu0 %v3168
        %3459 = vmatmul.mubr.f32.gmra.mxu0 %v3004
        %v3460 = vpop.f32.mrf.mxu0
        %v3461 = vadd.f32 %v3045, %v3460
        %v3462 = vpop.f32.mrf.mxu0
        %3463 = vmatprep.mubr.f32.mxu0 %v3171
        %3464 = vmatmul.mubr.f32.gmra.mxu0 %v3006
        %v3465 = vpop.f32.mrf.mxu0
        %v3466 = vadd.f32 %v3045, %v3465
        %v3467 = vpop.f32.mrf.mxu0
        %3468 = vmatprep.mubr.f32.mxu0 %v3174
        %3469 = vmatmul.mubr.f32.gmra.mxu0 %v3008
        %v3470 = vpop.f32.mrf.mxu0
        %v3471 = vadd.f32 %v3045, %v3470
        %v3472 = vpop.f32.mrf.mxu0
        %3473 = vmatprep.mubr.f32.mxu0 %v3177
        %3474 = vmatmul.mubr.f32.gmra.mxu0 %v3010
        %v3475 = vpop.f32.mrf.mxu0
        %v3476 = vadd.f32 %v3045, %v3475
        %v3477 = vpop.f32.mrf.mxu0
        %3478 = vmatprep.mubr.f32.mxu0 %v3180
        %3479 = vmatmul.mubr.f32.gmra.mxu0 %v3012
        %v3480 = vpop.f32.mrf.mxu0
        %v3481 = vadd.f32 %v3045, %v3480
        %v3482 = vpop.f32.mrf.mxu0
        %3483 = vmatprep.mubr.f32.mxu0 %v3183
        %3484 = vmatmul.mubr.f32.gmra.mxu0 %v3014
        %v3485 = vpop.f32.mrf.mxu0
        %v3486 = vadd.f32 %v3045, %v3485
        %v3487 = vpop.f32.mrf.mxu0
        %3488 = vmatprep.mubr.f32.mxu0 %v3186
        %3489 = vmatmul.mubr.f32.gmra.mxu0 %v3016
        %v3490 = vpop.f32.mrf.mxu0
        %v3491 = vadd.f32 %v3045, %v3490
        %v3492 = vpop.f32.mrf.mxu0
        %3493 = vmatprep.mubr.f32.mxu0 %v3189
        %3494 = vmatmul.mubr.f32.gmra.mxu0 %v3018
        %v3495 = vpop.f32.mrf.mxu0
        %v3496 = vadd.f32 %v3045, %v3495
        %v3497 = vpop.f32.mrf.mxu0
        %3498 = vmatprep.mubr.f32.mxu0 %v3192
        %3499 = vmatmul.mubr.f32.gmra.mxu0 %v3020
        %v3500 = vpop.f32.mrf.mxu0
        %v3501 = vadd.f32 %v3045, %v3500
        %v3502 = vpop.f32.mrf.mxu0
        %3503 = vdwg.mxu0
        %v3504 = vmax.f32 %v3261, 0.0
        %v3505 = vmax.f32 %v3266, 0.0
        %v3506 = vmax.f32 %v3271, 0.0
        %v3507 = vmax.f32 %v3276, 0.0
        %v3508 = vmax.f32 %v3281, 0.0
        %v3509 = vmax.f32 %v3286, 0.0
        %v3510 = vmax.f32 %v3291, 0.0
        %v3511 = vmax.f32 %v3296, 0.0
        %v3512 = vmax.f32 %v3301, 0.0
        %v3513 = vmax.f32 %v3306, 0.0
        %v3514 = vmax.f32 %v3311, 0.0
        %v3515 = vmax.f32 %v3316, 0.0
        %v3516 = vmax.f32 %v3321, 0.0
        %v3517 = vmax.f32 %v3326, 0.0
        %v3518 = vmax.f32 %v3331, 0.0
        %v3519 = vmax.f32 %v3336, 0.0
        %v3520 = vmax.f32 %v3341, 0.0
        %v3521 = vmax.f32 %v3346, 0.0
        %v3522 = vmax.f32 %v3351, 0.0
        %v3523 = vmax.f32 %v3356, 0.0
        %v3524 = vmax.f32 %v3361, 0.0
        %v3525 = vmax.f32 %v3366, 0.0
        %v3526 = vmax.f32 %v3371, 0.0
        %v3527 = vmax.f32 %v3376, 0.0
        %v3528 = vmax.f32 %v3381, 0.0
        %v3529 = vmax.f32 %v3386, 0.0
        %v3530 = vmax.f32 %v3391, 0.0
        %v3531 = vmax.f32 %v3396, 0.0
        %v3532 = vmax.f32 %v3401, 0.0
        %v3533 = vmax.f32 %v3406, 0.0
        %v3534 = vmax.f32 %v3411, 0.0
        %v3535 = vmax.f32 %v3416, 0.0
        %v3536 = vmax.f32 %v3421, 0.0
        %v3537 = vmax.f32 %v3426, 0.0
        %v3538 = vmax.f32 %v3431, 0.0
        %v3539 = vmax.f32 %v3436, 0.0
        %v3540 = vmax.f32 %v3441, 0.0
        %v3541 = vmax.f32 %v3446, 0.0
        %v3542 = vmax.f32 %v3451, 0.0
        %v3543 = vmax.f32 %v3456, 0.0
        %v3544 = vmax.f32 %v3461, 0.0
        %v3545 = vmax.f32 %v3466, 0.0
        %v3546 = vmax.f32 %v3471, 0.0
        %v3547 = vmax.f32 %v3476, 0.0
        %v3548 = vmax.f32 %v3481, 0.0
        %v3549 = vmax.f32 %v3486, 0.0
        %v3550 = vmax.f32 %v3491, 0.0
        %v3551 = vmax.f32 %v3496, 0.0
        %v3552 = vmax.f32 %v3501, 0.0
        %vm3553 = vcmask 261120
        %3554 = vst.msk [vmem:[#allocation4] sm:$0xff] %vm3553, %v3504
        %3555 = vst.msk [vmem:[#allocation4 + $0x8] sm:$0xff] %vm3553, %v3505
        %3556 = vst.msk [vmem:[#allocation4 + $0x10] sm:$0xff] %vm3553, %v3506
        %3557 = vst.msk [vmem:[#allocation4 + $0x18] sm:$0xff] %vm3553, %v3507
        %3558 = vst.msk [vmem:[#allocation4 + $0x20] sm:$0xff] %vm3553, %v3508
        %3559 = vst.msk [vmem:[#allocation4 + $0x28] sm:$0xff] %vm3553, %v3509
        %3560 = vst.msk [vmem:[#allocation4 + $0x30] sm:$0xff] %vm3553, %v3510
        %3561 = vst.msk [vmem:[#allocation4 + $0x38] sm:$0xff] %vm3553, %v3511
        %3562 = vst.msk [vmem:[#allocation4 + $0x40] sm:$0xff] %vm3553, %v3512
        %3563 = vst.msk [vmem:[#allocation4 + $0x48] sm:$0xff] %vm3553, %v3513
        %3564 = vst.msk [vmem:[#allocation4 + $0x50] sm:$0xff] %vm3553, %v3514
        %3565 = vst.msk [vmem:[#allocation4 + $0x58] sm:$0xff] %vm3553, %v3515
        %3566 = vst.msk [vmem:[#allocation4 + $0x60] sm:$0xff] %vm3553, %v3516
        %3567 = vst.msk [vmem:[#allocation4 + $0x68] sm:$0xff] %vm3553, %v3517
        %3568 = vst.msk [vmem:[#allocation4 + $0x70] sm:$0xff] %vm3553, %v3518
        %3569 = vst.msk [vmem:[#allocation4 + $0x78] sm:$0xff] %vm3553, %v3519
        %3570 = vst.msk [vmem:[#allocation4 + $0x80] sm:$0xff] %vm3553, %v3520
        %3571 = vst.msk [vmem:[#allocation4 + $0x88] sm:$0xff] %vm3553, %v3521
        %3572 = vst.msk [vmem:[#allocation4 + $0x90] sm:$0xff] %vm3553, %v3522
        %3573 = vst.msk [vmem:[#allocation4 + $0x98] sm:$0xff] %vm3553, %v3523
        %3574 = vst.msk [vmem:[#allocation4 + $0xa0] sm:$0xff] %vm3553, %v3524
        %3575 = vst.msk [vmem:[#allocation4 + $0xa8] sm:$0xff] %vm3553, %v3525
        %3576 = vst.msk [vmem:[#allocation4 + $0xb0] sm:$0xff] %vm3553, %v3526
        %3577 = vst.msk [vmem:[#allocation4 + $0xb8] sm:$0xff] %vm3553, %v3527
        %3578 = vst.msk [vmem:[#allocation4 + $0xc0] sm:$0xff] %vm3553, %v3528
        %3579 = vst.msk [vmem:[#allocation4 + $0xc8] sm:$0xff] %vm3553, %v3529
        %3580 = vst.msk [vmem:[#allocation4 + $0xd0] sm:$0xff] %vm3553, %v3530
        %3581 = vst.msk [vmem:[#allocation4 + $0xd8] sm:$0xff] %vm3553, %v3531
        %3582 = vst.msk [vmem:[#allocation4 + $0xe0] sm:$0xff] %vm3553, %v3532
        %3583 = vst.msk [vmem:[#allocation4 + $0xe8] sm:$0xff] %vm3553, %v3533
        %3584 = vst.msk [vmem:[#allocation4 + $0xf0] sm:$0xff] %vm3553, %v3534
        %3585 = vst.msk [vmem:[#allocation4 + $0xf8] sm:$0xff] %vm3553, %v3535
        %3586 = vst.msk [vmem:[#allocation4 + $0x100] sm:$0xff] %vm3553, %v3536
        %3587 = vst.msk [vmem:[#allocation4 + $0x108] sm:$0xff] %vm3553, %v3537
        %3588 = vst.msk [vmem:[#allocation4 + $0x110] sm:$0xff] %vm3553, %v3538
        %3589 = vst.msk [vmem:[#allocation4 + $0x118] sm:$0xff] %vm3553, %v3539
        %3590 = vst.msk [vmem:[#allocation4 + $0x120] sm:$0xff] %vm3553, %v3540
        %3591 = vst.msk [vmem:[#allocation4 + $0x128] sm:$0xff] %vm3553, %v3541
        %3592 = vst.msk [vmem:[#allocation4 + $0x130] sm:$0xff] %vm3553, %v3542
        %3593 = vst.msk [vmem:[#allocation4 + $0x138] sm:$0xff] %vm3553, %v3543
        %3594 = vst.msk [vmem:[#allocation4 + $0x140] sm:$0xff] %vm3553, %v3544
        %3595 = vst.msk [vmem:[#allocation4 + $0x148] sm:$0xff] %vm3553, %v3545
        %3596 = vst.msk [vmem:[#allocation4 + $0x150] sm:$0xff] %vm3553, %v3546
        %3597 = vst.msk [vmem:[#allocation4 + $0x158] sm:$0xff] %vm3553, %v3547
        %3598 = vst.msk [vmem:[#allocation4 + $0x160] sm:$0xff] %vm3553, %v3548
        %3599 = vst.msk [vmem:[#allocation4 + $0x168] sm:$0xff] %vm3553, %v3549
        %3600 = vst.msk [vmem:[#allocation4 + $0x170] sm:$0xff] %vm3553, %v3550
        %3601 = vst.msk [vmem:[#allocation4 + $0x178] sm:$0xff] %vm3553, %v3551
        %3602 = vst.msk [vmem:[#allocation4 + $0x180] sm:$0xff] %vm3553, %v3552
        %v3603 = vld [vmem:[#allocation4] sm:$0xff]
        %3604 = vst.msk [vmem:[#allocation5] sm:$0xff] %vm3553, %v3603
        %v3605 = vld [vmem:[#allocation4 + $0x8] sm:$0xff]
        %3607 = vrot.lane.b32.xlu0 %v3605, 32
        %v3608 = vpop.permute.xlu0 %3607
        %vm3610 = vcmask 523520
        %3611 = vst.msk [vmem:[#allocation5] sm:$0xff] %vm3610, %v3608
        %v3612 = vld [vmem:[#allocation4 + $0x10] sm:$0xff]
        %3614 = vrot.lane.b32.xlu0 %v3612, 64
        %v3615 = vpop.permute.xlu0 %3614
        %vm3617 = vcmask 785920
        %3618 = vst.msk [vmem:[#allocation5] sm:$0xff] %vm3617, %v3615
        %v3619 = vld [vmem:[#allocation4 + $0x18] sm:$0xff]
        %3621 = vrot.lane.b32.xlu0 %v3619, 96
        %v3622 = vpop.permute.xlu0 %3621
        %vm3624 = vcmask 1048320
        %3625 = vst.msk [vmem:[#allocation5] sm:$0xff] %vm3624, %v3622
        %v3626 = vld [vmem:[#allocation4 + $0x20] sm:$0xff]
        %3627 = vst.msk [vmem:[#allocation5 + $0x8] sm:$0xff] %vm3553, %v3626
        %v3628 = vld [vmem:[#allocation4 + $0x28] sm:$0xff]
        %3630 = vrot.lane.b32.xlu0 %v3628, 32
        %v3631 = vpop.permute.xlu0 %3630
        %3633 = vst.msk [vmem:[#allocation5 + $0x8] sm:$0xff] %vm3610, %v3631
        %v3634 = vld [vmem:[#allocation4 + $0x30] sm:$0xff]
        %3636 = vrot.lane.b32.xlu0 %v3634, 64
        %v3637 = vpop.permute.xlu0 %3636
        %3639 = vst.msk [vmem:[#allocation5 + $0x8] sm:$0xff] %vm3617, %v3637
        %v3640 = vld [vmem:[#allocation4 + $0x38] sm:$0xff]
        %3642 = vrot.lane.b32.xlu0 %v3640, 96
        %v3643 = vpop.permute.xlu0 %3642
        %3645 = vst.msk [vmem:[#allocation5 + $0x8] sm:$0xff] %vm3624, %v3643
        %v3646 = vld [vmem:[#allocation4 + $0x40] sm:$0xff]
        %3647 = vst.msk [vmem:[#allocation5 + $0x10] sm:$0xff] %vm3553, %v3646
        %v3648 = vld [vmem:[#allocation4 + $0x48] sm:$0xff]
        %3650 = vrot.lane.b32.xlu0 %v3648, 32
        %v3651 = vpop.permute.xlu0 %3650
        %3653 = vst.msk [vmem:[#allocation5 + $0x10] sm:$0xff] %vm3610, %v3651
        %v3654 = vld [vmem:[#allocation4 + $0x50] sm:$0xff]
        %3656 = vrot.lane.b32.xlu0 %v3654, 64
        %v3657 = vpop.permute.xlu0 %3656
        %3659 = vst.msk [vmem:[#allocation5 + $0x10] sm:$0xff] %vm3617, %v3657
        %v3660 = vld [vmem:[#allocation4 + $0x58] sm:$0xff]
        %3662 = vrot.lane.b32.xlu0 %v3660, 96
        %v3663 = vpop.permute.xlu0 %3662
        %3665 = vst.msk [vmem:[#allocation5 + $0x10] sm:$0xff] %vm3624, %v3663
        %v3666 = vld [vmem:[#allocation4 + $0x60] sm:$0xff]
        %3667 = vst.msk [vmem:[#allocation5 + $0x18] sm:$0xff] %vm3553, %v3666
        %v3668 = vld [vmem:[#allocation4 + $0x68] sm:$0xff]
        %3670 = vrot.lane.b32.xlu0 %v3668, 32
        %v3671 = vpop.permute.xlu0 %3670
        %3673 = vst.msk [vmem:[#allocation5 + $0x18] sm:$0xff] %vm3610, %v3671
        %v3674 = vld [vmem:[#allocation4 + $0x70] sm:$0xff]
        %3676 = vrot.lane.b32.xlu0 %v3674, 64
        %v3677 = vpop.permute.xlu0 %3676
        %3679 = vst.msk [vmem:[#allocation5 + $0x18] sm:$0xff] %vm3617, %v3677
        %v3680 = vld [vmem:[#allocation4 + $0x78] sm:$0xff]
        %3682 = vrot.lane.b32.xlu0 %v3680, 96
        %v3683 = vpop.permute.xlu0 %3682
        %3685 = vst.msk [vmem:[#allocation5 + $0x18] sm:$0xff] %vm3624, %v3683
        %v3686 = vld [vmem:[#allocation4 + $0x80] sm:$0xff]
        %3687 = vst.msk [vmem:[#allocation5 + $0x20] sm:$0xff] %vm3553, %v3686
        %v3688 = vld [vmem:[#allocation4 + $0x88] sm:$0xff]
        %3690 = vrot.lane.b32.xlu0 %v3688, 32
        %v3691 = vpop.permute.xlu0 %3690
        %3693 = vst.msk [vmem:[#allocation5 + $0x20] sm:$0xff] %vm3610, %v3691
        %v3694 = vld [vmem:[#allocation4 + $0x90] sm:$0xff]
        %3696 = vrot.lane.b32.xlu0 %v3694, 64
        %v3697 = vpop.permute.xlu0 %3696
        %3699 = vst.msk [vmem:[#allocation5 + $0x20] sm:$0xff] %vm3617, %v3697
        %v3700 = vld [vmem:[#allocation4 + $0x98] sm:$0xff]
        %3702 = vrot.lane.b32.xlu0 %v3700, 96
        %v3703 = vpop.permute.xlu0 %3702
        %3705 = vst.msk [vmem:[#allocation5 + $0x20] sm:$0xff] %vm3624, %v3703
        %v3706 = vld [vmem:[#allocation4 + $0xa0] sm:$0xff]
        %3707 = vst.msk [vmem:[#allocation5 + $0x28] sm:$0xff] %vm3553, %v3706
        %v3708 = vld [vmem:[#allocation4 + $0xa8] sm:$0xff]
        %3710 = vrot.lane.b32.xlu0 %v3708, 32
        %v3711 = vpop.permute.xlu0 %3710
        %3713 = vst.msk [vmem:[#allocation5 + $0x28] sm:$0xff] %vm3610, %v3711
        %v3714 = vld [vmem:[#allocation4 + $0xb0] sm:$0xff]
        %3716 = vrot.lane.b32.xlu0 %v3714, 64
        %v3717 = vpop.permute.xlu0 %3716
        %3719 = vst.msk [vmem:[#allocation5 + $0x28] sm:$0xff] %vm3617, %v3717
        %v3720 = vld [vmem:[#allocation4 + $0xb8] sm:$0xff]
        %3722 = vrot.lane.b32.xlu0 %v3720, 96
        %v3723 = vpop.permute.xlu0 %3722
        %3725 = vst.msk [vmem:[#allocation5 + $0x28] sm:$0xff] %vm3624, %v3723
        %v3726 = vld [vmem:[#allocation4 + $0xc0] sm:$0xff]
        %3727 = vst.msk [vmem:[#allocation5 + $0x30] sm:$0xff] %vm3553, %v3726
        %v3728 = vld [vmem:[#allocation4 + $0xc8] sm:$0xff]
        %3730 = vrot.lane.b32.xlu0 %v3728, 32
        %v3731 = vpop.permute.xlu0 %3730
        %3733 = vst.msk [vmem:[#allocation5 + $0x30] sm:$0xff] %vm3610, %v3731
        %v3734 = vld [vmem:[#allocation4 + $0xd0] sm:$0xff]
        %3736 = vrot.lane.b32.xlu0 %v3734, 64
        %v3737 = vpop.permute.xlu0 %3736
        %3739 = vst.msk [vmem:[#allocation5 + $0x30] sm:$0xff] %vm3617, %v3737
        %v3740 = vld [vmem:[#allocation4 + $0xd8] sm:$0xff]
        %3742 = vrot.lane.b32.xlu0 %v3740, 96
        %v3743 = vpop.permute.xlu0 %3742
        %3745 = vst.msk [vmem:[#allocation5 + $0x30] sm:$0xff] %vm3624, %v3743
        %v3746 = vld [vmem:[#allocation4 + $0xe0] sm:$0xff]
        %3747 = vst.msk [vmem:[#allocation5 + $0x38] sm:$0xff] %vm3553, %v3746
        %v3748 = vld [vmem:[#allocation4 + $0xe8] sm:$0xff]
        %3750 = vrot.lane.b32.xlu0 %v3748, 32
        %v3751 = vpop.permute.xlu0 %3750
        %3753 = vst.msk [vmem:[#allocation5 + $0x38] sm:$0xff] %vm3610, %v3751
        %v3754 = vld [vmem:[#allocation4 + $0xf0] sm:$0xff]
        %3756 = vrot.lane.b32.xlu0 %v3754, 64
        %v3757 = vpop.permute.xlu0 %3756
        %3759 = vst.msk [vmem:[#allocation5 + $0x38] sm:$0xff] %vm3617, %v3757
        %v3760 = vld [vmem:[#allocation4 + $0xf8] sm:$0xff]
        %3762 = vrot.lane.b32.xlu0 %v3760, 96
        %v3763 = vpop.permute.xlu0 %3762
        %3765 = vst.msk [vmem:[#allocation5 + $0x38] sm:$0xff] %vm3624, %v3763
        %v3766 = vld [vmem:[#allocation4 + $0x100] sm:$0xff]
        %3767 = vst.msk [vmem:[#allocation5 + $0x40] sm:$0xff] %vm3553, %v3766
        %v3768 = vld [vmem:[#allocation4 + $0x108] sm:$0xff]
        %3770 = vrot.lane.b32.xlu0 %v3768, 32
        %v3771 = vpop.permute.xlu0 %3770
        %3773 = vst.msk [vmem:[#allocation5 + $0x40] sm:$0xff] %vm3610, %v3771
        %v3774 = vld [vmem:[#allocation4 + $0x110] sm:$0xff]
        %3776 = vrot.lane.b32.xlu0 %v3774, 64
        %v3777 = vpop.permute.xlu0 %3776
        %3779 = vst.msk [vmem:[#allocation5 + $0x40] sm:$0xff] %vm3617, %v3777
        %v3780 = vld [vmem:[#allocation4 + $0x118] sm:$0xff]
        %3782 = vrot.lane.b32.xlu0 %v3780, 96
        %v3783 = vpop.permute.xlu0 %3782
        %3785 = vst.msk [vmem:[#allocation5 + $0x40] sm:$0xff] %vm3624, %v3783
        %v3786 = vld [vmem:[#allocation4 + $0x120] sm:$0xff]
        %3787 = vst.msk [vmem:[#allocation5 + $0x48] sm:$0xff] %vm3553, %v3786
        %v3788 = vld [vmem:[#allocation4 + $0x128] sm:$0xff]
        %3790 = vrot.lane.b32.xlu0 %v3788, 32
        %v3791 = vpop.permute.xlu0 %3790
        %3793 = vst.msk [vmem:[#allocation5 + $0x48] sm:$0xff] %vm3610, %v3791
        %v3794 = vld [vmem:[#allocation4 + $0x130] sm:$0xff]
        %3796 = vrot.lane.b32.xlu0 %v3794, 64
        %v3797 = vpop.permute.xlu0 %3796
        %3799 = vst.msk [vmem:[#allocation5 + $0x48] sm:$0xff] %vm3617, %v3797
        %v3800 = vld [vmem:[#allocation4 + $0x138] sm:$0xff]
        %3802 = vrot.lane.b32.xlu0 %v3800, 96
        %v3803 = vpop.permute.xlu0 %3802
        %3805 = vst.msk [vmem:[#allocation5 + $0x48] sm:$0xff] %vm3624, %v3803
        %v3806 = vld [vmem:[#allocation4 + $0x140] sm:$0xff]
        %3807 = vst.msk [vmem:[#allocation5 + $0x50] sm:$0xff] %vm3553, %v3806
        %v3808 = vld [vmem:[#allocation4 + $0x148] sm:$0xff]
        %3810 = vrot.lane.b32.xlu0 %v3808, 32
        %v3811 = vpop.permute.xlu0 %3810
        %3813 = vst.msk [vmem:[#allocation5 + $0x50] sm:$0xff] %vm3610, %v3811
        %v3814 = vld [vmem:[#allocation4 + $0x150] sm:$0xff]
        %3816 = vrot.lane.b32.xlu0 %v3814, 64
        %v3817 = vpop.permute.xlu0 %3816
        %3819 = vst.msk [vmem:[#allocation5 + $0x50] sm:$0xff] %vm3617, %v3817
        %v3820 = vld [vmem:[#allocation4 + $0x158] sm:$0xff]
        %3822 = vrot.lane.b32.xlu0 %v3820, 96
        %v3823 = vpop.permute.xlu0 %3822
        %3825 = vst.msk [vmem:[#allocation5 + $0x50] sm:$0xff] %vm3624, %v3823
        %v3826 = vld [vmem:[#allocation4 + $0x160] sm:$0xff]
        %3827 = vst.msk [vmem:[#allocation5 + $0x58] sm:$0xff] %vm3553, %v3826
        %v3828 = vld [vmem:[#allocation4 + $0x168] sm:$0xff]
        %3830 = vrot.lane.b32.xlu0 %v3828, 32
        %v3831 = vpop.permute.xlu0 %3830
        %3833 = vst.msk [vmem:[#allocation5 + $0x58] sm:$0xff] %vm3610, %v3831
        %v3834 = vld [vmem:[#allocation4 + $0x170] sm:$0xff]
        %3836 = vrot.lane.b32.xlu0 %v3834, 64
        %v3837 = vpop.permute.xlu0 %3836
        %3839 = vst.msk [vmem:[#allocation5 + $0x58] sm:$0xff] %vm3617, %v3837
        %v3840 = vld [vmem:[#allocation4 + $0x178] sm:$0xff]
        %3842 = vrot.lane.b32.xlu0 %v3840, 96
        %v3843 = vpop.permute.xlu0 %3842
        %3845 = vst.msk [vmem:[#allocation5 + $0x58] sm:$0xff] %vm3624, %v3843
        %v3846 = vld [vmem:[#allocation4 + $0x180] sm:$0xff]
        %3847 = vst.msk [vmem:[#allocation5 + $0x60] sm:$0xff] %vm3553, %v3846
        %v3848 = vld [vmem:[#allocation5] sm:$0xff]
        %v3849 = vld [vmem:[#allocation5 + $0x8] sm:$0xff]
        %v3850 = vld [vmem:[#allocation5 + $0x10] sm:$0xff]
        %v3851 = vld [vmem:[#allocation5 + $0x18] sm:$0xff]
        %v3852 = vld [vmem:[#allocation5 + $0x20] sm:$0xff]
        %v3853 = vld [vmem:[#allocation5 + $0x28] sm:$0xff]
        %v3854 = vld [vmem:[#allocation5 + $0x30] sm:$0xff]
        %v3855 = vld [vmem:[#allocation5 + $0x38] sm:$0xff]
        %v3856 = vld [vmem:[#allocation5 + $0x40] sm:$0xff]
        %v3857 = vld [vmem:[#allocation5 + $0x48] sm:$0xff]
        %v3858 = vld [vmem:[#allocation5 + $0x50] sm:$0xff]
        %v3859 = vld [vmem:[#allocation5 + $0x58] sm:$0xff]
        %v3860 = vld [vmem:[#allocation5 + $0x60] sm:$0xff]
        %v3861 = vld [vmem:[%s5] sm:$0xff]
        %v3862 = vld [vmem:[%s5 + $0x8] sm:$0xff]
        %v3863 = vld [vmem:[%s5 + $0x10] sm:$0xff]
        %v3864 = vld [vmem:[%s5 + $0x18] sm:$0xff]
        %v3865 = vld [vmem:[%s5 + $0x20] sm:$0xff]
        %v3866 = vld [vmem:[%s5 + $0x28] sm:$0xff]
        %v3867 = vld [vmem:[%s5 + $0x30] sm:$0xff]
        %v3868 = vld [vmem:[%s5 + $0x38] sm:$0xff]
        %v3869 = vld [vmem:[%s5 + $0x40] sm:$0xff]
        %v3870 = vld [vmem:[%s5 + $0x48] sm:$0xff]
        %v3871 = vld [vmem:[%s5 + $0x50] sm:$0xff]
        %v3872 = vld [vmem:[%s5 + $0x58] sm:$0xff]
        %v3873 = vld [vmem:[%s5 + $0x60] sm:$0xff]
        %v3874 = vld [vmem:[%s5 + $0x68] sm:$0xff]
        %v3875 = vld [vmem:[%s5 + $0x70] sm:$0xff]
        %v3876 = vld [vmem:[%s5 + $0x78] sm:$0xff]
        %v3877 = vld [vmem:[%s5 + $0x80] sm:$0xff]
        %v3878 = vld [vmem:[%s5 + $0x88] sm:$0xff]
        %v3879 = vld [vmem:[%s5 + $0x90] sm:$0xff]
        %v3880 = vld [vmem:[%s5 + $0x98] sm:$0xff]
        %v3881 = vld [vmem:[%s5 + $0xa0] sm:$0xff]
        %v3882 = vld [vmem:[%s5 + $0xa8] sm:$0xff]
        %v3883 = vld [vmem:[%s5 + $0xb0] sm:$0xff]
        %v3884 = vld [vmem:[%s5 + $0xb8] sm:$0xff]
        %v3885 = vld [vmem:[%s5 + $0xc0] sm:$0xff]
        %v3886 = vld [vmem:[%s5 + $0xc8] sm:$0xff]
        %v3887 = vld [vmem:[%s5 + $0xd0] sm:$0xff]
        %v3888 = vld [vmem:[%s5 + $0xd8] sm:$0xff]
        %v3889 = vld [vmem:[%s5 + $0xe0] sm:$0xff]
        %v3890 = vld [vmem:[%s5 + $0xe8] sm:$0xff]
        %v3891 = vld [vmem:[%s5 + $0xf0] sm:$0xff]
        %v3892 = vld [vmem:[%s5 + $0xf8] sm:$0xff]
        %v3893 = vld [vmem:[%s5 + $0x100] sm:$0xff]
        %v3894 = vld [vmem:[%s5 + $0x108] sm:$0xff]
        %v3895 = vld [vmem:[%s5 + $0x110] sm:$0xff]
        %v3896 = vld [vmem:[%s5 + $0x118] sm:$0xff]
        %v3897 = vld [vmem:[%s5 + $0x120] sm:$0xff]
        %v3898 = vld [vmem:[%s5 + $0x128] sm:$0xff]
        %v3899 = vld [vmem:[%s5 + $0x130] sm:$0xff]
        %v3900 = vld [vmem:[%s5 + $0x138] sm:$0xff]
        %v3901 = vld [vmem:[%s5 + $0x140] sm:$0xff]
        %v3902 = vld [vmem:[%s5 + $0x148] sm:$0xff]
        %v3903 = vld [vmem:[%s5 + $0x150] sm:$0xff]
        %v3904 = vld [vmem:[%s5 + $0x158] sm:$0xff]
        %v3905 = vld [vmem:[%s5 + $0x160] sm:$0xff]
        %v3906 = vld [vmem:[%s5 + $0x168] sm:$0xff]
        %v3907 = vld [vmem:[%s5 + $0x170] sm:$0xff]
        %v3908 = vld [vmem:[%s5 + $0x178] sm:$0xff]
        %v3909 = vld [vmem:[%s5 + $0x180] sm:$0xff]
        %v3910 = vld [vmem:[%s5 + $0x188] sm:$0xff]
        %v3911 = vld [vmem:[%s5 + $0x190] sm:$0xff]
        %v3912 = vld [vmem:[%s5 + $0x198] sm:$0xff]
        %v3913 = vld [vmem:[%s5 + $0x1a0] sm:$0xff]
        %v3914 = vld [vmem:[%s5 + $0x1a8] sm:$0xff]
        %v3915 = vld [vmem:[%s5 + $0x1b0] sm:$0xff]
        %v3916 = vld [vmem:[%s5 + $0x1b8] sm:$0xff]
        %v3917 = vld [vmem:[%s5 + $0x1c0] sm:$0xff]
        %v3918 = vld [vmem:[%s5 + $0x1c8] sm:$0xff]
        %v3919 = vld [vmem:[%s5 + $0x1d0] sm:$0xff]
        %v3920 = vld [vmem:[%s5 + $0x1d8] sm:$0xff]
        %v3921 = vld [vmem:[%s5 + $0x1e0] sm:$0xff]
        %v3922 = vld [vmem:[%s5 + $0x1e8] sm:$0xff]
        %v3923 = vld [vmem:[%s5 + $0x1f0] sm:$0xff]
        %v3924 = vld [vmem:[%s5 + $0x1f8] sm:$0xff]
        %v3925 = vld [vmem:[%s5 + $0x200] sm:$0xff]
        %v3926 = vld [vmem:[%s5 + $0x208] sm:$0xff]
        %v3927 = vld [vmem:[%s5 + $0x210] sm:$0xff]
        %v3928 = vld [vmem:[%s5 + $0x218] sm:$0xff]
        %v3929 = vld [vmem:[%s5 + $0x220] sm:$0xff]
        %v3930 = vld [vmem:[%s5 + $0x228] sm:$0xff]
        %v3931 = vld [vmem:[%s5 + $0x230] sm:$0xff]
        %v3932 = vld [vmem:[%s5 + $0x238] sm:$0xff]
        %v3933 = vld [vmem:[%s5 + $0x240] sm:$0xff]
        %v3934 = vld [vmem:[%s5 + $0x248] sm:$0xff]
        %v3935 = vld [vmem:[%s5 + $0x250] sm:$0xff]
        %v3936 = vld [vmem:[%s5 + $0x258] sm:$0xff]
        %v3937 = vld [vmem:[%s5 + $0x260] sm:$0xff]
        %v3938 = vld [vmem:[%s5 + $0x268] sm:$0xff]
        %v3939 = vld [vmem:[%s5 + $0x270] sm:$0xff]
        %v3940 = vld [vmem:[%s5 + $0x278] sm:$0xff]
        %v3941 = vld [vmem:[%s5 + $0x280] sm:$0xff]
        %v3942 = vld [vmem:[%s5 + $0x288] sm:$0xff]
        %v3943 = vld [vmem:[%s5 + $0x290] sm:$0xff]
        %v3944 = vld [vmem:[%s5 + $0x298] sm:$0xff]
        %v3945 = vld [vmem:[%s5 + $0x2a0] sm:$0xff]
        %v3946 = vld [vmem:[%s5 + $0x2a8] sm:$0xff]
        %v3947 = vld [vmem:[%s5 + $0x2b0] sm:$0xff]
        %v3948 = vld [vmem:[%s5 + $0x2b8] sm:$0xff]
        %v3949 = vld [vmem:[%s5 + $0x2c0] sm:$0xff]
        %v3950 = vld [vmem:[%s5 + $0x2c8] sm:$0xff]
        %v3951 = vld [vmem:[%s5 + $0x2d0] sm:$0xff]
        %v3952 = vld [vmem:[%s5 + $0x2d8] sm:$0xff]
        %v3953 = vld [vmem:[%s5 + $0x2e0] sm:$0xff]
        %v3954 = vld [vmem:[%s5 + $0x2e8] sm:$0xff]
        %v3955 = vld [vmem:[%s5 + $0x2f0] sm:$0xff]
        %v3956 = vld [vmem:[%s5 + $0x2f8] sm:$0xff]
        %v3957 = vld [vmem:[%s5 + $0x300] sm:$0xff]
        %v3958 = vld [vmem:[%s5 + $0x308] sm:$0xff]
        %v3959 = vld [vmem:[%s5 + $0x310] sm:$0xff]
        %v3960 = vld [vmem:[%s5 + $0x318] sm:$0xff]
        %v3961 = vld [vmem:[%s5 + $0x320] sm:$0xff]
        %v3962 = vld [vmem:[%s5 + $0x328] sm:$0xff]
        %v3963 = vld [vmem:[%s5 + $0x330] sm:$0xff]
        %v3964 = vld [vmem:[%s5 + $0x338] sm:$0xff]
        %v3965 = vld [vmem:[%s5 + $0x340] sm:$0xff]
        %v3966 = vld [vmem:[%s5 + $0x348] sm:$0xff]
        %v3967 = vld [vmem:[%s5 + $0x350] sm:$0xff]
        %v3968 = vld [vmem:[%s5 + $0x358] sm:$0xff]
        %v3969 = vld [vmem:[%s5 + $0x360] sm:$0xff]
        %v3970 = vld [vmem:[%s5 + $0x368] sm:$0xff]
        %v3971 = vld [vmem:[%s5 + $0x370] sm:$0xff]
        %v3972 = vld [vmem:[%s5 + $0x378] sm:$0xff]
        %v3973 = vld [vmem:[%s5 + $0x380] sm:$0xff]
        %v3974 = vld [vmem:[%s5 + $0x388] sm:$0xff]
        %v3975 = vld [vmem:[%s5 + $0x390] sm:$0xff]
        %v3976 = vld [vmem:[%s5 + $0x398] sm:$0xff]
        %v3977 = vld [vmem:[%s5 + $0x3a0] sm:$0xff]
        %v3978 = vld [vmem:[%s5 + $0x3a8] sm:$0xff]
        %v3979 = vld [vmem:[%s5 + $0x3b0] sm:$0xff]
        %v3980 = vld [vmem:[%s5 + $0x3b8] sm:$0xff]
        %v3981 = vld [vmem:[%s5 + $0x3c0] sm:$0xff]
        %v3982 = vld [vmem:[%s5 + $0x3c8] sm:$0xff]
        %v3983 = vld [vmem:[%s5 + $0x3d0] sm:$0xff]
        %v3984 = vld [vmem:[%s5 + $0x3d8] sm:$0xff]
        %v3985 = vld [vmem:[%s5 + $0x3e0] sm:$0xff]
        %v3986 = vld [vmem:[%s5 + $0x3e8] sm:$0xff]
        %v3987 = vld [vmem:[%s5 + $0x3f0] sm:$0xff]
        %v3988 = vld [vmem:[%s5 + $0x3f8] sm:$0xff]
        %v3989 = vld [vmem:[%s5 + $0x400] sm:$0xff]
        %v3990 = vld [vmem:[%s5 + $0x408] sm:$0xff]
        %v3991 = vld [vmem:[%s5 + $0x410] sm:$0xff]
        %v3992 = vld [vmem:[%s5 + $0x418] sm:$0xff]
        %v3993 = vld [vmem:[%s5 + $0x420] sm:$0xff]
        %v3994 = vld [vmem:[%s5 + $0x428] sm:$0xff]
        %v3995 = vld [vmem:[%s5 + $0x430] sm:$0xff]
        %v3996 = vld [vmem:[%s5 + $0x438] sm:$0xff]
        %v3997 = vld [vmem:[%s5 + $0x440] sm:$0xff]
        %v3998 = vld [vmem:[%s5 + $0x448] sm:$0xff]
        %v3999 = vld [vmem:[%s5 + $0x450] sm:$0xff]
        %v4000 = vld [vmem:[%s5 + $0x458] sm:$0xff]
        %v4001 = vld [vmem:[%s5 + $0x460] sm:$0xff]
        %v4002 = vld [vmem:[%s5 + $0x468] sm:$0xff]
        %v4003 = vld [vmem:[%s5 + $0x470] sm:$0xff]
        %v4004 = vld [vmem:[%s5 + $0x478] sm:$0xff]
        %v4005 = vld [vmem:[%s5 + $0x480] sm:$0xff]
        %v4006 = vld [vmem:[%s5 + $0x488] sm:$0xff]
        %v4007 = vld [vmem:[%s5 + $0x490] sm:$0xff]
        %v4008 = vld [vmem:[%s5 + $0x498] sm:$0xff]
        %v4009 = vld [vmem:[%s5 + $0x4a0] sm:$0xff]
        %v4010 = vld [vmem:[%s5 + $0x4a8] sm:$0xff]
        %v4011 = vld [vmem:[%s5 + $0x4b0] sm:$0xff]
        %v4012 = vld [vmem:[%s5 + $0x4b8] sm:$0xff]
        %v4013 = vld [vmem:[%s5 + $0x4c0] sm:$0xff]
        %v4014 = vld [vmem:[%s5 + $0x4c8] sm:$0xff]
        %v4015 = vld [vmem:[%s5 + $0x4d0] sm:$0xff]
        %v4016 = vld [vmem:[%s5 + $0x4d8] sm:$0xff]
        %v4017 = vld [vmem:[%s5 + $0x4e0] sm:$0xff]
        %v4018 = vld [vmem:[%s5 + $0x4e8] sm:$0xff]
        %v4019 = vld [vmem:[%s5 + $0x4f0] sm:$0xff]
        %v4020 = vld [vmem:[%s5 + $0x4f8] sm:$0xff]
        %v4021 = vld [vmem:[%s5 + $0x500] sm:$0xff]
        %v4022 = vld [vmem:[%s5 + $0x508] sm:$0xff]
        %v4023 = vld [vmem:[%s5 + $0x510] sm:$0xff]
        %v4024 = vld [vmem:[%s5 + $0x518] sm:$0xff]
        %v4025 = vld [vmem:[%s5 + $0x520] sm:$0xff]
        %v4026 = vld [vmem:[%s5 + $0x528] sm:$0xff]
        %v4027 = vld [vmem:[%s5 + $0x530] sm:$0xff]
        %v4028 = vld [vmem:[%s5 + $0x538] sm:$0xff]
        %v4029 = vld [vmem:[%s5 + $0x540] sm:$0xff]
        %v4030 = vld [vmem:[%s5 + $0x548] sm:$0xff]
        %v4031 = vld [vmem:[%s5 + $0x550] sm:$0xff]
        %v4032 = vld [vmem:[%s5 + $0x558] sm:$0xff]
        %v4033 = vld [vmem:[%s5 + $0x560] sm:$0xff]
        %v4034 = vld [vmem:[%s5 + $0x568] sm:$0xff]
        %v4035 = vld [vmem:[%s5 + $0x570] sm:$0xff]
        %v4036 = vld [vmem:[%s5 + $0x578] sm:$0xff]
        %v4037 = vld [vmem:[%s5 + $0x580] sm:$0xff]
        %v4038 = vld [vmem:[%s5 + $0x588] sm:$0xff]
        %v4039 = vld [vmem:[%s5 + $0x590] sm:$0xff]
        %v4040 = vld [vmem:[%s5 + $0x598] sm:$0xff]
        %v4041 = vld [vmem:[%s5 + $0x5a0] sm:$0xff]
        %v4042 = vld [vmem:[%s5 + $0x5a8] sm:$0xff]
        %v4043 = vld [vmem:[%s5 + $0x5b0] sm:$0xff]
        %v4044 = vld [vmem:[%s5 + $0x5b8] sm:$0xff]
        %v4045 = vld [vmem:[%s5 + $0x5c0] sm:$0xff]
        %v4046 = vld [vmem:[%s5 + $0x5c8] sm:$0xff]
        %v4047 = vld [vmem:[%s5 + $0x5d0] sm:$0xff]
        %v4048 = vld [vmem:[%s5 + $0x5d8] sm:$0xff]
        %v4049 = vld [vmem:[%s5 + $0x5e0] sm:$0xff]
        %v4050 = vld [vmem:[%s5 + $0x5e8] sm:$0xff]
        %v4051 = vld [vmem:[%s5 + $0x5f0] sm:$0xff]
        %v4052 = vld [vmem:[%s5 + $0x5f8] sm:$0xff]
        %v4053 = vld [vmem:[%s5 + $0x600] sm:$0xff]
        %v4054 = vld [vmem:[%s5 + $0x608] sm:$0xff]
        %v4055 = vld [vmem:[%s5 + $0x610] sm:$0xff]
        %v4056 = vld [vmem:[%s5 + $0x618] sm:$0xff]
        %v4057 = vld [vmem:[%s6] sm:$0x1]
        %v4059 = vlaneseq
        %v4060 = vshrl.u32 %v4059, 7
        %v4061 = vsub.s32 0, %v4060
        %v4062 = vrot.slane %v4057, %v4061
        %v4065 = vsel %vm3553, %v3860, 0
        %4067 = vmatprep.subr.mxu0 0.0
        %4068 = vmatpush1.msra.mxu0 %v3876
        %4069 = vmatprep.subr.mxu0 0.0
        %4070 = vmatpush1.msra.mxu0 %v3875
        %4071 = vmatprep.subr.mxu0 0.0
        %4072 = vmatpush1.msra.mxu0 %v3874
        %4073 = vmatprep.subr.mxu0 0.0
        %4074 = vmatpush1.msra.mxu0 %v3873
        %4075 = vmatprep.subr.mxu0 0.0
        %4076 = vmatpush1.msra.mxu0 %v3872
        %4077 = vmatprep.subr.mxu0 0.0
        %4078 = vmatpush1.msra.mxu0 %v3871
        %4079 = vmatprep.subr.mxu0 0.0
        %4080 = vmatpush1.msra.mxu0 %v3870
        %4081 = vmatprep.subr.mxu0 0.0
        %4082 = vmatpush1.msra.mxu0 %v3869
        %4083 = vmatprep.subr.mxu0 0.0
        %4084 = vmatpush1.msra.mxu0 %v3868
        %4085 = vmatprep.subr.mxu0 0.0
        %4086 = vmatpush1.msra.mxu0 %v3867
        %4087 = vmatprep.subr.mxu0 0.0
        %4088 = vmatpush1.msra.mxu0 %v3866
        %4089 = vmatprep.subr.mxu0 0.0
        %4090 = vmatpush1.msra.mxu0 %v3865
        %4091 = vmatprep.subr.mxu0 0.0
        %4092 = vmatpush1.msra.mxu0 %v3864
        %4093 = vmatprep.subr.mxu0 0.0
        %4094 = vmatpush1.msra.mxu0 %v3863
        %4095 = vmatprep.subr.mxu0 0.0
        %4096 = vmatpush1.msra.mxu0 %v3862
        %4097 = vmatprep.subr.mxu0 0.0
        %4098 = vmatpush1.msra.mxu0 %v3861
        %4099 = vmatprep.subr.mxu0 0.0
        %4100 = vmatpush2.msra.mxu0 %v3892
        %4101 = vmatprep.subr.mxu0 0.0
        %4102 = vmatpush2.msra.mxu0 %v3891
        %4103 = vmatprep.subr.mxu0 0.0
        %4104 = vmatpush2.msra.mxu0 %v3890
        %4105 = vmatprep.subr.mxu0 0.0
        %4106 = vmatpush2.msra.mxu0 %v3889
        %4107 = vmatprep.subr.mxu0 0.0
        %4108 = vmatpush2.msra.mxu0 %v3888
        %4109 = vmatprep.subr.mxu0 0.0
        %4110 = vmatpush2.msra.mxu0 %v3887
        %4111 = vmatprep.subr.mxu0 0.0
        %4112 = vmatpush2.msra.mxu0 %v3886
        %4113 = vmatprep.subr.mxu0 0.0
        %4114 = vmatpush2.msra.mxu0 %v3885
        %4115 = vmatprep.subr.mxu0 0.0
        %4116 = vmatpush2.msra.mxu0 %v3884
        %4117 = vmatprep.subr.mxu0 0.0
        %4118 = vmatpush2.msra.mxu0 %v3883
        %4119 = vmatprep.subr.mxu0 0.0
        %4120 = vmatpush2.msra.mxu0 %v3882
        %4121 = vmatprep.subr.mxu0 0.0
        %4122 = vmatpush2.msra.mxu0 %v3881
        %4123 = vmatprep.subr.mxu0 0.0
        %4124 = vmatpush2.msra.mxu0 %v3880
        %4125 = vmatprep.subr.mxu0 0.0
        %4126 = vmatpush2.msra.mxu0 %v3879
        %4127 = vmatprep.subr.mxu0 0.0
        %4128 = vmatpush2.msra.mxu0 %v3878
        %4129 = vmatprep.subr.mxu0 0.0
        %4130 = vmatpush2.msra.mxu0 %v3877
        %4131 = vmatprep.mubr.f32.mxu0 %v3849
        %4132 = vmatmul.mubr.f32.gmra.mxu0 %v3848
        %v4133 = vpop.f32.mrf.mxu0
        %v4134 = vadd.f32 %v4062, %v4133
        %v4135 = vpop.f32.mrf.mxu0
        %4136 = vdwg.mxu0
        %4137 = vmatprep.subr.mxu0 0.0
        %4138 = vmatpush1.msra.mxu0 %v3908
        %4139 = vmatprep.subr.mxu0 0.0
        %4140 = vmatpush1.msra.mxu0 %v3907
        %4141 = vmatprep.subr.mxu0 0.0
        %4142 = vmatpush1.msra.mxu0 %v3906
        %4143 = vmatprep.subr.mxu0 0.0
        %4144 = vmatpush1.msra.mxu0 %v3905
        %4145 = vmatprep.subr.mxu0 0.0
        %4146 = vmatpush1.msra.mxu0 %v3904
        %4147 = vmatprep.subr.mxu0 0.0
        %4148 = vmatpush1.msra.mxu0 %v3903
        %4149 = vmatprep.subr.mxu0 0.0
        %4150 = vmatpush1.msra.mxu0 %v3902
        %4151 = vmatprep.subr.mxu0 0.0
        %4152 = vmatpush1.msra.mxu0 %v3901
        %4153 = vmatprep.subr.mxu0 0.0
        %4154 = vmatpush1.msra.mxu0 %v3900
        %4155 = vmatprep.subr.mxu0 0.0
        %4156 = vmatpush1.msra.mxu0 %v3899
        %4157 = vmatprep.subr.mxu0 0.0
        %4158 = vmatpush1.msra.mxu0 %v3898
        %4159 = vmatprep.subr.mxu0 0.0
        %4160 = vmatpush1.msra.mxu0 %v3897
        %4161 = vmatprep.subr.mxu0 0.0
        %4162 = vmatpush1.msra.mxu0 %v3896
        %4163 = vmatprep.subr.mxu0 0.0
        %4164 = vmatpush1.msra.mxu0 %v3895
        %4165 = vmatprep.subr.mxu0 0.0
        %4166 = vmatpush1.msra.mxu0 %v3894
        %4167 = vmatprep.subr.mxu0 0.0
        %4168 = vmatpush1.msra.mxu0 %v3893
        %4169 = vmatprep.subr.mxu0 0.0
        %4170 = vmatpush2.msra.mxu0 %v3924
        %4171 = vmatprep.subr.mxu0 0.0
        %4172 = vmatpush2.msra.mxu0 %v3923
        %4173 = vmatprep.subr.mxu0 0.0
        %4174 = vmatpush2.msra.mxu0 %v3922
        %4175 = vmatprep.subr.mxu0 0.0
        %4176 = vmatpush2.msra.mxu0 %v3921
        %4177 = vmatprep.subr.mxu0 0.0
        %4178 = vmatpush2.msra.mxu0 %v3920
        %4179 = vmatprep.subr.mxu0 0.0
        %4180 = vmatpush2.msra.mxu0 %v3919
        %4181 = vmatprep.subr.mxu0 0.0
        %4182 = vmatpush2.msra.mxu0 %v3918
        %4183 = vmatprep.subr.mxu0 0.0
        %4184 = vmatpush2.msra.mxu0 %v3917
        %4185 = vmatprep.subr.mxu0 0.0
        %4186 = vmatpush2.msra.mxu0 %v3916
        %4187 = vmatprep.subr.mxu0 0.0
        %4188 = vmatpush2.msra.mxu0 %v3915
        %4189 = vmatprep.subr.mxu0 0.0
        %4190 = vmatpush2.msra.mxu0 %v3914
        %4191 = vmatprep.subr.mxu0 0.0
        %4192 = vmatpush2.msra.mxu0 %v3913
        %4193 = vmatprep.subr.mxu0 0.0
        %4194 = vmatpush2.msra.mxu0 %v3912
        %4195 = vmatprep.subr.mxu0 0.0
        %4196 = vmatpush2.msra.mxu0 %v3911
        %4197 = vmatprep.subr.mxu0 0.0
        %4198 = vmatpush2.msra.mxu0 %v3910
        %4199 = vmatprep.subr.mxu0 0.0
        %4200 = vmatpush2.msra.mxu0 %v3909
        %4201 = vmatprep.mubr.f32.mxu0 %v3851
        %4202 = vmatmul.mubr.f32.gmra.mxu0 %v3850
        %v4203 = vpop.f32.mrf.mxu0
        %v4204 = vadd.f32 %v4134, %v4203
        %v4205 = vpop.f32.mrf.mxu0
        %4206 = vdwg.mxu0
        %4207 = vmatprep.subr.mxu0 0.0
        %4208 = vmatpush1.msra.mxu0 %v3940
        %4209 = vmatprep.subr.mxu0 0.0
        %4210 = vmatpush1.msra.mxu0 %v3939
        %4211 = vmatprep.subr.mxu0 0.0
        %4212 = vmatpush1.msra.mxu0 %v3938
        %4213 = vmatprep.subr.mxu0 0.0
        %4214 = vmatpush1.msra.mxu0 %v3937
        %4215 = vmatprep.subr.mxu0 0.0
        %4216 = vmatpush1.msra.mxu0 %v3936
        %4217 = vmatprep.subr.mxu0 0.0
        %4218 = vmatpush1.msra.mxu0 %v3935
        %4219 = vmatprep.subr.mxu0 0.0
        %4220 = vmatpush1.msra.mxu0 %v3934
        %4221 = vmatprep.subr.mxu0 0.0
        %4222 = vmatpush1.msra.mxu0 %v3933
        %4223 = vmatprep.subr.mxu0 0.0
        %4224 = vmatpush1.msra.mxu0 %v3932
        %4225 = vmatprep.subr.mxu0 0.0
        %4226 = vmatpush1.msra.mxu0 %v3931
        %4227 = vmatprep.subr.mxu0 0.0
        %4228 = vmatpush1.msra.mxu0 %v3930
        %4229 = vmatprep.subr.mxu0 0.0
        %4230 = vmatpush1.msra.mxu0 %v3929
        %4231 = vmatprep.subr.mxu0 0.0
        %4232 = vmatpush1.msra.mxu0 %v3928
        %4233 = vmatprep.subr.mxu0 0.0
        %4234 = vmatpush1.msra.mxu0 %v3927
        %4235 = vmatprep.subr.mxu0 0.0
        %4236 = vmatpush1.msra.mxu0 %v3926
        %4237 = vmatprep.subr.mxu0 0.0
        %4238 = vmatpush1.msra.mxu0 %v3925
        %4239 = vmatprep.subr.mxu0 0.0
        %4240 = vmatpush2.msra.mxu0 %v3956
        %4241 = vmatprep.subr.mxu0 0.0
        %4242 = vmatpush2.msra.mxu0 %v3955
        %4243 = vmatprep.subr.mxu0 0.0
        %4244 = vmatpush2.msra.mxu0 %v3954
        %4245 = vmatprep.subr.mxu0 0.0
        %4246 = vmatpush2.msra.mxu0 %v3953
        %4247 = vmatprep.subr.mxu0 0.0
        %4248 = vmatpush2.msra.mxu0 %v3952
        %4249 = vmatprep.subr.mxu0 0.0
        %4250 = vmatpush2.msra.mxu0 %v3951
        %4251 = vmatprep.subr.mxu0 0.0
        %4252 = vmatpush2.msra.mxu0 %v3950
        %4253 = vmatprep.subr.mxu0 0.0
        %4254 = vmatpush2.msra.mxu0 %v3949
        %4255 = vmatprep.subr.mxu0 0.0
        %4256 = vmatpush2.msra.mxu0 %v3948
        %4257 = vmatprep.subr.mxu0 0.0
        %4258 = vmatpush2.msra.mxu0 %v3947
        %4259 = vmatprep.subr.mxu0 0.0
        %4260 = vmatpush2.msra.mxu0 %v3946
        %4261 = vmatprep.subr.mxu0 0.0
        %4262 = vmatpush2.msra.mxu0 %v3945
        %4263 = vmatprep.subr.mxu0 0.0
        %4264 = vmatpush2.msra.mxu0 %v3944
        %4265 = vmatprep.subr.mxu0 0.0
        %4266 = vmatpush2.msra.mxu0 %v3943
        %4267 = vmatprep.subr.mxu0 0.0
        %4268 = vmatpush2.msra.mxu0 %v3942
        %4269 = vmatprep.subr.mxu0 0.0
        %4270 = vmatpush2.msra.mxu0 %v3941
        %4271 = vmatprep.mubr.f32.mxu0 %v3853
        %4272 = vmatmul.mubr.f32.gmra.mxu0 %v3852
        %v4273 = vpop.f32.mrf.mxu0
        %v4274 = vadd.f32 %v4204, %v4273
        %v4275 = vpop.f32.mrf.mxu0
        %4276 = vdwg.mxu0
        %4277 = vmatprep.subr.mxu0 0.0
        %4278 = vmatpush1.msra.mxu0 %v3972
        %4279 = vmatprep.subr.mxu0 0.0
        %4280 = vmatpush1.msra.mxu0 %v3971
        %4281 = vmatprep.subr.mxu0 0.0
        %4282 = vmatpush1.msra.mxu0 %v3970
        %4283 = vmatprep.subr.mxu0 0.0
        %4284 = vmatpush1.msra.mxu0 %v3969
        %4285 = vmatprep.subr.mxu0 0.0
        %4286 = vmatpush1.msra.mxu0 %v3968
        %4287 = vmatprep.subr.mxu0 0.0
        %4288 = vmatpush1.msra.mxu0 %v3967
        %4289 = vmatprep.subr.mxu0 0.0
        %4290 = vmatpush1.msra.mxu0 %v3966
        %4291 = vmatprep.subr.mxu0 0.0
        %4292 = vmatpush1.msra.mxu0 %v3965
        %4293 = vmatprep.subr.mxu0 0.0
        %4294 = vmatpush1.msra.mxu0 %v3964
        %4295 = vmatprep.subr.mxu0 0.0
        %4296 = vmatpush1.msra.mxu0 %v3963
        %4297 = vmatprep.subr.mxu0 0.0
        %4298 = vmatpush1.msra.mxu0 %v3962
        %4299 = vmatprep.subr.mxu0 0.0
        %4300 = vmatpush1.msra.mxu0 %v3961
        %4301 = vmatprep.subr.mxu0 0.0
        %4302 = vmatpush1.msra.mxu0 %v3960
        %4303 = vmatprep.subr.mxu0 0.0
        %4304 = vmatpush1.msra.mxu0 %v3959
        %4305 = vmatprep.subr.mxu0 0.0
        %4306 = vmatpush1.msra.mxu0 %v3958
        %4307 = vmatprep.subr.mxu0 0.0
        %4308 = vmatpush1.msra.mxu0 %v3957
        %4309 = vmatprep.subr.mxu0 0.0
        %4310 = vmatpush2.msra.mxu0 %v3988
        %4311 = vmatprep.subr.mxu0 0.0
        %4312 = vmatpush2.msra.mxu0 %v3987
        %4313 = vmatprep.subr.mxu0 0.0
        %4314 = vmatpush2.msra.mxu0 %v3986
        %4315 = vmatprep.subr.mxu0 0.0
        %4316 = vmatpush2.msra.mxu0 %v3985
        %4317 = vmatprep.subr.mxu0 0.0
        %4318 = vmatpush2.msra.mxu0 %v3984
        %4319 = vmatprep.subr.mxu0 0.0
        %4320 = vmatpush2.msra.mxu0 %v3983
        %4321 = vmatprep.subr.mxu0 0.0
        %4322 = vmatpush2.msra.mxu0 %v3982
        %4323 = vmatprep.subr.mxu0 0.0
        %4324 = vmatpush2.msra.mxu0 %v3981
        %4325 = vmatprep.subr.mxu0 0.0
        %4326 = vmatpush2.msra.mxu0 %v3980
        %4327 = vmatprep.subr.mxu0 0.0
        %4328 = vmatpush2.msra.mxu0 %v3979
        %4329 = vmatprep.subr.mxu0 0.0
        %4330 = vmatpush2.msra.mxu0 %v3978
        %4331 = vmatprep.subr.mxu0 0.0
        %4332 = vmatpush2.msra.mxu0 %v3977
        %4333 = vmatprep.subr.mxu0 0.0
        %4334 = vmatpush2.msra.mxu0 %v3976
        %4335 = vmatprep.subr.mxu0 0.0
        %4336 = vmatpush2.msra.mxu0 %v3975
        %4337 = vmatprep.subr.mxu0 0.0
        %4338 = vmatpush2.msra.mxu0 %v3974
        %4339 = vmatprep.subr.mxu0 0.0
        %4340 = vmatpush2.msra.mxu0 %v3973
        %4341 = vmatprep.mubr.f32.mxu0 %v3855
        %4342 = vmatmul.mubr.f32.gmra.mxu0 %v3854
        %v4343 = vpop.f32.mrf.mxu0
        %v4344 = vadd.f32 %v4274, %v4343
        %v4345 = vpop.f32.mrf.mxu0
        %4346 = vdwg.mxu0
        %4347 = vmatprep.subr.mxu0 0.0
        %4348 = vmatpush1.msra.mxu0 %v4004
        %4349 = vmatprep.subr.mxu0 0.0
        %4350 = vmatpush1.msra.mxu0 %v4003
        %4351 = vmatprep.subr.mxu0 0.0
        %4352 = vmatpush1.msra.mxu0 %v4002
        %4353 = vmatprep.subr.mxu0 0.0
        %4354 = vmatpush1.msra.mxu0 %v4001
        %4355 = vmatprep.subr.mxu0 0.0
        %4356 = vmatpush1.msra.mxu0 %v4000
        %4357 = vmatprep.subr.mxu0 0.0
        %4358 = vmatpush1.msra.mxu0 %v3999
        %4359 = vmatprep.subr.mxu0 0.0
        %4360 = vmatpush1.msra.mxu0 %v3998
        %4361 = vmatprep.subr.mxu0 0.0
        %4362 = vmatpush1.msra.mxu0 %v3997
        %4363 = vmatprep.subr.mxu0 0.0
        %4364 = vmatpush1.msra.mxu0 %v3996
        %4365 = vmatprep.subr.mxu0 0.0
        %4366 = vmatpush1.msra.mxu0 %v3995
        %4367 = vmatprep.subr.mxu0 0.0
        %4368 = vmatpush1.msra.mxu0 %v3994
        %4369 = vmatprep.subr.mxu0 0.0
        %4370 = vmatpush1.msra.mxu0 %v3993
        %4371 = vmatprep.subr.mxu0 0.0
        %4372 = vmatpush1.msra.mxu0 %v3992
        %4373 = vmatprep.subr.mxu0 0.0
        %4374 = vmatpush1.msra.mxu0 %v3991
        %4375 = vmatprep.subr.mxu0 0.0
        %4376 = vmatpush1.msra.mxu0 %v3990
        %4377 = vmatprep.subr.mxu0 0.0
        %4378 = vmatpush1.msra.mxu0 %v3989
        %4379 = vmatprep.subr.mxu0 0.0
        %4380 = vmatpush2.msra.mxu0 %v4020
        %4381 = vmatprep.subr.mxu0 0.0
        %4382 = vmatpush2.msra.mxu0 %v4019
        %4383 = vmatprep.subr.mxu0 0.0
        %4384 = vmatpush2.msra.mxu0 %v4018
        %4385 = vmatprep.subr.mxu0 0.0
        %4386 = vmatpush2.msra.mxu0 %v4017
        %4387 = vmatprep.subr.mxu0 0.0
        %4388 = vmatpush2.msra.mxu0 %v4016
        %4389 = vmatprep.subr.mxu0 0.0
        %4390 = vmatpush2.msra.mxu0 %v4015
        %4391 = vmatprep.subr.mxu0 0.0
        %4392 = vmatpush2.msra.mxu0 %v4014
        %4393 = vmatprep.subr.mxu0 0.0
        %4394 = vmatpush2.msra.mxu0 %v4013
        %4395 = vmatprep.subr.mxu0 0.0
        %4396 = vmatpush2.msra.mxu0 %v4012
        %4397 = vmatprep.subr.mxu0 0.0
        %4398 = vmatpush2.msra.mxu0 %v4011
        %4399 = vmatprep.subr.mxu0 0.0
        %4400 = vmatpush2.msra.mxu0 %v4010
        %4401 = vmatprep.subr.mxu0 0.0
        %4402 = vmatpush2.msra.mxu0 %v4009
        %4403 = vmatprep.subr.mxu0 0.0
        %4404 = vmatpush2.msra.mxu0 %v4008
        %4405 = vmatprep.subr.mxu0 0.0
        %4406 = vmatpush2.msra.mxu0 %v4007
        %4407 = vmatprep.subr.mxu0 0.0
        %4408 = vmatpush2.msra.mxu0 %v4006
        %4409 = vmatprep.subr.mxu0 0.0
        %4410 = vmatpush2.msra.mxu0 %v4005
        %4411 = vmatprep.mubr.f32.mxu0 %v3857
        %4412 = vmatmul.mubr.f32.gmra.mxu0 %v3856
        %v4413 = vpop.f32.mrf.mxu0
        %v4414 = vadd.f32 %v4344, %v4413
        %v4415 = vpop.f32.mrf.mxu0
        %4416 = vdwg.mxu0
        %4417 = vmatprep.subr.mxu0 0.0
        %4418 = vmatpush1.msra.mxu0 %v4036
        %4419 = vmatprep.subr.mxu0 0.0
        %4420 = vmatpush1.msra.mxu0 %v4035
        %4421 = vmatprep.subr.mxu0 0.0
        %4422 = vmatpush1.msra.mxu0 %v4034
        %4423 = vmatprep.subr.mxu0 0.0
        %4424 = vmatpush1.msra.mxu0 %v4033
        %4425 = vmatprep.subr.mxu0 0.0
        %4426 = vmatpush1.msra.mxu0 %v4032
        %4427 = vmatprep.subr.mxu0 0.0
        %4428 = vmatpush1.msra.mxu0 %v4031
        %4429 = vmatprep.subr.mxu0 0.0
        %4430 = vmatpush1.msra.mxu0 %v4030
        %4431 = vmatprep.subr.mxu0 0.0
        %4432 = vmatpush1.msra.mxu0 %v4029
        %4433 = vmatprep.subr.mxu0 0.0
        %4434 = vmatpush1.msra.mxu0 %v4028
        %4435 = vmatprep.subr.mxu0 0.0
        %4436 = vmatpush1.msra.mxu0 %v4027
        %4437 = vmatprep.subr.mxu0 0.0
        %4438 = vmatpush1.msra.mxu0 %v4026
        %4439 = vmatprep.subr.mxu0 0.0
        %4440 = vmatpush1.msra.mxu0 %v4025
        %4441 = vmatprep.subr.mxu0 0.0
        %4442 = vmatpush1.msra.mxu0 %v4024
        %4443 = vmatprep.subr.mxu0 0.0
        %4444 = vmatpush1.msra.mxu0 %v4023
        %4445 = vmatprep.subr.mxu0 0.0
        %4446 = vmatpush1.msra.mxu0 %v4022
        %4447 = vmatprep.subr.mxu0 0.0
        %4448 = vmatpush1.msra.mxu0 %v4021
        %4449 = vmatprep.subr.mxu0 0.0
        %4450 = vmatpush2.msra.mxu0 %v4052
        %4451 = vmatprep.subr.mxu0 0.0
        %4452 = vmatpush2.msra.mxu0 %v4051
        %4453 = vmatprep.subr.mxu0 0.0
        %4454 = vmatpush2.msra.mxu0 %v4050
        %4455 = vmatprep.subr.mxu0 0.0
        %4456 = vmatpush2.msra.mxu0 %v4049
        %4457 = vmatprep.subr.mxu0 0.0
        %4458 = vmatpush2.msra.mxu0 %v4048
        %4459 = vmatprep.subr.mxu0 0.0
        %4460 = vmatpush2.msra.mxu0 %v4047
        %4461 = vmatprep.subr.mxu0 0.0
        %4462 = vmatpush2.msra.mxu0 %v4046
        %4463 = vmatprep.subr.mxu0 0.0
        %4464 = vmatpush2.msra.mxu0 %v4045
        %4465 = vmatprep.subr.mxu0 0.0
        %4466 = vmatpush2.msra.mxu0 %v4044
        %4467 = vmatprep.subr.mxu0 0.0
        %4468 = vmatpush2.msra.mxu0 %v4043
        %4469 = vmatprep.subr.mxu0 0.0
        %4470 = vmatpush2.msra.mxu0 %v4042
        %4471 = vmatprep.subr.mxu0 0.0
        %4472 = vmatpush2.msra.mxu0 %v4041
        %4473 = vmatprep.subr.mxu0 0.0
        %4474 = vmatpush2.msra.mxu0 %v4040
        %4475 = vmatprep.subr.mxu0 0.0
        %4476 = vmatpush2.msra.mxu0 %v4039
        %4477 = vmatprep.subr.mxu0 0.0
        %4478 = vmatpush2.msra.mxu0 %v4038
        %4479 = vmatprep.subr.mxu0 0.0
        %4480 = vmatpush2.msra.mxu0 %v4037
        %4481 = vmatprep.mubr.f32.mxu0 %v3859
        %4482 = vmatmul.mubr.f32.gmra.mxu0 %v3858
        %v4483 = vpop.f32.mrf.mxu0
        %v4484 = vadd.f32 %v4414, %v4483
        %v4485 = vpop.f32.mrf.mxu0
        %4486 = vdwg.mxu0
        %4487 = vmatprep.subr.mxu0 0.0
        %4488 = vmatpush1.msra.mxu0 0.0
        %4489 = vmatprep.subr.mxu0 0.0
        %4490 = vmatpush1.msra.mxu0 0.0
        %4491 = vmatprep.subr.mxu0 0.0
        %4492 = vmatpush1.msra.mxu0 0.0
        %4493 = vmatprep.subr.mxu0 0.0
        %4494 = vmatpush1.msra.mxu0 0.0
        %4495 = vmatprep.subr.mxu0 0.0
        %4496 = vmatpush1.msra.mxu0 0.0
        %4497 = vmatprep.subr.mxu0 0.0
        %4498 = vmatpush1.msra.mxu0 0.0
        %4499 = vmatprep.subr.mxu0 0.0
        %4500 = vmatpush1.msra.mxu0 0.0
        %4501 = vmatprep.subr.mxu0 0.0
        %4502 = vmatpush1.msra.mxu0 0.0
        %4503 = vmatprep.subr.mxu0 0.0
        %4504 = vmatpush1.msra.mxu0 0.0
        %4505 = vmatprep.subr.mxu0 0.0
        %4506 = vmatpush1.msra.mxu0 0.0
        %4507 = vmatprep.subr.mxu0 0.0
        %4508 = vmatpush1.msra.mxu0 0.0
        %4509 = vmatprep.subr.mxu0 0.0
        %4510 = vmatpush1.msra.mxu0 0.0
        %4511 = vmatprep.subr.mxu0 0.0
        %4512 = vmatpush1.msra.mxu0 %v4056
        %4513 = vmatprep.subr.mxu0 0.0
        %4514 = vmatpush1.msra.mxu0 %v4055
        %4515 = vmatprep.subr.mxu0 0.0
        %4516 = vmatpush1.msra.mxu0 %v4054
        %4517 = vmatprep.subr.mxu0 0.0
        %4518 = vmatpush1.msra.mxu0 %v4053
        %4519 = vmatprep.subr.mxu0 0.0
        %4520 = vmatpush2.msra.mxu0 0.0
        %4521 = vmatprep.subr.mxu0 0.0
        %4522 = vmatpush2.msra.mxu0 0.0
        %4523 = vmatprep.subr.mxu0 0.0
        %4524 = vmatpush2.msra.mxu0 0.0
        %4525 = vmatprep.subr.mxu0 0.0
        %4526 = vmatpush2.msra.mxu0 0.0
        %4527 = vmatprep.subr.mxu0 0.0
        %4528 = vmatpush2.msra.mxu0 0.0
        %4529 = vmatprep.subr.mxu0 0.0
        %4530 = vmatpush2.msra.mxu0 0.0
        %4531 = vmatprep.subr.mxu0 0.0
        %4532 = vmatpush2.msra.mxu0 0.0
        %4533 = vmatprep.subr.mxu0 0.0
        %4534 = vmatpush2.msra.mxu0 0.0
        %4535 = vmatprep.subr.mxu0 0.0
        %4536 = vmatpush2.msra.mxu0 0.0
        %4537 = vmatprep.subr.mxu0 0.0
        %4538 = vmatpush2.msra.mxu0 0.0
        %4539 = vmatprep.subr.mxu0 0.0
        %4540 = vmatpush2.msra.mxu0 0.0
        %4541 = vmatprep.subr.mxu0 0.0
        %4542 = vmatpush2.msra.mxu0 0.0
        %4543 = vmatprep.subr.mxu0 0.0
        %4544 = vmatpush2.msra.mxu0 0.0
        %4545 = vmatprep.subr.mxu0 0.0
        %4546 = vmatpush2.msra.mxu0 0.0
        %4547 = vmatprep.subr.mxu0 0.0
        %4548 = vmatpush2.msra.mxu0 0.0
        %4549 = vmatprep.subr.mxu0 0.0
        %4550 = vmatpush2.msra.mxu0 0.0
        %4551 = vmatprep.mubr.f32.mxu0 0.0
        %4552 = vmatmul.mubr.f32.gmra.mxu0 %v4065
        %v4553 = vpop.f32.mrf.mxu0
        %v4554 = vadd.f32 %v4484, %v4553
        %v4555 = vpop.f32.mrf.mxu0
        %4556 = vdwg.mxu0
        %4557 = vst.msk [vmem:[%s272] sm:$0xff] %vm851, %v4554
        %s4558 = sand.u32 %s181, 1
        %s4559 = scalar_lea.sflag [#allocation7], %s4558
        %s4560 = sand.u32 %s181, 1
        %s4561 = smul.addr %s4560, 8
        %s4562 = scalar_lea.vmem [#allocation6], %s4561
        // Predicated region
        $region49: #{encoder_forward.1} parent=47 // pred_check
          %p4563 = pneg %p191
        $region50: #{encoder_forward.1} parent=47 // pred_check_branch
          %4565 = sbr.rel (%p4563) target = $region52
        $region51: #{encoder_forward.1} parent=47 // pred_region
          %s4567 = ssub.s32 128, 128
          %4568 = vsyncadd %s4559, %s4567
          %s4569 = smul.addr %s21, 128
          %s4570 = scalar_lea.hbm %s7, %s4569
          %s4572 = sshll.u32 %s4562, 4
          %s4573 = int_to_ptr.vmem [resolvable:$true] %s4572
          %4575 = dma.vmem_to_hbm [thread:$0]  %s4573, 128, %s4570, %s4559
        $region52: #{encoder_forward.1} parent=47 // pred_fallthru
          _
      $region48: #{encoder_forward.1} parent=5 // pred_fallthru
        _
      %p4576 = scmp.le.s32.totalorder 2, %s16
      // Predicated region
      $region53: #{encoder_forward.1} parent=5 // pred_check
        %p4577 = pneg %p4576
      $region54: #{encoder_forward.1} parent=5 // pred_check_branch
        %4579 = sbr.rel (%p4577) target = $region56
      $region55: #{encoder_forward.1} parent=5 // pred_region
        %s4580 = ssub.s32 %s16, 2
        // Predicated region
        $region57: #{encoder_forward.1} parent=55 // pred_check
          %p4581 = pneg %p197
        $region58: #{encoder_forward.1} parent=55 // pred_check_branch
          %4583 = sbr.rel (%p4581) target = $region60
        $region59: #{encoder_forward.1} parent=55 // pred_region
          %s4584 = sand.u32 %s182, 1
          %s4585 = scalar_lea.sflag [#allocation7], %s4584
          %s4586 = sand.u32 %s182, 1
          %s4587 = smul.addr %s4586, 8
          %s4588 = scalar_lea.vmem [#allocation6], %s4587
          %4589 = dma.done %s4585, 128
        $region60: #{encoder_forward.1} parent=55 // pred_fallthru
          _
      $region56: #{encoder_forward.1} parent=5 // pred_fallthru
        _
    $region6: #{encoder_forward.1} parent=1 // loop_footer
      %s20 = sadd.s32 1, %s16
    $region7: #{encoder_forward.1} parent=1 // loop_footer_branch
      %15 = sbr.rel target = $region3
    $region8: #{encoder_forward.1} parent=1 // loop_exit
      _
    %4590 = vsyncpa [#allocation7], 1
    %s4591 = scalar_lea.sflag [#allocation7], 1
    %4592 = vsyncpa %s4591, 1

</llo_original>
